<compile_context>
chip_gen: v7x
topology: tpu7x:2x2x1
jax: 0.10.0
libtpu: 0.0.40
codegen_flags: <defaults>
</compile_context>

<pallas_src>
import functools

import jax
import jax.numpy as jnp
import numpy as np
from jax.experimental import pallas as pl
from jax.experimental.pallas import tpu as pltpu

_LANE = 128     # minor-most (lane) tile width
_W_ALIGN = 16   # output-width alignment -> sublane-trivial reshapes for bf16/f32


def _round_up(x, m):
    return ((x + m - 1) // m) * m


def _default_vmem_limit_bytes():
    """Generation-aware VMEM cap: ~100 MiB on v5e/v6e (128 MiB), ~48 MiB on v7x."""
    cap = 64 * 1024 * 1024
    try:
        cap = int(pltpu.get_tpu_info().vmem_capacity_bytes)
    except Exception:
        pass
    return max(32 * 1024 * 1024, min(cap - 16 * 1024 * 1024, 100 * 1024 * 1024))


# ----------------------------------- kernel -----------------------------------
def _conv_bn_relu_kernel(x_ref, w_ref, scale_ref, shift_ref, o_ref, *,
                         kh_sz, kw_sz, stride, tile_ho, wo_pad):
    """One (batch image, ho-tile) grid step.

    x_ref:     (Hp, Wp, Cin)               bf16  full padded image (VMEM resident)
    w_ref:     (KH*KW, Cin, Cout_pad)      bf16
    scale_ref: (1, Cout_pad)               f32   folded BN scale
    shift_ref: (1, Cout_pad)               f32   folded BN shift
    o_ref:     (tile_ho, Wo_pad, Cout_pad) f32
    """
    t = pl.program_id(1)
    h0 = t * (tile_ho * stride)
    cin = x_ref.shape[-1]
    cout_pad = o_ref.shape[-1]
    m = tile_ho * wo_pad

    acc = jnp.zeros((m, cout_pad), jnp.float32)
    for kh in range(kh_sz):
        for kw in range(kw_sz):
            if stride == 1:
                a = x_ref[pl.ds(h0 + kh, tile_ho), pl.ds(kw, wo_pad), :]
            else:
                a = x_ref[pl.ds(h0 + kh, tile_ho, stride),
                          pl.ds(kw, wo_pad, stride), :]
            acc = acc + jnp.dot(a.reshape(m, cin), w_ref[kh * kw_sz + kw],
                                preferred_element_type=jnp.float32)

    y = jnp.maximum(acc * scale_ref[...] + shift_ref[...], 0.0)   # f32 epilogue
    o_ref[...] = y.reshape(tile_ho, wo_pad, cout_pad).astype(o_ref.dtype)


# ------------------------------- tiling heuristic ------------------------------
def _choose_tile_ho(n, ho, wo_pad, cin, cout_pad, kh, kw, hp_ub, wp, budget,
                    m_target):
    # Per-step VMEM (bytes): double-buffered output block + acc/dot temporaries
    # + the bf16 window slices.
    per_row = wo_pad * (4 * cout_pad * 4 + 2 * cin * 2)
    fixed = (2 * hp_ub * wp * cin * 2            # input image block (dbl-buffered)
             + 2 * kh * kw * cin * cout_pad * 2  # weights (resident)
             + 4 * 2 * cout_pad * 4)             # scale / shift

    tile = max(1, min(ho, pl.cdiv(m_target, wo_pad)))
    # Prefer a divisor of Ho (no padded output rows), but never let the divisor
    # search shrink the tile by more than 2x (review: tile-size floor).
    div = 1
    for cand in range(tile, 0, -1):
        if ho % cand == 0:
            div = cand
            break
    if 2 * div >= tile:
        tile = div
    # Shrink only if the VMEM budget demands it.
    while tile > 1 and fixed + tile * per_row > budget:
        tile = (tile + 1) // 2
    # v7x has 2 TensorCores: with a single-image batch make sure the "parallel"
    # grid has >= 2 steps, as long as the tile stays MXU-friendly.
    if n == 1 and tile >= ho and ho > 1 and ((ho + 1) // 2) * wo_pad >= 256:
        tile = (ho + 1) // 2
    return tile


# --------------------------------- module wrapper ------------------------------
def basic_conv2d(x, weight, gamma, beta, running_mean, running_var, *,
                 stride=1, padding=0, eps=1e-3, compute_dtype=jnp.bfloat16,
                 m_target=512, out_dtype=jnp.float32):
    """x: (N, Cin, H, W) NCHW.  weight: (Cout, Cin, KH, KW).  Returns NCHW."""
    N, Cin, H, W = x.shape
    Cout, _, KH, KW = weight.shape
    s = int(stride)
    p = int(padding)
    Ho = (H + 2 * p - KH) // s + 1
    Wo = (W + 2 * p - KW) // s + 1

    # Single NCHW -> NHWC layout pass; bf16 operands (f32 accumulation in-kernel).
    x_nhwc = jnp.transpose(x, (0, 2, 3, 1)).astype(compute_dtype)

    # 1x1 stride-1 convs: flatten H*W into the row axis -> one big matmul tile
    # per image and (near) zero alignment padding.
    if KH == 1 and KW == 1 and s == 1 and p == 0 and H * W <= 2048:
        x_nhwc = x_nhwc.reshape(N, 1, H * W, Cin)
        h_u, w_u, ho_u, wo_u = 1, H * W, 1, H * W
    else:
        h_u, w_u, ho_u, wo_u = H, W, Ho, Wo

    Cout_pad = _round_up(Cout, _LANE)
    wo_pad = _round_up(wo_u, _W_ALIGN)

    wp_need = (wo_pad - 1) * s + KW
    Wp = max(p + w_u, wp_need)
    hp_ub = max(p + h_u, ho_u * s + KH)              # bound for tile selection

    vmem_limit = _default_vmem_limit_bytes()
    tile_ho = _choose_tile_ho(N, ho_u, wo_pad, Cin, Cout_pad, KH, KW,
                              hp_ub, Wp, int(vmem_limit * 0.8), m_target)
    n_t = pl.cdiv(ho_u, tile_ho)
    ho_alloc = n_t * tile_ho
    hp_need = (ho_alloc - 1) * s + KH
    Hp = max(p + h_u, hp_need)

    pad_h_hi = Hp - (p + h_u)
    pad_w_hi = Wp - (p + w_u)
    if p or pad_h_hi or pad_w_hi:
        # One pad pass over the *un-expanded* input: conv padding + alignment.
        x_nhwc = jnp.pad(x_nhwc, ((0, 0), (p, pad_h_hi), (p, pad_w_hi), (0, 0)))

    # Weights -> (KH*KW, Cin, Cout_pad) in the kernel's (kh,kw)-major ordering;
    # BatchNorm (eval / running stats) folded into per-channel scale/shift (f32).
    w_r = jnp.transpose(weight, (2, 3, 1, 0)).reshape(KH * KW, Cin, Cout)
    inv_std = jax.lax.rsqrt(running_var.astype(jnp.float32) + eps)
    scale = (gamma.astype(jnp.float32) * inv_std).reshape(1, Cout)
    shift = (beta.astype(jnp.float32)
             - running_mean.astype(jnp.float32) * gamma.astype(jnp.float32)
             * inv_std).reshape(1, Cout)
    if Cout_pad != Cout:
        w_r = jnp.pad(w_r, ((0, 0), (0, 0), (0, Cout_pad - Cout)))
        scale = jnp.pad(scale, ((0, 0), (0, Cout_pad - Cout)))
        shift = jnp.pad(shift, ((0, 0), (0, Cout_pad - Cout)))
    w_r = w_r.astype(compute_dtype)

    kernel = functools.partial(_conv_bn_relu_kernel, kh_sz=KH, kw_sz=KW,
                               stride=s, tile_ho=tile_ho, wo_pad=wo_pad)

    cost = pl.CostEstimate(
        flops=2 * N * ho_alloc * wo_pad * KH * KW * Cin * Cout_pad,
        bytes_accessed=(N * Hp * Wp * Cin * 2
                        + KH * KW * Cin * Cout_pad * 2
                        + N * ho_alloc * wo_pad * Cout_pad * 4),
        transcendentals=0)

    out = pl.pallas_call(
        kernel,
        out_shape=jax.ShapeDtypeStruct((N, ho_alloc, wo_pad, Cout_pad),
                                       jnp.float32),
        grid_spec=pltpu.PrefetchScalarGridSpec(
            num_scalar_prefetch=0,
            grid=(N, n_t),
            in_specs=[
                # Full padded image per n; constant across the ho-tile axis, so
                # it is DMA'd once per image and re-used by every tile.
                pl.BlockSpec((None, Hp, Wp, Cin), lambda n, t: (n, 0, 0, 0)),
                pl.BlockSpec((KH * KW, Cin, Cout_pad), lambda n, t: (0, 0, 0)),
                pl.BlockSpec((1, Cout_pad), lambda n, t: (0, 0)),
                pl.BlockSpec((1, Cout_pad), lambda n, t: (0, 0)),
            ],
            out_specs=pl.BlockSpec((None, tile_ho, wo_pad, Cout_pad),
                                   lambda n, t: (n, t, 0, 0)),
        ),
        compiler_params=pltpu.CompilerParams(
            dimension_semantics=("parallel", "parallel"),
            vmem_limit_bytes=vmem_limit),
        cost_estimate=cost,
    )(x_nhwc, w_r, scale, shift)

    # TODO(synk): add a Cout/Cin-tiling (and ho-blocked input DMA) fallback for
    # layers whose weights or full image block exceed the VMEM budget; not hit
    # by GoogLeNet/Inception BasicConv2d shapes.
    out = out[:, :ho_u, :wo_u, :Cout].reshape(N, Ho, Wo, Cout)
    return jnp.transpose(out, (0, 3, 1, 2)).astype(out_dtype)


# ----------------------------------- reference ---------------------------------
def _reference(x, weight, gamma, beta, mean, var, *, stride=1, padding=0, eps=1e-3):
    conv = jax.lax.conv_general_dilated(
        x, weight, window_strides=(stride, stride),
        padding=[(padding, padding), (padding, padding)],
        dimension_numbers=("NCHW", "OIHW", "NCHW"),
        precision=jax.lax.Precision.HIGHEST)
    g = gamma.reshape(1, -1, 1, 1)
    b = beta.reshape(1, -1, 1, 1)
    m = mean.reshape(1, -1, 1, 1)
    v = var.reshape(1, -1, 1, 1)
    return jnp.maximum((conv - m) / jnp.sqrt(v + eps) * g + b, 0.0)


if __name__ == "__main__":
    key = jax.random.PRNGKey(0)
    keys = jax.random.split(key, 12)

    # --- case 1: 3x3, stride 1, pad 1 ------------------------------------------
    N, Cin, H, W, Cout = 2, 4, 16, 16, 8
    x = jax.random.normal(keys[0], (N, Cin, H, W), dtype=jnp.float32)
    w = jax.random.normal(keys[1], (Cout, Cin, 3, 3), dtype=jnp.float32) * 0.1
    gamma = jax.random.uniform(keys[2], (Cout,), minval=0.5, maxval=1.5)
    beta = jax.random.normal(keys[3], (Cout,)) * 0.1
    mean = jax.random.normal(keys[4], (Cout,)) * 0.1
    var = jax.random.uniform(keys[5], (Cout,), minval=0.5, maxval=1.5)

    fn = jax.jit(functools.partial(basic_conv2d, stride=1, padding=1, eps=1e-3))
    out = jax.block_until_ready(fn(x, w, gamma, beta, mean, var))
    ref = _reference(x, w, gamma, beta, mean, var, stride=1, padding=1, eps=1e-3)
    np.testing.assert_allclose(np.asarray(out), np.asarray(ref),
                               rtol=3e-2, atol=3e-2)

    # --- case 2: 1x1, stride 1 (flattened fast path) -----------------------------
    w1 = jax.random.normal(keys[6], (Cout, Cin, 1, 1), dtype=jnp.float32) * 0.1
    fn1 = jax.jit(functools.partial(basic_conv2d, stride=1, padding=0, eps=1e-3))
    out1 = jax.block_until_ready(fn1(x, w1, gamma, beta, mean, var))
    ref1 = _reference(x, w1, gamma, beta, mean, var, stride=1, padding=0, eps=1e-3)
    np.testing.assert_allclose(np.asarray(out1), np.asarray(ref1),
                               rtol=3e-2, atol=3e-2)

    # --- case 3: odd spatial size, multiple ho tiles, alignment padding ----------
    N3, Cin3, H3, W3, Cout3 = 2, 5, 15, 15, 10
    x3 = jax.random.normal(keys[7], (N3, Cin3, H3, W3), dtype=jnp.float32)
    w3 = jax.random.normal(keys[8], (Cout3, Cin3, 3, 3), dtype=jnp.float32) * 0.1
    gamma3 = jax.random.uniform(keys[9], (Cout3,), minval=0.5, maxval=1.5)
    beta3 = jax.random.normal(keys[10], (Cout3,)) * 0.1
    mean3 = jax.random.normal(keys[11], (Cout3,)) * 0.1
    var3 = jnp.abs(mean3) + 0.7
    fn3 = jax.jit(functools.partial(basic_conv2d, stride=1, padding=1, eps=1e-3,
                                    m_target=64))
    out3 = jax.block_until_ready(fn3(x3, w3, gamma3, beta3, mean3, var3))
    ref3 = _reference(x3, w3, gamma3, beta3, mean3, var3,
                      stride=1, padding=1, eps=1e-3)
    np.testing.assert_allclose(np.asarray(out3), np.asarray(ref3),
                               rtol=3e-2, atol=3e-2)

    print("KERNEL_OK")
</pallas_src>

<mosaic_0001>
module attributes {stable_mosaic.version = 11 : i64} {
  func.func @_conv_bn_relu_kernel(%arg0: i32, %arg1: i32, %arg2: memref<1x18x18x4xbf16, #tpu.memory_space<vmem>>, %arg3: memref<9x4x128xbf16, #tpu.memory_space<vmem>>, %arg4: memref<1x128xf32, #tpu.memory_space<vmem>>, %arg5: memref<1x128xf32, #tpu.memory_space<vmem>>, %arg6: memref<1x16x16x128xf32, #tpu.memory_space<vmem>>) attributes {dimension_semantics = [#tpu.dimension_semantics<parallel>, #tpu.dimension_semantics<parallel>], iteration_bounds = array<i64: 2, 1>, scalar_prefetch = 0 : i64, scratch_operands = 0 : i64, tpu.core_type = #tpu.core_type<tc>, window_params = [{transform_indices = @transform_0, window_bounds = array<i64: 1, 18, 18, 4>}, {pipeline_mode = #tpu.pipeline_mode<synchronous>, transform_indices = @transform_1, window_bounds = array<i64: 9, 4, 128>}, {pipeline_mode = #tpu.pipeline_mode<synchronous>, transform_indices = @transform_2, window_bounds = array<i64: 1, 128>}, {pipeline_mode = #tpu.pipeline_mode<synchronous>, transform_indices = @transform_3, window_bounds = array<i64: 1, 128>}, {transform_indices = @transform_4, window_bounds = array<i64: 1, 16, 16, 128>}]} {
    %c16_i32 = arith.constant 16 : i32
    %0 = arith.muli %arg1, %c16_i32 : i32
    %cst = arith.constant 0.000000e+00 : f32
    %1 = vector.broadcast %cst : f32 to vector<256x128xf32>
    %c0_i32 = arith.constant 0 : i32
    %2 = arith.addi %0, %c0_i32 : i32
    %c0 = arith.constant 0 : index
    %3 = arith.index_cast %2 : i32 to index
    %c0_0 = arith.constant 0 : index
    %c0_1 = arith.constant 0 : index
    %4 = vector.load %arg2[%c0, %3, %c0_0, %c0_1] : memref<1x18x18x4xbf16, #tpu.memory_space<vmem>>, vector<1x16x16x4xbf16>
    %5 = vector.shape_cast %4 : vector<1x16x16x4xbf16> to vector<16x16x4xbf16>
    %6 = vector.shape_cast %5 : vector<16x16x4xbf16> to vector<256x4xbf16>
    %c0_2 = arith.constant 0 : index
    %c0_3 = arith.constant 0 : index
    %c0_4 = arith.constant 0 : index
    %7 = vector.load %arg3[%c0_2, %c0_3, %c0_4] : memref<9x4x128xbf16, #tpu.memory_space<vmem>>, vector<1x4x128xbf16>
    %8 = vector.shape_cast %7 : vector<1x4x128xbf16> to vector<4x128xbf16>
    %cst_5 = arith.constant dense<0.000000e+00> : vector<256x128xf32>
    %9 = tpu.matmul %6, %8, %cst_5 {dimension_numbers = #tpu.dot_dimension_numbers<[1], [0], [0], [1], [0, 0, 1, 1], [], []>} : vector<256x4xbf16>, vector<4x128xbf16>, vector<256x128xf32> -> vector<256x128xf32>
    %10 = arith.addf %1, %9 : vector<256x128xf32>
    %c0_i32_6 = arith.constant 0 : i32
    %11 = arith.addi %0, %c0_i32_6 : i32
    %c0_7 = arith.constant 0 : index
    %12 = arith.index_cast %11 : i32 to index
    %c1 = arith.constant 1 : index
    %c0_8 = arith.constant 0 : index
    %13 = vector.load %arg2[%c0_7, %12, %c1, %c0_8] : memref<1x18x18x4xbf16, #tpu.memory_space<vmem>>, vector<1x16x16x4xbf16>
    %14 = vector.shape_cast %13 : vector<1x16x16x4xbf16> to vector<16x16x4xbf16>
    %15 = vector.shape_cast %14 : vector<16x16x4xbf16> to vector<256x4xbf16>
    %c1_9 = arith.constant 1 : index
    %c0_10 = arith.constant 0 : index
    %c0_11 = arith.constant 0 : index
    %16 = vector.load %arg3[%c1_9, %c0_10, %c0_11] : memref<9x4x128xbf16, #tpu.memory_space<vmem>>, vector<1x4x128xbf16>
    %17 = vector.shape_cast %16 : vector<1x4x128xbf16> to vector<4x128xbf16>
    %cst_12 = arith.constant dense<0.000000e+00> : vector<256x128xf32>
    %18 = tpu.matmul %15, %17, %cst_12 {dimension_numbers = #tpu.dot_dimension_numbers<[1], [0], [0], [1], [0, 0, 1, 1], [], []>} : vector<256x4xbf16>, vector<4x128xbf16>, vector<256x128xf32> -> vector<256x128xf32>
    %19 = arith.addf %10, %18 : vector<256x128xf32>
    %c0_i32_13 = arith.constant 0 : i32
    %20 = arith.addi %0, %c0_i32_13 : i32
    %c0_14 = arith.constant 0 : index
    %21 = arith.index_cast %20 : i32 to index
    %c2 = arith.constant 2 : index
    %c0_15 = arith.constant 0 : index
    %22 = vector.load %arg2[%c0_14, %21, %c2, %c0_15] : memref<1x18x18x4xbf16, #tpu.memory_space<vmem>>, vector<1x16x16x4xbf16>
    %23 = vector.shape_cast %22 : vector<1x16x16x4xbf16> to vector<16x16x4xbf16>
    %24 = vector.shape_cast %23 : vector<16x16x4xbf16> to vector<256x4xbf16>
    %c2_16 = arith.constant 2 : index
    %c0_17 = arith.constant 0 : index
    %c0_18 = arith.constant 0 : index
    %25 = vector.load %arg3[%c2_16, %c0_17, %c0_18] : memref<9x4x128xbf16, #tpu.memory_space<vmem>>, vector<1x4x128xbf16>
    %26 = vector.shape_cast %25 : vector<1x4x128xbf16> to vector<4x128xbf16>
    %cst_19 = arith.constant dense<0.000000e+00> : vector<256x128xf32>
    %27 = tpu.matmul %24, %26, %cst_19 {dimension_numbers = #tpu.dot_dimension_numbers<[1], [0], [0], [1], [0, 0, 1, 1], [], []>} : vector<256x4xbf16>, vector<4x128xbf16>, vector<256x128xf32> -> vector<256x128xf32>
    %28 = arith.addf %19, %27 : vector<256x128xf32>
    %c1_i32 = arith.constant 1 : i32
    %29 = arith.addi %0, %c1_i32 : i32
    %c0_20 = arith.constant 0 : index
    %30 = arith.index_cast %29 : i32 to index
    %c0_21 = arith.constant 0 : index
    %c0_22 = arith.constant 0 : index
    %31 = vector.load %arg2[%c0_20, %30, %c0_21, %c0_22] : memref<1x18x18x4xbf16, #tpu.memory_space<vmem>>, vector<1x16x16x4xbf16>
    %32 = vector.shape_cast %31 : vector<1x16x16x4xbf16> to vector<16x16x4xbf16>
    %33 = vector.shape_cast %32 : vector<16x16x4xbf16> to vector<256x4xbf16>
    %c3 = arith.constant 3 : index
    %c0_23 = arith.constant 0 : index
    %c0_24 = arith.constant 0 : index
    %34 = vector.load %arg3[%c3, %c0_23, %c0_24] : memref<9x4x128xbf16, #tpu.memory_space<vmem>>, vector<1x4x128xbf16>
    %35 = vector.shape_cast %34 : vector<1x4x128xbf16> to vector<4x128xbf16>
    %cst_25 = arith.constant dense<0.000000e+00> : vector<256x128xf32>
    %36 = tpu.matmul %33, %35, %cst_25 {dimension_numbers = #tpu.dot_dimension_numbers<[1], [0], [0], [1], [0, 0, 1, 1], [], []>} : vector<256x4xbf16>, vector<4x128xbf16>, vector<256x128xf32> -> vector<256x128xf32>
    %37 = arith.addf %28, %36 : vector<256x128xf32>
    %c1_i32_26 = arith.constant 1 : i32
    %38 = arith.addi %0, %c1_i32_26 : i32
    %c0_27 = arith.constant 0 : index
    %39 = arith.index_cast %38 : i32 to index
    %c1_28 = arith.constant 1 : index
    %c0_29 = arith.constant 0 : index
    %40 = vector.load %arg2[%c0_27, %39, %c1_28, %c0_29] : memref<1x18x18x4xbf16, #tpu.memory_space<vmem>>, vector<1x16x16x4xbf16>
    %41 = vector.shape_cast %40 : vector<1x16x16x4xbf16> to vector<16x16x4xbf16>
    %42 = vector.shape_cast %41 : vector<16x16x4xbf16> to vector<256x4xbf16>
    %c4 = arith.constant 4 : index
    %c0_30 = arith.constant 0 : index
    %c0_31 = arith.constant 0 : index
    %43 = vector.load %arg3[%c4, %c0_30, %c0_31] : memref<9x4x128xbf16, #tpu.memory_space<vmem>>, vector<1x4x128xbf16>
    %44 = vector.shape_cast %43 : vector<1x4x128xbf16> to vector<4x128xbf16>
    %cst_32 = arith.constant dense<0.000000e+00> : vector<256x128xf32>
    %45 = tpu.matmul %42, %44, %cst_32 {dimension_numbers = #tpu.dot_dimension_numbers<[1], [0], [0], [1], [0, 0, 1, 1], [], []>} : vector<256x4xbf16>, vector<4x128xbf16>, vector<256x128xf32> -> vector<256x128xf32>
    %46 = arith.addf %37, %45 : vector<256x128xf32>
    %c1_i32_33 = arith.constant 1 : i32
    %47 = arith.addi %0, %c1_i32_33 : i32
    %c0_34 = arith.constant 0 : index
    %48 = arith.index_cast %47 : i32 to index
    %c2_35 = arith.constant 2 : index
    %c0_36 = arith.constant 0 : index
    %49 = vector.load %arg2[%c0_34, %48, %c2_35, %c0_36] : memref<1x18x18x4xbf16, #tpu.memory_space<vmem>>, vector<1x16x16x4xbf16>
    %50 = vector.shape_cast %49 : vector<1x16x16x4xbf16> to vector<16x16x4xbf16>
    %51 = vector.shape_cast %50 : vector<16x16x4xbf16> to vector<256x4xbf16>
    %c5 = arith.constant 5 : index
    %c0_37 = arith.constant 0 : index
    %c0_38 = arith.constant 0 : index
    %52 = vector.load %arg3[%c5, %c0_37, %c0_38] : memref<9x4x128xbf16, #tpu.memory_space<vmem>>, vector<1x4x128xbf16>
    %53 = vector.shape_cast %52 : vector<1x4x128xbf16> to vector<4x128xbf16>
    %cst_39 = arith.constant dense<0.000000e+00> : vector<256x128xf32>
    %54 = tpu.matmul %51, %53, %cst_39 {dimension_numbers = #tpu.dot_dimension_numbers<[1], [0], [0], [1], [0, 0, 1, 1], [], []>} : vector<256x4xbf16>, vector<4x128xbf16>, vector<256x128xf32> -> vector<256x128xf32>
    %55 = arith.addf %46, %54 : vector<256x128xf32>
    %c2_i32 = arith.constant 2 : i32
    %56 = arith.addi %0, %c2_i32 : i32
    %c0_40 = arith.constant 0 : index
    %57 = arith.index_cast %56 : i32 to index
    %c0_41 = arith.constant 0 : index
    %c0_42 = arith.constant 0 : index
    %58 = vector.load %arg2[%c0_40, %57, %c0_41, %c0_42] : memref<1x18x18x4xbf16, #tpu.memory_space<vmem>>, vector<1x16x16x4xbf16>
    %59 = vector.shape_cast %58 : vector<1x16x16x4xbf16> to vector<16x16x4xbf16>
    %60 = vector.shape_cast %59 : vector<16x16x4xbf16> to vector<256x4xbf16>
    %c6 = arith.constant 6 : index
    %c0_43 = arith.constant 0 : index
    %c0_44 = arith.constant 0 : index
    %61 = vector.load %arg3[%c6, %c0_43, %c0_44] : memref<9x4x128xbf16, #tpu.memory_space<vmem>>, vector<1x4x128xbf16>
    %62 = vector.shape_cast %61 : vector<1x4x128xbf16> to vector<4x128xbf16>
    %cst_45 = arith.constant dense<0.000000e+00> : vector<256x128xf32>
    %63 = tpu.matmul %60, %62, %cst_45 {dimension_numbers = #tpu.dot_dimension_numbers<[1], [0], [0], [1], [0, 0, 1, 1], [], []>} : vector<256x4xbf16>, vector<4x128xbf16>, vector<256x128xf32> -> vector<256x128xf32>
    %64 = arith.addf %55, %63 : vector<256x128xf32>
    %c2_i32_46 = arith.constant 2 : i32
    %65 = arith.addi %0, %c2_i32_46 : i32
    %c0_47 = arith.constant 0 : index
    %66 = arith.index_cast %65 : i32 to index
    %c1_48 = arith.constant 1 : index
    %c0_49 = arith.constant 0 : index
    %67 = vector.load %arg2[%c0_47, %66, %c1_48, %c0_49] : memref<1x18x18x4xbf16, #tpu.memory_space<vmem>>, vector<1x16x16x4xbf16>
    %68 = vector.shape_cast %67 : vector<1x16x16x4xbf16> to vector<16x16x4xbf16>
    %69 = vector.shape_cast %68 : vector<16x16x4xbf16> to vector<256x4xbf16>
    %c7 = arith.constant 7 : index
    %c0_50 = arith.constant 0 : index
    %c0_51 = arith.constant 0 : index
    %70 = vector.load %arg3[%c7, %c0_50, %c0_51] : memref<9x4x128xbf16, #tpu.memory_space<vmem>>, vector<1x4x128xbf16>
    %71 = vector.shape_cast %70 : vector<1x4x128xbf16> to vector<4x128xbf16>
    %cst_52 = arith.constant dense<0.000000e+00> : vector<256x128xf32>
    %72 = tpu.matmul %69, %71, %cst_52 {dimension_numbers = #tpu.dot_dimension_numbers<[1], [0], [0], [1], [0, 0, 1, 1], [], []>} : vector<256x4xbf16>, vector<4x128xbf16>, vector<256x128xf32> -> vector<256x128xf32>
    %73 = arith.addf %64, %72 : vector<256x128xf32>
    %c2_i32_53 = arith.constant 2 : i32
    %74 = arith.addi %0, %c2_i32_53 : i32
    %c0_54 = arith.constant 0 : index
    %75 = arith.index_cast %74 : i32 to index
    %c2_55 = arith.constant 2 : index
    %c0_56 = arith.constant 0 : index
    %76 = vector.load %arg2[%c0_54, %75, %c2_55, %c0_56] : memref<1x18x18x4xbf16, #tpu.memory_space<vmem>>, vector<1x16x16x4xbf16>
    %77 = vector.shape_cast %76 : vector<1x16x16x4xbf16> to vector<16x16x4xbf16>
    %78 = vector.shape_cast %77 : vector<16x16x4xbf16> to vector<256x4xbf16>
    %c8 = arith.constant 8 : index
    %c0_57 = arith.constant 0 : index
    %c0_58 = arith.constant 0 : index
    %79 = vector.load %arg3[%c8, %c0_57, %c0_58] : memref<9x4x128xbf16, #tpu.memory_space<vmem>>, vector<1x4x128xbf16>
    %80 = vector.shape_cast %79 : vector<1x4x128xbf16> to vector<4x128xbf16>
    %cst_59 = arith.constant dense<0.000000e+00> : vector<256x128xf32>
    %81 = tpu.matmul %78, %80, %cst_59 {dimension_numbers = #tpu.dot_dimension_numbers<[1], [0], [0], [1], [0, 0, 1, 1], [], []>} : vector<256x4xbf16>, vector<4x128xbf16>, vector<256x128xf32> -> vector<256x128xf32>
    %82 = arith.addf %73, %81 : vector<256x128xf32>
    %c0_60 = arith.constant 0 : index
    %c0_61 = arith.constant 0 : index
    %83 = vector.load %arg4[%c0_60, %c0_61] : memref<1x128xf32, #tpu.memory_space<vmem>>, vector<1x128xf32>
    %84 = vector.broadcast %83 : vector<1x128xf32> to vector<256x128xf32>
    %85 = arith.mulf %82, %84 : vector<256x128xf32>
    %c0_62 = arith.constant 0 : index
    %c0_63 = arith.constant 0 : index
    %86 = vector.load %arg5[%c0_62, %c0_63] : memref<1x128xf32, #tpu.memory_space<vmem>>, vector<1x128xf32>
    %87 = vector.broadcast %86 : vector<1x128xf32> to vector<256x128xf32>
    %88 = arith.addf %85, %87 : vector<256x128xf32>
    %cst_64 = arith.constant 0.000000e+00 : f32
    %89 = vector.broadcast %cst_64 : f32 to vector<256x128xf32>
    %90 = arith.maximumf %88, %89 : vector<256x128xf32>
    %91 = vector.shape_cast %90 : vector<256x128xf32> to vector<16x16x128xf32>
    %c0_65 = arith.constant 0 : index
    %c0_66 = arith.constant 0 : index
    %c0_67 = arith.constant 0 : index
    %c0_68 = arith.constant 0 : index
    %92 = vector.load %arg6[%c0_65, %c0_66, %c0_67, %c0_68] : memref<1x16x16x128xf32, #tpu.memory_space<vmem>>, vector<1x16x16x128xf32>
    %93 = vector.shape_cast %92 : vector<1x16x16x128xf32> to vector<16x16x128xf32>
    %94 = vector.shape_cast %91 : vector<16x16x128xf32> to vector<1x16x16x128xf32>
    tpu.vector_store %arg6[%c0_65, %c0_66, %c0_67, %c0_68], %94 {strides = array<i32>} : memref<1x16x16x128xf32, #tpu.memory_space<vmem>>, vector<1x16x16x128xf32>,
    return
  }
  func.func @transform_0(%arg0: i32, %arg1: i32) -> (i32, i32, i32, i32) {
    %c0_i32 = arith.constant 0 : i32
    %c0_i32_0 = arith.constant 0 : i32
    %c0_i32_1 = arith.constant 0 : i32
    %c0_i32_2 = arith.constant 0 : i32
    return %arg0, %c0_i32, %c0_i32_0, %c0_i32_1 : i32, i32, i32, i32
  }
  func.func @transform_1(%arg0: i32, %arg1: i32) -> (i32, i32, i32) {
    %c0_i32 = arith.constant 0 : i32
    %c0_i32_0 = arith.constant 0 : i32
    %c0_i32_1 = arith.constant 0 : i32
    %c0_i32_2 = arith.constant 0 : i32
    return %c0_i32, %c0_i32_0, %c0_i32_1 : i32, i32, i32
  }
  func.func @transform_2(%arg0: i32, %arg1: i32) -> (i32, i32) {
    %c0_i32 = arith.constant 0 : i32
    %c0_i32_0 = arith.constant 0 : i32
    %c0_i32_1 = arith.constant 0 : i32
    return %c0_i32, %c0_i32_0 : i32, i32
  }
  func.func @transform_3(%arg0: i32, %arg1: i32) -> (i32, i32) {
    %c0_i32 = arith.constant 0 : i32
    %c0_i32_0 = arith.constant 0 : i32
    %c0_i32_1 = arith.constant 0 : i32
    return %c0_i32, %c0_i32_0 : i32, i32
  }
  func.func @transform_4(%arg0: i32, %arg1: i32) -> (i32, i32, i32, i32) {
    %c0_i32 = arith.constant 0 : i32
    %c0_i32_0 = arith.constant 0 : i32
    %c0_i32_1 = arith.constant 0 : i32
    return %arg0, %arg1, %c0_i32, %c0_i32_0 : i32, i32, i32, i32
  }
}

</mosaic_0001>

<llo_original>
// kernel: basic_conv2d.1
$region0: #{basic_conv2d.1}
  #allocation0 [shape = 'u32[]', space=smem, size = 0x4, offset = 0x4, fixed_abs, tag = 'smem constant byte address 0x4 - core index']
  #allocation1 [shape = 'u32[144,128]{1,0:T(1,128)}', space=vmem, size = 0x12000, scoped, tag = 'internal scratch']
  %s0 = inlined_call_operand.vmem [shape: bf16[2,18,18,4], index: 0, kind: input, shape index: {}]
  %s1 = inlined_call_operand.vmem [shape: bf16[9,4,128], index: 1, kind: input, shape index: {}]
  %s2 = inlined_call_operand.vmem [shape: f32[1,128], index: 2, kind: input, shape index: {}]
  %s3 = inlined_call_operand.vmem [shape: f32[1,128], index: 3, kind: input, shape index: {}]
  %s4 = inlined_call_operand.vmem [shape: f32[2,16,16,128], index: 4, kind: output, shape index: {}]
  %s5 = sld [smem:[#allocation0]]
  $region49: #{basic_conv2d.1} parent=0
    _
  %s7 = ssub.s32 1, %s5
  %s8 = scalar_select 0, %s7, %s5
  loop: start=0, step=1, limit=4
  $region2: #{basic_conv2d.1} parent=0 // loop_pre_header
    _
  $region3: #{basic_conv2d.1} parent=0 // loop_header
    %s10 = sphi 0, %s14
    %p11 = scmp.ge.s32.totalorder %s10, 4
    %s17 = sphi 0, %s29
    %s18 = sphi 0, %s25
    %s19 = sphi 0, %s17
    %s20 = sphi 0, %s18
    %s21 = sphi 0, %s19
    %s22 = sphi 0, %s20
    %s32 = sphi 0, %s34
    %s35 = sphi 0, %s32
    %s36 = sphi 0, %s35
    %s52 = sphi 0, %s36
    %s56 = sphi 0, %s56
    %s58 = sphi 0, %s56
    %s59 = sphi 0, %s58
    %s73 = sphi 0, %s59
    %s77 = sphi 0, %s77
    %s79 = sphi 0, %s77
    %s80 = sphi 0, %s79
    %s94 = sphi 0, %s80
    %s98 = sphi 0, %s98
    %s100 = sphi 0, %s98
    %s101 = sphi 0, %s100
    %s115 = sphi 0, %s101
    %s123 = sphi 0, %s125
    %s126 = sphi 0, %s123
    %s127 = sphi 0, %s126
    %s143 = sphi 0, %s127
  $region4: #{basic_conv2d.1} parent=0 // loop_header_branch
    %13 = sbr.rel (%p11) target = $region8
  $region5: #{basic_conv2d.1} parent=0 // loop_body
    %s15 = ssub.s32 %s10, 1
    %s16 = ssub.s32 %s10, 2
    %s23 = sadd.s32 1, %s18
    %p24 = scmp.ge.s32.totalorder %s23, 1
    %s25 = scalar_select %p24, 0, %s23
    %s26 = sadd.s32 1, %s17
    %s27 = scalar_select %p24, %s26, %s17
    %p28 = scmp.ge.s32.totalorder %s27, 2
    %s29 = scalar_select %p28, 0, %s27
    %s30 = ssub.s32 %s17, %s29
    %p31 = scmp.eq.s32.totalorder %s30, 0
    %s33 = sadd.s32 %s32, 1
    %s34 = scalar_select %p31, %s32, %s33
    %p37 = pneg %p31
    %p38 = scmp.eq.s32.totalorder %s10, 1
    %p39 = por %p37, %p38
    %p40 = scmp.ne.s32.totalorder %s32, %s35
    %p41 = scmp.eq.s32.totalorder %s10, 0
    %p42 = por %p40, %p41
    %p43 = scmp.ne.s32.totalorder %s32, %s35
    %p44 = scmp.eq.s32.totalorder %s15, 1
    %p45 = por %p43, %p44
    %p46 = scmp.ne.s32.totalorder %s35, %s36
    %p47 = scmp.eq.s32.totalorder %s15, 0
    %p48 = por %p46, %p47
    %p49 = scmp.ne.s32.totalorder %s35, %s36
    %p50 = scmp.eq.s32.totalorder %s16, 1
    %p51 = por %p49, %p50
    %p53 = scmp.ne.s32.totalorder %s36, %s52
    %p54 = scmp.eq.s32.totalorder %s16, 0
    %p55 = por %p53, %p54
    %s57 = sadd.s32 %s56, 1
    %p60 = scmp.eq.s32.totalorder %s10, 1
    %p61 = scmp.ne.s32.totalorder %s56, %s58
    %p62 = scmp.eq.s32.totalorder %s10, 0
    %p63 = por %p61, %p62
    %p64 = scmp.ne.s32.totalorder %s56, %s58
    %p65 = scmp.eq.s32.totalorder %s15, 1
    %p66 = por %p64, %p65
    %p67 = scmp.ne.s32.totalorder %s58, %s59
    %p68 = scmp.eq.s32.totalorder %s15, 0
    %p69 = por %p67, %p68
    %p70 = scmp.ne.s32.totalorder %s58, %s59
    %p71 = scmp.eq.s32.totalorder %s16, 1
    %p72 = por %p70, %p71
    %p74 = scmp.ne.s32.totalorder %s59, %s73
    %p75 = scmp.eq.s32.totalorder %s16, 0
    %p76 = por %p74, %p75
    %s78 = sadd.s32 %s77, 1
    %p81 = scmp.eq.s32.totalorder %s10, 1
    %p82 = scmp.ne.s32.totalorder %s77, %s79
    %p83 = scmp.eq.s32.totalorder %s10, 0
    %p84 = por %p82, %p83
    %p85 = scmp.ne.s32.totalorder %s77, %s79
    %p86 = scmp.eq.s32.totalorder %s15, 1
    %p87 = por %p85, %p86
    %p88 = scmp.ne.s32.totalorder %s79, %s80
    %p89 = scmp.eq.s32.totalorder %s15, 0
    %p90 = por %p88, %p89
    %p91 = scmp.ne.s32.totalorder %s79, %s80
    %p92 = scmp.eq.s32.totalorder %s16, 1
    %p93 = por %p91, %p92
    %p95 = scmp.ne.s32.totalorder %s80, %s94
    %p96 = scmp.eq.s32.totalorder %s16, 0
    %p97 = por %p95, %p96
    %s99 = sadd.s32 %s98, 1
    %p102 = scmp.eq.s32.totalorder %s10, 1
    %p103 = scmp.ne.s32.totalorder %s98, %s100
    %p104 = scmp.eq.s32.totalorder %s10, 0
    %p105 = por %p103, %p104
    %p106 = scmp.ne.s32.totalorder %s98, %s100
    %p107 = scmp.eq.s32.totalorder %s15, 1
    %p108 = por %p106, %p107
    %p109 = scmp.ne.s32.totalorder %s100, %s101
    %p110 = scmp.eq.s32.totalorder %s15, 0
    %p111 = por %p109, %p110
    %p112 = scmp.ne.s32.totalorder %s100, %s101
    %p113 = scmp.eq.s32.totalorder %s16, 1
    %p114 = por %p112, %p113
    %p116 = scmp.ne.s32.totalorder %s101, %s115
    %p117 = scmp.eq.s32.totalorder %s16, 0
    %p118 = por %p116, %p117
    %s119 = ssub.s32 %s17, %s29
    %s120 = ssub.s32 %s18, %s25
    %s121 = sor.u32 %s119, %s120
    %p122 = scmp.eq.s32.totalorder %s121, 0
    %s124 = sadd.s32 %s123, 1
    %s125 = scalar_select %p122, %s123, %s124
    %p128 = pneg %p122
    %p129 = scmp.eq.s32.totalorder %s10, 1
    %p130 = por %p128, %p129
    %p131 = scmp.ne.s32.totalorder %s123, %s126
    %p132 = scmp.eq.s32.totalorder %s10, 0
    %p133 = por %p131, %p132
    %p134 = scmp.ne.s32.totalorder %s123, %s126
    %p135 = scmp.eq.s32.totalorder %s15, 1
    %p136 = por %p134, %p135
    %p137 = scmp.ne.s32.totalorder %s126, %s127
    %p138 = scmp.eq.s32.totalorder %s15, 0
    %p139 = por %p137, %p138
    %p140 = scmp.ne.s32.totalorder %s126, %s127
    %p141 = scmp.eq.s32.totalorder %s16, 1
    %p142 = por %p140, %p141
    %p144 = scmp.ne.s32.totalorder %s127, %s143
    %p145 = scmp.eq.s32.totalorder %s16, 0
    %p146 = por %p144, %p145
    %p147 = scmp.le.s32.totalorder 1, %s10
    %p148 = scmp.lt.s32.totalorder %s10, 3
    %p149 = pnand %p147, %p148
    %p150 = pneg %p149
    // Predicated region
    $region9: #{basic_conv2d.1} parent=5 // pred_check
      _
    $region10: #{basic_conv2d.1} parent=5 // pred_check_branch
      %152 = sbr.rel (%p149) target = $region12
    $region11: #{basic_conv2d.1} parent=5 // pred_region
      %s153 = ssub.s32 %s10, 1
      // Predicated region
      $region13: #{basic_conv2d.1} parent=11 // pred_check
        %p154 = pneg %p69
      $region14: #{basic_conv2d.1} parent=11 // pred_check_branch
        %156 = sbr.rel (%p154) target = $region16
      $region15: #{basic_conv2d.1} parent=11 // pred_region
        _
      $region16: #{basic_conv2d.1} parent=11 // pred_fallthru
        _
      // Predicated region
      $region17: #{basic_conv2d.1} parent=11 // pred_check
        %p157 = pneg %p90
      $region18: #{basic_conv2d.1} parent=11 // pred_check_branch
        %159 = sbr.rel (%p157) target = $region20
      $region19: #{basic_conv2d.1} parent=11 // pred_region
        _
      $region20: #{basic_conv2d.1} parent=11 // pred_fallthru
        _
      // Predicated region
      $region21: #{basic_conv2d.1} parent=11 // pred_check
        %p160 = pneg %p111
      $region22: #{basic_conv2d.1} parent=11 // pred_check_branch
        %162 = sbr.rel (%p160) target = $region24
      $region23: #{basic_conv2d.1} parent=11 // pred_region
        _
      $region24: #{basic_conv2d.1} parent=11 // pred_fallthru
        _
    $region12: #{basic_conv2d.1} parent=5 // pred_fallthru
      _
    %p163 = scmp.lt.s32.totalorder %s10, 2
    // Predicated region
    $region25: #{basic_conv2d.1} parent=5 // pred_check
      %p164 = pneg %p163
    $region26: #{basic_conv2d.1} parent=5 // pred_check_branch
      %166 = sbr.rel (%p164) target = $region28
    $region27: #{basic_conv2d.1} parent=5 // pred_region
      // Predicated region
      $region29: #{basic_conv2d.1} parent=27 // pred_check
        %p167 = pneg %p42
      $region30: #{basic_conv2d.1} parent=27 // pred_check_branch
        %169 = sbr.rel (%p167) target = $region32
      $region31: #{basic_conv2d.1} parent=27 // pred_region
        %p170 = scmp.lt.s32.totalorder %s17, 1
        %s171 = scalar_select %p170, %s17, 1
        %s172 = smul.addr %s171, 54
        %s173 = smul.addr %s172, 4
        %s174 = scalar_lea.vmem %s0, %s173
      $region32: #{basic_conv2d.1} parent=27 // pred_fallthru
        _
    $region28: #{basic_conv2d.1} parent=5 // pred_fallthru
      _
    %p175 = scmp.le.s32.totalorder 1, %s10
    %p176 = scmp.lt.s32.totalorder %s10, 3
    %p177 = pnand %p175, %p176
    %p178 = pneg %p177
    // Predicated region
    $region33: #{basic_conv2d.1} parent=5 // pred_check
      _
    $region34: #{basic_conv2d.1} parent=5 // pred_check_branch
      %180 = sbr.rel (%p177) target = $region36
    $region35: #{basic_conv2d.1} parent=5 // pred_region
      %s181 = ssub.s32 %s10, 1
      %p182 = scmp.lt.s32.totalorder %s19, 1
      %s183 = scalar_select %p182, %s19, 1
      %s184 = smul.addr %s183, 54
      %s185 = smul.addr %s184, 4
      %s186 = scalar_lea.vmem %s0, %s185
      %p187 = pneg %p48
      %p188 = pneg %p45
      %p189 = pneg %p69
      %p190 = pneg %p66
      %p191 = pneg %p90
      %p192 = pneg %p87
      %p193 = pneg %p111
      %p194 = pneg %p108
      %p195 = pneg %p139
      %p196 = pneg %p136
      %s197 = smul.u32 16, %s20
      %p198 = scmp.lt.s32.totalorder %s19, 1
      %s199 = scalar_select %p198, %s19, 1
      %p200 = scmp.lt.s32.totalorder %s197, 15
      %s201 = scalar_select %p200, %s197, 15
      %s202 = smul.addr %s201, 2
      %s203 = smul.addr %s199, 32
      %s204 = sadd.s32 %s202, %s203
      %s205 = smul.addr %s204, 8
      %s206 = scalar_lea.vmem %s4, %s205
      %p207 = scmp.lt.s32.totalorder %s19, 1
      %s208 = scalar_select %p207, %s19, 1
      %s209 = smul.addr %s208, 54
      %s210 = smul.addr %s209, 4
      %s211 = scalar_lea.vmem %s0, %s210
      %s212 = smul.u32 16, %s20
      %p213 = scmp.lt.s32.totalorder %s19, 1
      %s214 = scalar_select %p213, %s19, 1
      %p215 = scmp.lt.s32.totalorder %s212, 15
      %s216 = scalar_select %p215, %s212, 15
      %s217 = smul.addr %s216, 2
      %s218 = smul.addr %s214, 32
      %s219 = sadd.s32 %s217, %s218
      %s220 = smul.addr %s219, 8
      %s221 = scalar_lea.vmem %s4, %s220
      %s222 = smul.u32 16, %s20
      %s224 = smul.u32 %s20, 16
      %s225 = smul.u32 %s224, 3
      %s226 = smul.addr %s225, 4
      %s227 = scalar_lea.vmem %s211, %s226
      %v228 = vld [vmem:[%s227] sm:$0xf]
      %v229 = vld [vmem:[%s227 + $0x4] sm:$0xf]
      %v230 = vld [vmem:[%s227 + $0xc] sm:$0xf]
      %v231 = vld [vmem:[%s227 + $0x10] sm:$0xf]
      %v232 = vld [vmem:[%s227 + $0x18] sm:$0xf]
      %v233 = vld [vmem:[%s227 + $0x1c] sm:$0xf]
      %v234 = vld [vmem:[%s227 + $0x24] sm:$0xf]
      %v235 = vld [vmem:[%s227 + $0x28] sm:$0xf]
      %v236 = vld [vmem:[%s227 + $0x30] sm:$0xf]
      %v237 = vld [vmem:[%s227 + $0x34] sm:$0xf]
      %v238 = vld [vmem:[%s227 + $0x3c] sm:$0xf]
      %v239 = vld [vmem:[%s227 + $0x40] sm:$0xf]
      %v240 = vld [vmem:[%s227 + $0x48] sm:$0xf]
      %v241 = vld [vmem:[%s227 + $0x4c] sm:$0xf]
      %v242 = vld [vmem:[%s227 + $0x54] sm:$0xf]
      %v243 = vld [vmem:[%s227 + $0x58] sm:$0xf]
      %v244 = vld [vmem:[%s227 + $0x60] sm:$0xf]
      %v245 = vld [vmem:[%s227 + $0x64] sm:$0xf]
      %v246 = vld [vmem:[%s227 + $0x6c] sm:$0xf]
      %v247 = vld [vmem:[%s227 + $0x70] sm:$0xf]
      %v248 = vld [vmem:[%s227 + $0x78] sm:$0xf]
      %v249 = vld [vmem:[%s227 + $0x7c] sm:$0xf]
      %v250 = vld [vmem:[%s227 + $0x84] sm:$0xf]
      %v251 = vld [vmem:[%s227 + $0x88] sm:$0xf]
      %v252 = vld [vmem:[%s227 + $0x90] sm:$0xf]
      %v253 = vld [vmem:[%s227 + $0x94] sm:$0xf]
      %v254 = vld [vmem:[%s227 + $0x9c] sm:$0xf]
      %v255 = vld [vmem:[%s227 + $0xa0] sm:$0xf]
      %v256 = vld [vmem:[%s227 + $0xa8] sm:$0xf]
      %v257 = vld [vmem:[%s227 + $0xac] sm:$0xf]
      %v258 = vld [vmem:[%s227 + $0xb4] sm:$0xf]
      %v259 = vld [vmem:[%s227 + $0xb8] sm:$0xf]
      %v260 = vld [vmem:[%s1] sm:$0x3]
      %v261 = vld [vmem:[%s227 + $0x8] sm:$0x1]
      %v262 = vld [vmem:[%s227 + $0x14] sm:$0x1]
      %v263 = vld [vmem:[%s227 + $0x20] sm:$0x1]
      %v264 = vld [vmem:[%s227 + $0x2c] sm:$0x1]
      %v265 = vld [vmem:[%s227 + $0x38] sm:$0x1]
      %v266 = vld [vmem:[%s227 + $0x44] sm:$0x1]
      %v267 = vld [vmem:[%s227 + $0x50] sm:$0x1]
      %v268 = vld [vmem:[%s227 + $0x5c] sm:$0x1]
      %v269 = vld [vmem:[%s227 + $0x68] sm:$0x1]
      %v270 = vld [vmem:[%s227 + $0x74] sm:$0x1]
      %v271 = vld [vmem:[%s227 + $0x80] sm:$0x1]
      %v272 = vld [vmem:[%s227 + $0x8c] sm:$0x1]
      %v273 = vld [vmem:[%s227 + $0x98] sm:$0x1]
      %v274 = vld [vmem:[%s227 + $0xa4] sm:$0x1]
      %v275 = vld [vmem:[%s227 + $0xb0] sm:$0x1]
      %v276 = vld [vmem:[%s227 + $0xbc] sm:$0x1]
      %vm277 = vsmask.f32 3328
      %vm278 = vsmask.f32 7440
      %vm279 = vmor %vm277, %vm278
      %v281 = vshrl.u32 %v228, 16
      %v283 = vrot.slane %v281, 4
      %v284 = vshll.u32 %v228, 16
      %v286 = vrot.slane %v284, 5
      %v287 = vor.u32 %v283, %v286
      %v288 = vrot.slane %v287, 4
      %v290 = vshll.u32 %v229, 16
      %v292 = vrot.slane %v290, 5
      %v293 = vsel %vm279, %v288, %v292
      %v294 = vshrl.u32 %v229, 16
      %v296 = vrot.slane %v294, 4
      %v297 = vor.u32 %v296, %v292
      %v298 = vrot.slane %v297, 4
      %v300 = vshll.u32 %v261, 16
      %v302 = vrot.slane %v300, 5
      %v303 = vsel %vm279, %v298, %v302
      %v305 = vshrl.u32 %v230, 16
      %v307 = vrot.slane %v305, 4
      %v308 = vshll.u32 %v230, 16
      %v310 = vrot.slane %v308, 5
      %v311 = vor.u32 %v307, %v310
      %v312 = vrot.slane %v311, 4
      %v314 = vshll.u32 %v231, 16
      %v316 = vrot.slane %v314, 5
      %v317 = vsel %vm279, %v312, %v316
      %v318 = vshrl.u32 %v231, 16
      %v320 = vrot.slane %v318, 4
      %v321 = vor.u32 %v320, %v316
      %v322 = vrot.slane %v321, 4
      %v324 = vshll.u32 %v262, 16
      %v326 = vrot.slane %v324, 5
      %v327 = vsel %vm279, %v322, %v326
      %v329 = vshrl.u32 %v232, 16
      %v331 = vrot.slane %v329, 4
      %v332 = vshll.u32 %v232, 16
      %v334 = vrot.slane %v332, 5
      %v335 = vor.u32 %v331, %v334
      %v336 = vrot.slane %v335, 4
      %v338 = vshll.u32 %v233, 16
      %v340 = vrot.slane %v338, 5
      %v341 = vsel %vm279, %v336, %v340
      %v342 = vshrl.u32 %v233, 16
      %v344 = vrot.slane %v342, 4
      %v345 = vor.u32 %v344, %v340
      %v346 = vrot.slane %v345, 4
      %v348 = vshll.u32 %v263, 16
      %v350 = vrot.slane %v348, 5
      %v351 = vsel %vm279, %v346, %v350
      %v353 = vshrl.u32 %v234, 16
      %v355 = vrot.slane %v353, 4
      %v356 = vshll.u32 %v234, 16
      %v358 = vrot.slane %v356, 5
      %v359 = vor.u32 %v355, %v358
      %v360 = vrot.slane %v359, 4
      %v362 = vshll.u32 %v235, 16
      %v364 = vrot.slane %v362, 5
      %v365 = vsel %vm279, %v360, %v364
      %v366 = vshrl.u32 %v235, 16
      %v368 = vrot.slane %v366, 4
      %v369 = vor.u32 %v368, %v364
      %v370 = vrot.slane %v369, 4
      %v372 = vshll.u32 %v264, 16
      %v374 = vrot.slane %v372, 5
      %v375 = vsel %vm279, %v370, %v374
      %v377 = vshrl.u32 %v236, 16
      %v379 = vrot.slane %v377, 4
      %v380 = vshll.u32 %v236, 16
      %v382 = vrot.slane %v380, 5
      %v383 = vor.u32 %v379, %v382
      %v384 = vrot.slane %v383, 4
      %v386 = vshll.u32 %v237, 16
      %v388 = vrot.slane %v386, 5
      %v389 = vsel %vm279, %v384, %v388
      %v390 = vshrl.u32 %v237, 16
      %v392 = vrot.slane %v390, 4
      %v393 = vor.u32 %v392, %v388
      %v394 = vrot.slane %v393, 4
      %v396 = vshll.u32 %v265, 16
      %v398 = vrot.slane %v396, 5
      %v399 = vsel %vm279, %v394, %v398
      %v401 = vshrl.u32 %v238, 16
      %v403 = vrot.slane %v401, 4
      %v404 = vshll.u32 %v238, 16
      %v406 = vrot.slane %v404, 5
      %v407 = vor.u32 %v403, %v406
      %v408 = vrot.slane %v407, 4
      %v410 = vshll.u32 %v239, 16
      %v412 = vrot.slane %v410, 5
      %v413 = vsel %vm279, %v408, %v412
      %v414 = vshrl.u32 %v239, 16
      %v416 = vrot.slane %v414, 4
      %v417 = vor.u32 %v416, %v412
      %v418 = vrot.slane %v417, 4
      %v420 = vshll.u32 %v266, 16
      %v422 = vrot.slane %v420, 5
      %v423 = vsel %vm279, %v418, %v422
      %v425 = vshrl.u32 %v240, 16
      %v427 = vrot.slane %v425, 4
      %v428 = vshll.u32 %v240, 16
      %v430 = vrot.slane %v428, 5
      %v431 = vor.u32 %v427, %v430
      %v432 = vrot.slane %v431, 4
      %v434 = vshll.u32 %v241, 16
      %v436 = vrot.slane %v434, 5
      %v437 = vsel %vm279, %v432, %v436
      %v438 = vshrl.u32 %v241, 16
      %v440 = vrot.slane %v438, 4
      %v441 = vor.u32 %v440, %v436
      %v442 = vrot.slane %v441, 4
      %v444 = vshll.u32 %v267, 16
      %v446 = vrot.slane %v444, 5
      %v447 = vsel %vm279, %v442, %v446
      %v449 = vshrl.u32 %v242, 16
      %v451 = vrot.slane %v449, 4
      %v452 = vshll.u32 %v242, 16
      %v454 = vrot.slane %v452, 5
      %v455 = vor.u32 %v451, %v454
      %v456 = vrot.slane %v455, 4
      %v458 = vshll.u32 %v243, 16
      %v460 = vrot.slane %v458, 5
      %v461 = vsel %vm279, %v456, %v460
      %v462 = vshrl.u32 %v243, 16
      %v464 = vrot.slane %v462, 4
      %v465 = vor.u32 %v464, %v460
      %v466 = vrot.slane %v465, 4
      %v468 = vshll.u32 %v268, 16
      %v470 = vrot.slane %v468, 5
      %v471 = vsel %vm279, %v466, %v470
      %v473 = vshrl.u32 %v244, 16
      %v475 = vrot.slane %v473, 4
      %v476 = vshll.u32 %v244, 16
      %v478 = vrot.slane %v476, 5
      %v479 = vor.u32 %v475, %v478
      %v480 = vrot.slane %v479, 4
      %v482 = vshll.u32 %v245, 16
      %v484 = vrot.slane %v482, 5
      %v485 = vsel %vm279, %v480, %v484
      %v486 = vshrl.u32 %v245, 16
      %v488 = vrot.slane %v486, 4
      %v489 = vor.u32 %v488, %v484
      %v490 = vrot.slane %v489, 4
      %v492 = vshll.u32 %v269, 16
      %v494 = vrot.slane %v492, 5
      %v495 = vsel %vm279, %v490, %v494
      %v497 = vshrl.u32 %v246, 16
      %v499 = vrot.slane %v497, 4
      %v500 = vshll.u32 %v246, 16
      %v502 = vrot.slane %v500, 5
      %v503 = vor.u32 %v499, %v502
      %v504 = vrot.slane %v503, 4
      %v506 = vshll.u32 %v247, 16
      %v508 = vrot.slane %v506, 5
      %v509 = vsel %vm279, %v504, %v508
      %v510 = vshrl.u32 %v247, 16
      %v512 = vrot.slane %v510, 4
      %v513 = vor.u32 %v512, %v508
      %v514 = vrot.slane %v513, 4
      %v516 = vshll.u32 %v270, 16
      %v518 = vrot.slane %v516, 5
      %v519 = vsel %vm279, %v514, %v518
      %v521 = vshrl.u32 %v248, 16
      %v523 = vrot.slane %v521, 4
      %v524 = vshll.u32 %v248, 16
      %v526 = vrot.slane %v524, 5
      %v527 = vor.u32 %v523, %v526
      %v528 = vrot.slane %v527, 4
      %v530 = vshll.u32 %v249, 16
      %v532 = vrot.slane %v530, 5
      %v533 = vsel %vm279, %v528, %v532
      %v534 = vshrl.u32 %v249, 16
      %v536 = vrot.slane %v534, 4
      %v537 = vor.u32 %v536, %v532
      %v538 = vrot.slane %v537, 4
      %v540 = vshll.u32 %v271, 16
      %v542 = vrot.slane %v540, 5
      %v543 = vsel %vm279, %v538, %v542
      %v545 = vshrl.u32 %v250, 16
      %v547 = vrot.slane %v545, 4
      %v548 = vshll.u32 %v250, 16
      %v550 = vrot.slane %v548, 5
      %v551 = vor.u32 %v547, %v550
      %v552 = vrot.slane %v551, 4
      %v554 = vshll.u32 %v251, 16
      %v556 = vrot.slane %v554, 5
      %v557 = vsel %vm279, %v552, %v556
      %v558 = vshrl.u32 %v251, 16
      %v560 = vrot.slane %v558, 4
      %v561 = vor.u32 %v560, %v556
      %v562 = vrot.slane %v561, 4
      %v564 = vshll.u32 %v272, 16
      %v566 = vrot.slane %v564, 5
      %v567 = vsel %vm279, %v562, %v566
      %v569 = vshrl.u32 %v252, 16
      %v571 = vrot.slane %v569, 4
      %v572 = vshll.u32 %v252, 16
      %v574 = vrot.slane %v572, 5
      %v575 = vor.u32 %v571, %v574
      %v576 = vrot.slane %v575, 4
      %v578 = vshll.u32 %v253, 16
      %v580 = vrot.slane %v578, 5
      %v581 = vsel %vm279, %v576, %v580
      %v582 = vshrl.u32 %v253, 16
      %v584 = vrot.slane %v582, 4
      %v585 = vor.u32 %v584, %v580
      %v586 = vrot.slane %v585, 4
      %v588 = vshll.u32 %v273, 16
      %v590 = vrot.slane %v588, 5
      %v591 = vsel %vm279, %v586, %v590
      %v593 = vshrl.u32 %v254, 16
      %v595 = vrot.slane %v593, 4
      %v596 = vshll.u32 %v254, 16
      %v598 = vrot.slane %v596, 5
      %v599 = vor.u32 %v595, %v598
      %v600 = vrot.slane %v599, 4
      %v602 = vshll.u32 %v255, 16
      %v604 = vrot.slane %v602, 5
      %v605 = vsel %vm279, %v600, %v604
      %v606 = vshrl.u32 %v255, 16
      %v608 = vrot.slane %v606, 4
      %v609 = vor.u32 %v608, %v604
      %v610 = vrot.slane %v609, 4
      %v612 = vshll.u32 %v274, 16
      %v614 = vrot.slane %v612, 5
      %v615 = vsel %vm279, %v610, %v614
      %v617 = vshrl.u32 %v256, 16
      %v619 = vrot.slane %v617, 4
      %v620 = vshll.u32 %v256, 16
      %v622 = vrot.slane %v620, 5
      %v623 = vor.u32 %v619, %v622
      %v624 = vrot.slane %v623, 4
      %v626 = vshll.u32 %v257, 16
      %v628 = vrot.slane %v626, 5
      %v629 = vsel %vm279, %v624, %v628
      %v630 = vshrl.u32 %v257, 16
      %v632 = vrot.slane %v630, 4
      %v633 = vor.u32 %v632, %v628
      %v634 = vrot.slane %v633, 4
      %v636 = vshll.u32 %v275, 16
      %v638 = vrot.slane %v636, 5
      %v639 = vsel %vm279, %v634, %v638
      %v641 = vshrl.u32 %v258, 16
      %v643 = vrot.slane %v641, 4
      %v644 = vshll.u32 %v258, 16
      %v646 = vrot.slane %v644, 5
      %v647 = vor.u32 %v643, %v646
      %v648 = vrot.slane %v647, 4
      %v650 = vshll.u32 %v259, 16
      %v652 = vrot.slane %v650, 5
      %v653 = vsel %vm279, %v648, %v652
      %v654 = vshrl.u32 %v259, 16
      %v656 = vrot.slane %v654, 4
      %v657 = vor.u32 %v656, %v652
      %v658 = vrot.slane %v657, 4
      %v660 = vshll.u32 %v276, 16
      %v662 = vrot.slane %v660, 5
      %v663 = vsel %vm279, %v658, %v662
      %s664 = scalar_lea.vmem %s1, 2
      %v665 = vld [vmem:[%s664] sm:$0x3]
      %v666 = vunpack.c.l.b16 %v293
      %v667 = vunpack.c.l.b16 %v303
      %v668 = vunpack.c.l.b16 %v317
      %v669 = vunpack.c.l.b16 %v327
      %v670 = vunpack.c.l.b16 %v341
      %v671 = vunpack.c.l.b16 %v351
      %v672 = vunpack.c.l.b16 %v365
      %v673 = vunpack.c.l.b16 %v375
      %v674 = vunpack.c.l.b16 %v389
      %v675 = vunpack.c.l.b16 %v399
      %v676 = vunpack.c.l.b16 %v413
      %v677 = vunpack.c.l.b16 %v423
      %v678 = vunpack.c.l.b16 %v437
      %v679 = vunpack.c.l.b16 %v447
      %v680 = vunpack.c.l.b16 %v461
      %v681 = vunpack.c.l.b16 %v471
      %v682 = vunpack.c.l.b16 %v485
      %v683 = vunpack.c.l.b16 %v495
      %v684 = vunpack.c.l.b16 %v509
      %v685 = vunpack.c.l.b16 %v519
      %v686 = vunpack.c.l.b16 %v533
      %v687 = vunpack.c.l.b16 %v543
      %v688 = vunpack.c.l.b16 %v557
      %v689 = vunpack.c.l.b16 %v567
      %v690 = vunpack.c.l.b16 %v581
      %v691 = vunpack.c.l.b16 %v591
      %v692 = vunpack.c.l.b16 %v605
      %v693 = vunpack.c.l.b16 %v615
      %v694 = vunpack.c.l.b16 %v629
      %v695 = vunpack.c.l.b16 %v639
      %v696 = vunpack.c.l.b16 %v653
      %v697 = vunpack.c.l.b16 %v663
      %v698 = vpack.c.b16 %v667, %v666
      %v699 = vpack.c.b16 %v669, %v668
      %v700 = vpack.c.b16 %v671, %v670
      %v701 = vpack.c.b16 %v673, %v672
      %v702 = vpack.c.b16 %v675, %v674
      %v703 = vpack.c.b16 %v677, %v676
      %v704 = vpack.c.b16 %v679, %v678
      %v705 = vpack.c.b16 %v681, %v680
      %v706 = vpack.c.b16 %v683, %v682
      %v707 = vpack.c.b16 %v685, %v684
      %v708 = vpack.c.b16 %v687, %v686
      %v709 = vpack.c.b16 %v689, %v688
      %v710 = vpack.c.b16 %v691, %v690
      %v711 = vpack.c.b16 %v693, %v692
      %v712 = vpack.c.b16 %v695, %v694
      %v713 = vpack.c.b16 %v697, %v696
      %vm714 = vcmask 31744
      %v716 = vsel %vm714, %v698, 0
      %v719 = vsel %vm714, %v699, 0
      %v722 = vsel %vm714, %v700, 0
      %v725 = vsel %vm714, %v701, 0
      %v728 = vsel %vm714, %v702, 0
      %v731 = vsel %vm714, %v703, 0
      %v734 = vsel %vm714, %v704, 0
      %v737 = vsel %vm714, %v705, 0
      %v740 = vsel %vm714, %v706, 0
      %v743 = vsel %vm714, %v707, 0
      %v746 = vsel %vm714, %v708, 0
      %v749 = vsel %vm714, %v709, 0
      %v752 = vsel %vm714, %v710, 0
      %v755 = vsel %vm714, %v711, 0
      %v758 = vsel %vm714, %v712, 0
      %v761 = vsel %vm714, %v713, 0
      %vm763 = vcmask 1041408
      %v765 = vsel %vm763, %v665, 0
      %767 = vmatprep.subr.bf16.mxu0 0
      %768 = vmatpush1.bf16.msra.mxu0 %v765
      %769 = vmatprep.subr.bf16.mxu0 0
      %770 = vmatpush1.bf16.msra.mxu0 0
      %771 = vmatprep.subr.bf16.mxu0 0
      %772 = vmatpush1.bf16.msra.mxu0 0
      %773 = vmatprep.subr.bf16.mxu0 0
      %774 = vmatpush1.bf16.msra.mxu0 0
      %775 = vmatprep.subr.bf16.mxu0 0
      %776 = vmatpush1.bf16.msra.mxu0 0
      %777 = vmatprep.subr.bf16.mxu0 0
      %778 = vmatpush1.bf16.msra.mxu0 0
      %779 = vmatprep.subr.bf16.mxu0 0
      %780 = vmatpush1.bf16.msra.mxu0 0
      %781 = vmatprep.subr.bf16.mxu0 0
      %782 = vmatpush1.bf16.msra.mxu0 0
      %783 = vmatprep.subr.bf16.mxu0 0
      %784 = vmatpush1.bf16.msra.mxu0 0
      %785 = vmatprep.subr.bf16.mxu0 0
      %786 = vmatpush1.bf16.msra.mxu0 0
      %787 = vmatprep.subr.bf16.mxu0 0
      %788 = vmatpush1.bf16.msra.mxu0 0
      %789 = vmatprep.subr.bf16.mxu0 0
      %790 = vmatpush1.bf16.msra.mxu0 0
      %791 = vmatprep.subr.bf16.mxu0 0
      %792 = vmatpush1.bf16.msra.mxu0 0
      %793 = vmatprep.subr.bf16.mxu0 0
      %794 = vmatpush1.bf16.msra.mxu0 0
      %795 = vmatprep.subr.bf16.mxu0 0
      %796 = vmatpush1.bf16.msra.mxu0 0
      %797 = vmatprep.subr.bf16.mxu0 0
      %798 = vmatpush1.bf16.msra.mxu0 0
      %799 = vmatprep.mubr.bf16.mxu0 0
      %800 = vmatmul.mubr.bf16.gmra.mrb[0].mxu0 %v716
      %v801 = vpop.f32.mrb[0].mxu0
      %v802 = vadd.f32 0.0, %v801
      %v803 = vpop.f32.mrb[0].mxu0
      %v804 = vpop.f32.mrb[0].mxu0
      %v805 = vadd.f32 0.0, %v804
      %v806 = vpop.f32.mrb[0].mxu0
      %807 = vmatprep.mubr.bf16.mxu0 0
      %808 = vmatmul.mubr.bf16.gmra.mrb[0].mxu0 %v719
      %v809 = vpop.f32.mrb[0].mxu0
      %v810 = vadd.f32 0.0, %v809
      %v811 = vpop.f32.mrb[0].mxu0
      %v812 = vpop.f32.mrb[0].mxu0
      %v813 = vadd.f32 0.0, %v812
      %v814 = vpop.f32.mrb[0].mxu0
      %815 = vmatprep.mubr.bf16.mxu0 0
      %816 = vmatmul.mubr.bf16.gmra.mrb[0].mxu0 %v722
      %v817 = vpop.f32.mrb[0].mxu0
      %v818 = vadd.f32 0.0, %v817
      %v819 = vpop.f32.mrb[0].mxu0
      %v820 = vpop.f32.mrb[0].mxu0
      %v821 = vadd.f32 0.0, %v820
      %v822 = vpop.f32.mrb[0].mxu0
      %823 = vmatprep.mubr.bf16.mxu0 0
      %824 = vmatmul.mubr.bf16.gmra.mrb[0].mxu0 %v725
      %v825 = vpop.f32.mrb[0].mxu0
      %v826 = vadd.f32 0.0, %v825
      %v827 = vpop.f32.mrb[0].mxu0
      %v828 = vpop.f32.mrb[0].mxu0
      %v829 = vadd.f32 0.0, %v828
      %v830 = vpop.f32.mrb[0].mxu0
      %831 = vmatprep.mubr.bf16.mxu0 0
      %832 = vmatmul.mubr.bf16.gmra.mrb[0].mxu0 %v728
      %v833 = vpop.f32.mrb[0].mxu0
      %v834 = vadd.f32 0.0, %v833
      %v835 = vpop.f32.mrb[0].mxu0
      %v836 = vpop.f32.mrb[0].mxu0
      %v837 = vadd.f32 0.0, %v836
      %v838 = vpop.f32.mrb[0].mxu0
      %839 = vmatprep.mubr.bf16.mxu0 0
      %840 = vmatmul.mubr.bf16.gmra.mrb[0].mxu0 %v731
      %v841 = vpop.f32.mrb[0].mxu0
      %v842 = vadd.f32 0.0, %v841
      %v843 = vpop.f32.mrb[0].mxu0
      %v844 = vpop.f32.mrb[0].mxu0
      %v845 = vadd.f32 0.0, %v844
      %v846 = vpop.f32.mrb[0].mxu0
      %847 = vmatprep.mubr.bf16.mxu0 0
      %848 = vmatmul.mubr.bf16.gmra.mrb[0].mxu0 %v734
      %v849 = vpop.f32.mrb[0].mxu0
      %v850 = vadd.f32 0.0, %v849
      %v851 = vpop.f32.mrb[0].mxu0
      %v852 = vpop.f32.mrb[0].mxu0
      %v853 = vadd.f32 0.0, %v852
      %v854 = vpop.f32.mrb[0].mxu0
      %855 = vmatprep.mubr.bf16.mxu0 0
      %856 = vmatmul.mubr.bf16.gmra.mrb[0].mxu0 %v737
      %v857 = vpop.f32.mrb[0].mxu0
      %v858 = vadd.f32 0.0, %v857
      %v859 = vpop.f32.mrb[0].mxu0
      %v860 = vpop.f32.mrb[0].mxu0
      %v861 = vadd.f32 0.0, %v860
      %v862 = vpop.f32.mrb[0].mxu0
      %863 = vmatprep.mubr.bf16.mxu0 0
      %864 = vmatmul.mubr.bf16.gmra.mrb[0].mxu0 %v740
      %v865 = vpop.f32.mrb[0].mxu0
      %v866 = vadd.f32 0.0, %v865
      %v867 = vpop.f32.mrb[0].mxu0
      %v868 = vpop.f32.mrb[0].mxu0
      %v869 = vadd.f32 0.0, %v868
      %v870 = vpop.f32.mrb[0].mxu0
      %871 = vmatprep.mubr.bf16.mxu0 0
      %872 = vmatmul.mubr.bf16.gmra.mrb[0].mxu0 %v743
      %v873 = vpop.f32.mrb[0].mxu0
      %v874 = vadd.f32 0.0, %v873
      %v875 = vpop.f32.mrb[0].mxu0
      %v876 = vpop.f32.mrb[0].mxu0
      %v877 = vadd.f32 0.0, %v876
      %v878 = vpop.f32.mrb[0].mxu0
      %879 = vmatprep.mubr.bf16.mxu0 0
      %880 = vmatmul.mubr.bf16.gmra.mrb[0].mxu0 %v746
      %v881 = vpop.f32.mrb[0].mxu0
      %v882 = vadd.f32 0.0, %v881
      %v883 = vpop.f32.mrb[0].mxu0
      %v884 = vpop.f32.mrb[0].mxu0
      %v885 = vadd.f32 0.0, %v884
      %v886 = vpop.f32.mrb[0].mxu0
      %887 = vmatprep.mubr.bf16.mxu0 0
      %888 = vmatmul.mubr.bf16.gmra.mrb[0].mxu0 %v749
      %v889 = vpop.f32.mrb[0].mxu0
      %v890 = vadd.f32 0.0, %v889
      %v891 = vpop.f32.mrb[0].mxu0
      %v892 = vpop.f32.mrb[0].mxu0
      %v893 = vadd.f32 0.0, %v892
      %v894 = vpop.f32.mrb[0].mxu0
      %895 = vmatprep.mubr.bf16.mxu0 0
      %896 = vmatmul.mubr.bf16.gmra.mrb[0].mxu0 %v752
      %v897 = vpop.f32.mrb[0].mxu0
      %v898 = vadd.f32 0.0, %v897
      %v899 = vpop.f32.mrb[0].mxu0
      %v900 = vpop.f32.mrb[0].mxu0
      %v901 = vadd.f32 0.0, %v900
      %v902 = vpop.f32.mrb[0].mxu0
      %903 = vmatprep.mubr.bf16.mxu0 0
      %904 = vmatmul.mubr.bf16.gmra.mrb[0].mxu0 %v755
      %v905 = vpop.f32.mrb[0].mxu0
      %v906 = vadd.f32 0.0, %v905
      %v907 = vpop.f32.mrb[0].mxu0
      %v908 = vpop.f32.mrb[0].mxu0
      %v909 = vadd.f32 0.0, %v908
      %v910 = vpop.f32.mrb[0].mxu0
      %911 = vmatprep.mubr.bf16.mxu0 0
      %912 = vmatmul.mubr.bf16.gmra.mrb[0].mxu0 %v758
      %v913 = vpop.f32.mrb[0].mxu0
      %v914 = vadd.f32 0.0, %v913
      %v915 = vpop.f32.mrb[0].mxu0
      %v916 = vpop.f32.mrb[0].mxu0
      %v917 = vadd.f32 0.0, %v916
      %v918 = vpop.f32.mrb[0].mxu0
      %919 = vmatprep.mubr.bf16.mxu0 0
      %920 = vmatmul.mubr.bf16.gmra.mrb[0].mxu0 %v761
      %v921 = vpop.f32.mrb[0].mxu0
      %v922 = vadd.f32 0.0, %v921
      %v923 = vpop.f32.mrb[0].mxu0
      %v924 = vpop.f32.mrb[0].mxu0
      %v925 = vadd.f32 0.0, %v924
      %v926 = vpop.f32.mrb[0].mxu0
      %927 = vdwg.mxu0
      %v960 = vunpack.c.l.b16 %v228
      %v961 = vunpack.c.l.b16 %v229
      %v962 = vunpack.c.l.b16 %v230
      %v963 = vunpack.c.l.b16 %v231
      %v964 = vunpack.c.l.b16 %v232
      %v965 = vunpack.c.l.b16 %v233
      %v966 = vunpack.c.l.b16 %v234
      %v967 = vunpack.c.l.b16 %v235
      %v968 = vunpack.c.l.b16 %v236
      %v969 = vunpack.c.l.b16 %v237
      %v970 = vunpack.c.l.b16 %v238
      %v971 = vunpack.c.l.b16 %v239
      %v972 = vunpack.c.l.b16 %v240
      %v973 = vunpack.c.l.b16 %v241
      %v974 = vunpack.c.l.b16 %v242
      %v975 = vunpack.c.l.b16 %v243
      %v976 = vunpack.c.l.b16 %v244
      %v977 = vunpack.c.l.b16 %v245
      %v978 = vunpack.c.l.b16 %v246
      %v979 = vunpack.c.l.b16 %v247
      %v980 = vunpack.c.l.b16 %v248
      %v981 = vunpack.c.l.b16 %v249
      %v982 = vunpack.c.l.b16 %v250
      %v983 = vunpack.c.l.b16 %v251
      %v984 = vunpack.c.l.b16 %v252
      %v985 = vunpack.c.l.b16 %v253
      %v986 = vunpack.c.l.b16 %v254
      %v987 = vunpack.c.l.b16 %v255
      %v988 = vunpack.c.l.b16 %v256
      %v989 = vunpack.c.l.b16 %v257
      %v990 = vunpack.c.l.b16 %v258
      %v991 = vunpack.c.l.b16 %v259
      %v992 = vpack.c.b16 %v961, %v960
      %v993 = vpack.c.b16 %v963, %v962
      %v994 = vpack.c.b16 %v965, %v964
      %v995 = vpack.c.b16 %v967, %v966
      %v996 = vpack.c.b16 %v969, %v968
      %v997 = vpack.c.b16 %v971, %v970
      %v998 = vpack.c.b16 %v973, %v972
      %v999 = vpack.c.b16 %v975, %v974
      %v1000 = vpack.c.b16 %v977, %v976
      %v1001 = vpack.c.b16 %v979, %v978
      %v1002 = vpack.c.b16 %v981, %v980
      %v1003 = vpack.c.b16 %v983, %v982
      %v1004 = vpack.c.b16 %v985, %v984
      %v1005 = vpack.c.b16 %v987, %v986
      %v1006 = vpack.c.b16 %v989, %v988
      %v1007 = vpack.c.b16 %v991, %v990
      %v1009 = vsel %vm714, %v992, 0
      %v1012 = vsel %vm714, %v993, 0
      %v1015 = vsel %vm714, %v994, 0
      %v1018 = vsel %vm714, %v995, 0
      %v1021 = vsel %vm714, %v996, 0
      %v1024 = vsel %vm714, %v997, 0
      %v1027 = vsel %vm714, %v998, 0
      %v1030 = vsel %vm714, %v999, 0
      %v1033 = vsel %vm714, %v1000, 0
      %v1036 = vsel %vm714, %v1001, 0
      %v1039 = vsel %vm714, %v1002, 0
      %v1042 = vsel %vm714, %v1003, 0
      %v1045 = vsel %vm714, %v1004, 0
      %v1048 = vsel %vm714, %v1005, 0
      %v1051 = vsel %vm714, %v1006, 0
      %v1054 = vsel %vm714, %v1007, 0
      %v1057 = vsel %vm763, %v260, 0
      %1059 = vmatprep.subr.bf16.mxu0 0
      %1060 = vmatpush1.bf16.msra.mxu0 %v1057
      %1061 = vmatprep.subr.bf16.mxu0 0
      %1062 = vmatpush1.bf16.msra.mxu0 0
      %1063 = vmatprep.subr.bf16.mxu0 0
      %1064 = vmatpush1.bf16.msra.mxu0 0
      %1065 = vmatprep.subr.bf16.mxu0 0
      %1066 = vmatpush1.bf16.msra.mxu0 0
      %1067 = vmatprep.subr.bf16.mxu0 0
      %1068 = vmatpush1.bf16.msra.mxu0 0
      %1069 = vmatprep.subr.bf16.mxu0 0
      %1070 = vmatpush1.bf16.msra.mxu0 0
      %1071 = vmatprep.subr.bf16.mxu0 0
      %1072 = vmatpush1.bf16.msra.mxu0 0
      %1073 = vmatprep.subr.bf16.mxu0 0
      %1074 = vmatpush1.bf16.msra.mxu0 0
      %1075 = vmatprep.subr.bf16.mxu0 0
      %1076 = vmatpush1.bf16.msra.mxu0 0
      %1077 = vmatprep.subr.bf16.mxu0 0
      %1078 = vmatpush1.bf16.msra.mxu0 0
      %1079 = vmatprep.subr.bf16.mxu0 0
      %1080 = vmatpush1.bf16.msra.mxu0 0
      %1081 = vmatprep.subr.bf16.mxu0 0
      %1082 = vmatpush1.bf16.msra.mxu0 0
      %1083 = vmatprep.subr.bf16.mxu0 0
      %1084 = vmatpush1.bf16.msra.mxu0 0
      %1085 = vmatprep.subr.bf16.mxu0 0
      %1086 = vmatpush1.bf16.msra.mxu0 0
      %1087 = vmatprep.subr.bf16.mxu0 0
      %1088 = vmatpush1.bf16.msra.mxu0 0
      %1089 = vmatprep.subr.bf16.mxu0 0
      %1090 = vmatpush1.bf16.msra.mxu0 0
      %1091 = vmatprep.mubr.bf16.mxu0 0
      %1092 = vmatmul.mubr.bf16.gmra.mrb[0].mxu0 %v1009
      %v1093 = vpop.f32.mrb[0].mxu0
      %v1094 = vadd.f32 %v802, %v1093
      %v1095 = vpop.f32.mrb[0].mxu0
      %v1096 = vpop.f32.mrb[0].mxu0
      %v1097 = vadd.f32 %v805, %v1096
      %v1098 = vpop.f32.mrb[0].mxu0
      %1099 = vmatprep.mubr.bf16.mxu0 0
      %1100 = vmatmul.mubr.bf16.gmra.mrb[0].mxu0 %v1012
      %v1101 = vpop.f32.mrb[0].mxu0
      %v1102 = vadd.f32 %v810, %v1101
      %v1103 = vpop.f32.mrb[0].mxu0
      %v1104 = vpop.f32.mrb[0].mxu0
      %v1105 = vadd.f32 %v813, %v1104
      %v1106 = vpop.f32.mrb[0].mxu0
      %1107 = vmatprep.mubr.bf16.mxu0 0
      %1108 = vmatmul.mubr.bf16.gmra.mrb[0].mxu0 %v1015
      %v1109 = vpop.f32.mrb[0].mxu0
      %v1110 = vadd.f32 %v818, %v1109
      %v1111 = vpop.f32.mrb[0].mxu0
      %v1112 = vpop.f32.mrb[0].mxu0
      %v1113 = vadd.f32 %v821, %v1112
      %v1114 = vpop.f32.mrb[0].mxu0
      %1115 = vmatprep.mubr.bf16.mxu0 0
      %1116 = vmatmul.mubr.bf16.gmra.mrb[0].mxu0 %v1018
      %v1117 = vpop.f32.mrb[0].mxu0
      %v1118 = vadd.f32 %v826, %v1117
      %v1119 = vpop.f32.mrb[0].mxu0
      %v1120 = vpop.f32.mrb[0].mxu0
      %v1121 = vadd.f32 %v829, %v1120
      %v1122 = vpop.f32.mrb[0].mxu0
      %1123 = vmatprep.mubr.bf16.mxu0 0
      %1124 = vmatmul.mubr.bf16.gmra.mrb[0].mxu0 %v1021
      %v1125 = vpop.f32.mrb[0].mxu0
      %v1126 = vadd.f32 %v834, %v1125
      %v1127 = vpop.f32.mrb[0].mxu0
      %v1128 = vpop.f32.mrb[0].mxu0
      %v1129 = vadd.f32 %v837, %v1128
      %v1130 = vpop.f32.mrb[0].mxu0
      %1131 = vmatprep.mubr.bf16.mxu0 0
      %1132 = vmatmul.mubr.bf16.gmra.mrb[0].mxu0 %v1024
      %v1133 = vpop.f32.mrb[0].mxu0
      %v1134 = vadd.f32 %v842, %v1133
      %v1135 = vpop.f32.mrb[0].mxu0
      %v1136 = vpop.f32.mrb[0].mxu0
      %v1137 = vadd.f32 %v845, %v1136
      %v1138 = vpop.f32.mrb[0].mxu0
      %1139 = vmatprep.mubr.bf16.mxu0 0
      %1140 = vmatmul.mubr.bf16.gmra.mrb[0].mxu0 %v1027
      %v1141 = vpop.f32.mrb[0].mxu0
      %v1142 = vadd.f32 %v850, %v1141
      %v1143 = vpop.f32.mrb[0].mxu0
      %v1144 = vpop.f32.mrb[0].mxu0
      %v1145 = vadd.f32 %v853, %v1144
      %v1146 = vpop.f32.mrb[0].mxu0
      %1147 = vmatprep.mubr.bf16.mxu0 0
      %1148 = vmatmul.mubr.bf16.gmra.mrb[0].mxu0 %v1030
      %v1149 = vpop.f32.mrb[0].mxu0
      %v1150 = vadd.f32 %v858, %v1149
      %v1151 = vpop.f32.mrb[0].mxu0
      %v1152 = vpop.f32.mrb[0].mxu0
      %v1153 = vadd.f32 %v861, %v1152
      %v1154 = vpop.f32.mrb[0].mxu0
      %1155 = vmatprep.mubr.bf16.mxu0 0
      %1156 = vmatmul.mubr.bf16.gmra.mrb[0].mxu0 %v1033
      %v1157 = vpop.f32.mrb[0].mxu0
      %v1158 = vadd.f32 %v866, %v1157
      %v1159 = vpop.f32.mrb[0].mxu0
      %v1160 = vpop.f32.mrb[0].mxu0
      %v1161 = vadd.f32 %v869, %v1160
      %v1162 = vpop.f32.mrb[0].mxu0
      %1163 = vmatprep.mubr.bf16.mxu0 0
      %1164 = vmatmul.mubr.bf16.gmra.mrb[0].mxu0 %v1036
      %v1165 = vpop.f32.mrb[0].mxu0
      %v1166 = vadd.f32 %v874, %v1165
      %v1167 = vpop.f32.mrb[0].mxu0
      %v1168 = vpop.f32.mrb[0].mxu0
      %v1169 = vadd.f32 %v877, %v1168
      %v1170 = vpop.f32.mrb[0].mxu0
      %1171 = vmatprep.mubr.bf16.mxu0 0
      %1172 = vmatmul.mubr.bf16.gmra.mrb[0].mxu0 %v1039
      %v1173 = vpop.f32.mrb[0].mxu0
      %v1174 = vadd.f32 %v882, %v1173
      %v1175 = vpop.f32.mrb[0].mxu0
      %v1176 = vpop.f32.mrb[0].mxu0
      %v1177 = vadd.f32 %v885, %v1176
      %v1178 = vpop.f32.mrb[0].mxu0
      %1179 = vmatprep.mubr.bf16.mxu0 0
      %1180 = vmatmul.mubr.bf16.gmra.mrb[0].mxu0 %v1042
      %v1181 = vpop.f32.mrb[0].mxu0
      %v1182 = vadd.f32 %v890, %v1181
      %v1183 = vpop.f32.mrb[0].mxu0
      %v1184 = vpop.f32.mrb[0].mxu0
      %v1185 = vadd.f32 %v893, %v1184
      %v1186 = vpop.f32.mrb[0].mxu0
      %1187 = vmatprep.mubr.bf16.mxu0 0
      %1188 = vmatmul.mubr.bf16.gmra.mrb[0].mxu0 %v1045
      %v1189 = vpop.f32.mrb[0].mxu0
      %v1190 = vadd.f32 %v898, %v1189
      %v1191 = vpop.f32.mrb[0].mxu0
      %v1192 = vpop.f32.mrb[0].mxu0
      %v1193 = vadd.f32 %v901, %v1192
      %v1194 = vpop.f32.mrb[0].mxu0
      %1195 = vmatprep.mubr.bf16.mxu0 0
      %1196 = vmatmul.mubr.bf16.gmra.mrb[0].mxu0 %v1048
      %v1197 = vpop.f32.mrb[0].mxu0
      %v1198 = vadd.f32 %v906, %v1197
      %v1199 = vpop.f32.mrb[0].mxu0
      %v1200 = vpop.f32.mrb[0].mxu0
      %v1201 = vadd.f32 %v909, %v1200
      %v1202 = vpop.f32.mrb[0].mxu0
      %1203 = vmatprep.mubr.bf16.mxu0 0
      %1204 = vmatmul.mubr.bf16.gmra.mrb[0].mxu0 %v1051
      %v1205 = vpop.f32.mrb[0].mxu0
      %v1206 = vadd.f32 %v914, %v1205
      %v1207 = vpop.f32.mrb[0].mxu0
      %v1208 = vpop.f32.mrb[0].mxu0
      %v1209 = vadd.f32 %v917, %v1208
      %v1210 = vpop.f32.mrb[0].mxu0
      %1211 = vmatprep.mubr.bf16.mxu0 0
      %1212 = vmatmul.mubr.bf16.gmra.mrb[0].mxu0 %v1054
      %v1213 = vpop.f32.mrb[0].mxu0
      %v1214 = vadd.f32 %v922, %v1213
      %v1215 = vpop.f32.mrb[0].mxu0
      %v1216 = vpop.f32.mrb[0].mxu0
      %v1217 = vadd.f32 %v925, %v1216
      %v1218 = vpop.f32.mrb[0].mxu0
      %1219 = vdwg.mxu0
      %v1220 = vld [vmem:[%s227] sm:$0xe]
      %v1221 = vld [vmem:[%s227 + $0xc] sm:$0xe]
      %v1222 = vld [vmem:[%s227 + $0x18] sm:$0xe]
      %v1223 = vld [vmem:[%s227 + $0x24] sm:$0xe]
      %v1224 = vld [vmem:[%s227 + $0x30] sm:$0xe]
      %v1225 = vld [vmem:[%s227 + $0x3c] sm:$0xe]
      %v1226 = vld [vmem:[%s227 + $0x48] sm:$0xe]
      %v1227 = vld [vmem:[%s227 + $0x54] sm:$0xe]
      %v1228 = vld [vmem:[%s227 + $0x60] sm:$0xe]
      %v1229 = vld [vmem:[%s227 + $0x6c] sm:$0xe]
      %v1230 = vld [vmem:[%s227 + $0x78] sm:$0xe]
      %v1231 = vld [vmem:[%s227 + $0x84] sm:$0xe]
      %v1232 = vld [vmem:[%s227 + $0x90] sm:$0xe]
      %v1233 = vld [vmem:[%s227 + $0x9c] sm:$0xe]
      %v1234 = vld [vmem:[%s227 + $0xa8] sm:$0xe]
      %v1235 = vld [vmem:[%s227 + $0xb4] sm:$0xe]
      %vm1268 = vcmask 1042432
      %vm1269 = vcmask 1046532
      %vm1270 = vmor %vm1268, %vm1269
      %v1271 = vrot.slane %v1220, 5
      %v1272 = vrot.slane %v1271, 4
      %v1273 = vrot.slane %v229, 5
      %v1274 = vsel %vm1270, %v1272, %v1273
      %v1275 = vrot.slane %v1273, 4
      %v1276 = vrot.slane %v261, 5
      %v1277 = vsel %vm1270, %v1275, %v1276
      %v1278 = vrot.slane %v1221, 5
      %v1279 = vrot.slane %v1278, 4
      %v1280 = vrot.slane %v231, 5
      %v1281 = vsel %vm1270, %v1279, %v1280
      %v1282 = vrot.slane %v1280, 4
      %v1283 = vrot.slane %v262, 5
      %v1284 = vsel %vm1270, %v1282, %v1283
      %v1285 = vrot.slane %v1222, 5
      %v1286 = vrot.slane %v1285, 4
      %v1287 = vrot.slane %v233, 5
      %v1288 = vsel %vm1270, %v1286, %v1287
      %v1289 = vrot.slane %v1287, 4
      %v1290 = vrot.slane %v263, 5
      %v1291 = vsel %vm1270, %v1289, %v1290
      %v1292 = vrot.slane %v1223, 5
      %v1293 = vrot.slane %v1292, 4
      %v1294 = vrot.slane %v235, 5
      %v1295 = vsel %vm1270, %v1293, %v1294
      %v1296 = vrot.slane %v1294, 4
      %v1297 = vrot.slane %v264, 5
      %v1298 = vsel %vm1270, %v1296, %v1297
      %v1299 = vrot.slane %v1224, 5
      %v1300 = vrot.slane %v1299, 4
      %v1301 = vrot.slane %v237, 5
      %v1302 = vsel %vm1270, %v1300, %v1301
      %v1303 = vrot.slane %v1301, 4
      %v1304 = vrot.slane %v265, 5
      %v1305 = vsel %vm1270, %v1303, %v1304
      %v1306 = vrot.slane %v1225, 5
      %v1307 = vrot.slane %v1306, 4
      %v1308 = vrot.slane %v239, 5
      %v1309 = vsel %vm1270, %v1307, %v1308
      %v1310 = vrot.slane %v1308, 4
      %v1311 = vrot.slane %v266, 5
      %v1312 = vsel %vm1270, %v1310, %v1311
      %v1313 = vrot.slane %v1226, 5
      %v1314 = vrot.slane %v1313, 4
      %v1315 = vrot.slane %v241, 5
      %v1316 = vsel %vm1270, %v1314, %v1315
      %v1317 = vrot.slane %v1315, 4
      %v1318 = vrot.slane %v267, 5
      %v1319 = vsel %vm1270, %v1317, %v1318
      %v1320 = vrot.slane %v1227, 5
      %v1321 = vrot.slane %v1320, 4
      %v1322 = vrot.slane %v243, 5
      %v1323 = vsel %vm1270, %v1321, %v1322
      %v1324 = vrot.slane %v1322, 4
      %v1325 = vrot.slane %v268, 5
      %v1326 = vsel %vm1270, %v1324, %v1325
      %v1327 = vrot.slane %v1228, 5
      %v1328 = vrot.slane %v1327, 4
      %v1329 = vrot.slane %v245, 5
      %v1330 = vsel %vm1270, %v1328, %v1329
      %v1331 = vrot.slane %v1329, 4
      %v1332 = vrot.slane %v269, 5
      %v1333 = vsel %vm1270, %v1331, %v1332
      %v1334 = vrot.slane %v1229, 5
      %v1335 = vrot.slane %v1334, 4
      %v1336 = vrot.slane %v247, 5
      %v1337 = vsel %vm1270, %v1335, %v1336
      %v1338 = vrot.slane %v1336, 4
      %v1339 = vrot.slane %v270, 5
      %v1340 = vsel %vm1270, %v1338, %v1339
      %v1341 = vrot.slane %v1230, 5
      %v1342 = vrot.slane %v1341, 4
      %v1343 = vrot.slane %v249, 5
      %v1344 = vsel %vm1270, %v1342, %v1343
      %v1345 = vrot.slane %v1343, 4
      %v1346 = vrot.slane %v271, 5
      %v1347 = vsel %vm1270, %v1345, %v1346
      %v1348 = vrot.slane %v1231, 5
      %v1349 = vrot.slane %v1348, 4
      %v1350 = vrot.slane %v251, 5
      %v1351 = vsel %vm1270, %v1349, %v1350
      %v1352 = vrot.slane %v1350, 4
      %v1353 = vrot.slane %v272, 5
      %v1354 = vsel %vm1270, %v1352, %v1353
      %v1355 = vrot.slane %v1232, 5
      %v1356 = vrot.slane %v1355, 4
      %v1357 = vrot.slane %v253, 5
      %v1358 = vsel %vm1270, %v1356, %v1357
      %v1359 = vrot.slane %v1357, 4
      %v1360 = vrot.slane %v273, 5
      %v1361 = vsel %vm1270, %v1359, %v1360
      %v1362 = vrot.slane %v1233, 5
      %v1363 = vrot.slane %v1362, 4
      %v1364 = vrot.slane %v255, 5
      %v1365 = vsel %vm1270, %v1363, %v1364
      %v1366 = vrot.slane %v1364, 4
      %v1367 = vrot.slane %v274, 5
      %v1368 = vsel %vm1270, %v1366, %v1367
      %v1369 = vrot.slane %v1234, 5
      %v1370 = vrot.slane %v1369, 4
      %v1371 = vrot.slane %v257, 5
      %v1372 = vsel %vm1270, %v1370, %v1371
      %v1373 = vrot.slane %v1371, 4
      %v1374 = vrot.slane %v275, 5
      %v1375 = vsel %vm1270, %v1373, %v1374
      %v1376 = vrot.slane %v1235, 5
      %v1377 = vrot.slane %v1376, 4
      %v1378 = vrot.slane %v259, 5
      %v1379 = vsel %vm1270, %v1377, %v1378
      %v1380 = vrot.slane %v1378, 4
      %v1381 = vrot.slane %v276, 5
      %v1382 = vsel %vm1270, %v1380, %v1381
      %s1383 = scalar_lea.vmem %s1, 4
      %v1384 = vld [vmem:[%s1383] sm:$0x3]
      %v1385 = vunpack.c.l.b16 %v1274
      %v1386 = vunpack.c.l.b16 %v1277
      %v1387 = vunpack.c.l.b16 %v1281
      %v1388 = vunpack.c.l.b16 %v1284
      %v1389 = vunpack.c.l.b16 %v1288
      %v1390 = vunpack.c.l.b16 %v1291
      %v1391 = vunpack.c.l.b16 %v1295
      %v1392 = vunpack.c.l.b16 %v1298
      %v1393 = vunpack.c.l.b16 %v1302
      %v1394 = vunpack.c.l.b16 %v1305
      %v1395 = vunpack.c.l.b16 %v1309
      %v1396 = vunpack.c.l.b16 %v1312
      %v1397 = vunpack.c.l.b16 %v1316
      %v1398 = vunpack.c.l.b16 %v1319
      %v1399 = vunpack.c.l.b16 %v1323
      %v1400 = vunpack.c.l.b16 %v1326
      %v1401 = vunpack.c.l.b16 %v1330
      %v1402 = vunpack.c.l.b16 %v1333
      %v1403 = vunpack.c.l.b16 %v1337
      %v1404 = vunpack.c.l.b16 %v1340
      %v1405 = vunpack.c.l.b16 %v1344
      %v1406 = vunpack.c.l.b16 %v1347
      %v1407 = vunpack.c.l.b16 %v1351
      %v1408 = vunpack.c.l.b16 %v1354
      %v1409 = vunpack.c.l.b16 %v1358
      %v1410 = vunpack.c.l.b16 %v1361
      %v1411 = vunpack.c.l.b16 %v1365
      %v1412 = vunpack.c.l.b16 %v1368
      %v1413 = vunpack.c.l.b16 %v1372
      %v1414 = vunpack.c.l.b16 %v1375
      %v1415 = vunpack.c.l.b16 %v1379
      %v1416 = vunpack.c.l.b16 %v1382
      %v1417 = vpack.c.b16 %v1386, %v1385
      %v1418 = vpack.c.b16 %v1388, %v1387
      %v1419 = vpack.c.b16 %v1390, %v1389
      %v1420 = vpack.c.b16 %v1392, %v1391
      %v1421 = vpack.c.b16 %v1394, %v1393
      %v1422 = vpack.c.b16 %v1396, %v1395
      %v1423 = vpack.c.b16 %v1398, %v1397
      %v1424 = vpack.c.b16 %v1400, %v1399
      %v1425 = vpack.c.b16 %v1402, %v1401
      %v1426 = vpack.c.b16 %v1404, %v1403
      %v1427 = vpack.c.b16 %v1406, %v1405
      %v1428 = vpack.c.b16 %v1408, %v1407
      %v1429 = vpack.c.b16 %v1410, %v1409
      %v1430 = vpack.c.b16 %v1412, %v1411
      %v1431 = vpack.c.b16 %v1414, %v1413
      %v1432 = vpack.c.b16 %v1416, %v1415
      %v1434 = vsel %vm714, %v1417, 0
      %v1437 = vsel %vm714, %v1418, 0
      %v1440 = vsel %vm714, %v1419, 0
      %v1443 = vsel %vm714, %v1420, 0
      %v1446 = vsel %vm714, %v1421, 0
      %v1449 = vsel %vm714, %v1422, 0
      %v1452 = vsel %vm714, %v1423, 0
      %v1455 = vsel %vm714, %v1424, 0
      %v1458 = vsel %vm714, %v1425, 0
      %v1461 = vsel %vm714, %v1426, 0
      %v1464 = vsel %vm714, %v1427, 0
      %v1467 = vsel %vm714, %v1428, 0
      %v1470 = vsel %vm714, %v1429, 0
      %v1473 = vsel %vm714, %v1430, 0
      %v1476 = vsel %vm714, %v1431, 0
      %v1479 = vsel %vm714, %v1432, 0
      %v1482 = vsel %vm763, %v1384, 0
      %1484 = vmatprep.subr.bf16.mxu0 0
      %1485 = vmatpush1.bf16.msra.mxu0 %v1482
      %1486 = vmatprep.subr.bf16.mxu0 0
      %1487 = vmatpush1.bf16.msra.mxu0 0
      %1488 = vmatprep.subr.bf16.mxu0 0
      %1489 = vmatpush1.bf16.msra.mxu0 0
      %1490 = vmatprep.subr.bf16.mxu0 0
      %1491 = vmatpush1.bf16.msra.mxu0 0
      %1492 = vmatprep.subr.bf16.mxu0 0
      %1493 = vmatpush1.bf16.msra.mxu0 0
      %1494 = vmatprep.subr.bf16.mxu0 0
      %1495 = vmatpush1.bf16.msra.mxu0 0
      %1496 = vmatprep.subr.bf16.mxu0 0
      %1497 = vmatpush1.bf16.msra.mxu0 0
      %1498 = vmatprep.subr.bf16.mxu0 0
      %1499 = vmatpush1.bf16.msra.mxu0 0
      %1500 = vmatprep.subr.bf16.mxu0 0
      %1501 = vmatpush1.bf16.msra.mxu0 0
      %1502 = vmatprep.subr.bf16.mxu0 0
      %1503 = vmatpush1.bf16.msra.mxu0 0
      %1504 = vmatprep.subr.bf16.mxu0 0
      %1505 = vmatpush1.bf16.msra.mxu0 0
      %1506 = vmatprep.subr.bf16.mxu0 0
      %1507 = vmatpush1.bf16.msra.mxu0 0
      %1508 = vmatprep.subr.bf16.mxu0 0
      %1509 = vmatpush1.bf16.msra.mxu0 0
      %1510 = vmatprep.subr.bf16.mxu0 0
      %1511 = vmatpush1.bf16.msra.mxu0 0
      %1512 = vmatprep.subr.bf16.mxu0 0
      %1513 = vmatpush1.bf16.msra.mxu0 0
      %1514 = vmatprep.subr.bf16.mxu0 0
      %1515 = vmatpush1.bf16.msra.mxu0 0
      %1516 = vmatprep.mubr.bf16.mxu0 0
      %1517 = vmatmul.mubr.bf16.gmra.mrb[0].mxu0 %v1434
      %v1518 = vpop.f32.mrb[0].mxu0
      %v1519 = vadd.f32 0.0, %v1518
      %v1520 = vpop.f32.mrb[0].mxu0
      %v1521 = vpop.f32.mrb[0].mxu0
      %v1522 = vadd.f32 0.0, %v1521
      %v1523 = vpop.f32.mrb[0].mxu0
      %1524 = vmatprep.mubr.bf16.mxu0 0
      %1525 = vmatmul.mubr.bf16.gmra.mrb[0].mxu0 %v1437
      %v1526 = vpop.f32.mrb[0].mxu0
      %v1527 = vadd.f32 0.0, %v1526
      %v1528 = vpop.f32.mrb[0].mxu0
      %v1529 = vpop.f32.mrb[0].mxu0
      %v1530 = vadd.f32 0.0, %v1529
      %v1531 = vpop.f32.mrb[0].mxu0
      %1532 = vmatprep.mubr.bf16.mxu0 0
      %1533 = vmatmul.mubr.bf16.gmra.mrb[0].mxu0 %v1440
      %v1534 = vpop.f32.mrb[0].mxu0
      %v1535 = vadd.f32 0.0, %v1534
      %v1536 = vpop.f32.mrb[0].mxu0
      %v1537 = vpop.f32.mrb[0].mxu0
      %v1538 = vadd.f32 0.0, %v1537
      %v1539 = vpop.f32.mrb[0].mxu0
      %1540 = vmatprep.mubr.bf16.mxu0 0
      %1541 = vmatmul.mubr.bf16.gmra.mrb[0].mxu0 %v1443
      %v1542 = vpop.f32.mrb[0].mxu0
      %v1543 = vadd.f32 0.0, %v1542
      %v1544 = vpop.f32.mrb[0].mxu0
      %v1545 = vpop.f32.mrb[0].mxu0
      %v1546 = vadd.f32 0.0, %v1545
      %v1547 = vpop.f32.mrb[0].mxu0
      %1548 = vmatprep.mubr.bf16.mxu0 0
      %1549 = vmatmul.mubr.bf16.gmra.mrb[0].mxu0 %v1446
      %v1550 = vpop.f32.mrb[0].mxu0
      %v1551 = vadd.f32 0.0, %v1550
      %v1552 = vpop.f32.mrb[0].mxu0
      %v1553 = vpop.f32.mrb[0].mxu0
      %v1554 = vadd.f32 0.0, %v1553
      %v1555 = vpop.f32.mrb[0].mxu0
      %1556 = vmatprep.mubr.bf16.mxu0 0
      %1557 = vmatmul.mubr.bf16.gmra.mrb[0].mxu0 %v1449
      %v1558 = vpop.f32.mrb[0].mxu0
      %v1559 = vadd.f32 0.0, %v1558
      %v1560 = vpop.f32.mrb[0].mxu0
      %v1561 = vpop.f32.mrb[0].mxu0
      %v1562 = vadd.f32 0.0, %v1561
      %v1563 = vpop.f32.mrb[0].mxu0
      %1564 = vmatprep.mubr.bf16.mxu0 0
      %1565 = vmatmul.mubr.bf16.gmra.mrb[0].mxu0 %v1452
      %v1566 = vpop.f32.mrb[0].mxu0
      %v1567 = vadd.f32 0.0, %v1566
      %v1568 = vpop.f32.mrb[0].mxu0
      %v1569 = vpop.f32.mrb[0].mxu0
      %v1570 = vadd.f32 0.0, %v1569
      %v1571 = vpop.f32.mrb[0].mxu0
      %1572 = vmatprep.mubr.bf16.mxu0 0
      %1573 = vmatmul.mubr.bf16.gmra.mrb[0].mxu0 %v1455
      %v1574 = vpop.f32.mrb[0].mxu0
      %v1575 = vadd.f32 0.0, %v1574
      %v1576 = vpop.f32.mrb[0].mxu0
      %v1577 = vpop.f32.mrb[0].mxu0
      %v1578 = vadd.f32 0.0, %v1577
      %v1579 = vpop.f32.mrb[0].mxu0
      %1580 = vmatprep.mubr.bf16.mxu0 0
      %1581 = vmatmul.mubr.bf16.gmra.mrb[0].mxu0 %v1458
      %v1582 = vpop.f32.mrb[0].mxu0
      %v1583 = vadd.f32 0.0, %v1582
      %v1584 = vpop.f32.mrb[0].mxu0
      %v1585 = vpop.f32.mrb[0].mxu0
      %v1586 = vadd.f32 0.0, %v1585
      %v1587 = vpop.f32.mrb[0].mxu0
      %1588 = vmatprep.mubr.bf16.mxu0 0
      %1589 = vmatmul.mubr.bf16.gmra.mrb[0].mxu0 %v1461
      %v1590 = vpop.f32.mrb[0].mxu0
      %v1591 = vadd.f32 0.0, %v1590
      %v1592 = vpop.f32.mrb[0].mxu0
      %v1593 = vpop.f32.mrb[0].mxu0
      %v1594 = vadd.f32 0.0, %v1593
      %v1595 = vpop.f32.mrb[0].mxu0
      %1596 = vmatprep.mubr.bf16.mxu0 0
      %1597 = vmatmul.mubr.bf16.gmra.mrb[0].mxu0 %v1464
      %v1598 = vpop.f32.mrb[0].mxu0
      %v1599 = vadd.f32 0.0, %v1598
      %v1600 = vpop.f32.mrb[0].mxu0
      %v1601 = vpop.f32.mrb[0].mxu0
      %v1602 = vadd.f32 0.0, %v1601
      %v1603 = vpop.f32.mrb[0].mxu0
      %1604 = vmatprep.mubr.bf16.mxu0 0
      %1605 = vmatmul.mubr.bf16.gmra.mrb[0].mxu0 %v1467
      %v1606 = vpop.f32.mrb[0].mxu0
      %v1607 = vadd.f32 0.0, %v1606
      %v1608 = vpop.f32.mrb[0].mxu0
      %v1609 = vpop.f32.mrb[0].mxu0
      %v1610 = vadd.f32 0.0, %v1609
      %v1611 = vpop.f32.mrb[0].mxu0
      %1612 = vmatprep.mubr.bf16.mxu0 0
      %1613 = vmatmul.mubr.bf16.gmra.mrb[0].mxu0 %v1470
      %v1614 = vpop.f32.mrb[0].mxu0
      %v1615 = vadd.f32 0.0, %v1614
      %v1616 = vpop.f32.mrb[0].mxu0
      %v1617 = vpop.f32.mrb[0].mxu0
      %v1618 = vadd.f32 0.0, %v1617
      %v1619 = vpop.f32.mrb[0].mxu0
      %1620 = vmatprep.mubr.bf16.mxu0 0
      %1621 = vmatmul.mubr.bf16.gmra.mrb[0].mxu0 %v1473
      %v1622 = vpop.f32.mrb[0].mxu0
      %v1623 = vadd.f32 0.0, %v1622
      %v1624 = vpop.f32.mrb[0].mxu0
      %v1625 = vpop.f32.mrb[0].mxu0
      %v1626 = vadd.f32 0.0, %v1625
      %v1627 = vpop.f32.mrb[0].mxu0
      %1628 = vmatprep.mubr.bf16.mxu0 0
      %1629 = vmatmul.mubr.bf16.gmra.mrb[0].mxu0 %v1476
      %v1630 = vpop.f32.mrb[0].mxu0
      %v1631 = vadd.f32 0.0, %v1630
      %v1632 = vpop.f32.mrb[0].mxu0
      %v1633 = vpop.f32.mrb[0].mxu0
      %v1634 = vadd.f32 0.0, %v1633
      %v1635 = vpop.f32.mrb[0].mxu0
      %1636 = vmatprep.mubr.bf16.mxu0 0
      %1637 = vmatmul.mubr.bf16.gmra.mrb[0].mxu0 %v1479
      %v1638 = vpop.f32.mrb[0].mxu0
      %v1639 = vadd.f32 0.0, %v1638
      %v1640 = vpop.f32.mrb[0].mxu0
      %v1641 = vpop.f32.mrb[0].mxu0
      %v1642 = vadd.f32 0.0, %v1641
      %v1643 = vpop.f32.mrb[0].mxu0
      %1644 = vdwg.mxu0
      %v1645 = vadd.f32 %v1094, %v1519
      %v1646 = vadd.f32 %v1097, %v1522
      %v1647 = vadd.f32 %v1102, %v1527
      %v1648 = vadd.f32 %v1105, %v1530
      %v1649 = vadd.f32 %v1110, %v1535
      %v1650 = vadd.f32 %v1113, %v1538
      %v1651 = vadd.f32 %v1118, %v1543
      %v1652 = vadd.f32 %v1121, %v1546
      %v1653 = vadd.f32 %v1126, %v1551
      %v1654 = vadd.f32 %v1129, %v1554
      %v1655 = vadd.f32 %v1134, %v1559
      %v1656 = vadd.f32 %v1137, %v1562
      %v1657 = vadd.f32 %v1142, %v1567
      %v1658 = vadd.f32 %v1145, %v1570
      %v1659 = vadd.f32 %v1150, %v1575
      %v1660 = vadd.f32 %v1153, %v1578
      %v1661 = vadd.f32 %v1158, %v1583
      %v1662 = vadd.f32 %v1161, %v1586
      %v1663 = vadd.f32 %v1166, %v1591
      %v1664 = vadd.f32 %v1169, %v1594
      %v1665 = vadd.f32 %v1174, %v1599
      %v1666 = vadd.f32 %v1177, %v1602
      %v1667 = vadd.f32 %v1182, %v1607
      %v1668 = vadd.f32 %v1185, %v1610
      %v1669 = vadd.f32 %v1190, %v1615
      %v1670 = vadd.f32 %v1193, %v1618
      %v1671 = vadd.f32 %v1198, %v1623
      %v1672 = vadd.f32 %v1201, %v1626
      %v1673 = vadd.f32 %v1206, %v1631
      %v1674 = vadd.f32 %v1209, %v1634
      %v1675 = vadd.f32 %v1214, %v1639
      %v1676 = vadd.f32 %v1217, %v1642
      %s1677 = sadd.s32 %s224, 1
      %s1678 = smul.u32 %s1677, 3
      %s1679 = smul.addr %s1678, 4
      %s1680 = scalar_lea.vmem %s211, %s1679
      %v1681 = vld [vmem:[%s1680] sm:$0xf]
      %v1682 = vld [vmem:[%s1680 + $0x4] sm:$0xf]
      %v1683 = vld [vmem:[%s1680 + $0xc] sm:$0xf]
      %v1684 = vld [vmem:[%s1680 + $0x10] sm:$0xf]
      %v1685 = vld [vmem:[%s1680 + $0x18] sm:$0xf]
      %v1686 = vld [vmem:[%s1680 + $0x1c] sm:$0xf]
      %v1687 = vld [vmem:[%s1680 + $0x24] sm:$0xf]
      %v1688 = vld [vmem:[%s1680 + $0x28] sm:$0xf]
      %v1689 = vld [vmem:[%s1680 + $0x30] sm:$0xf]
      %v1690 = vld [vmem:[%s1680 + $0x34] sm:$0xf]
      %v1691 = vld [vmem:[%s1680 + $0x3c] sm:$0xf]
      %v1692 = vld [vmem:[%s1680 + $0x40] sm:$0xf]
      %v1693 = vld [vmem:[%s1680 + $0x48] sm:$0xf]
      %v1694 = vld [vmem:[%s1680 + $0x4c] sm:$0xf]
      %v1695 = vld [vmem:[%s1680 + $0x54] sm:$0xf]
      %v1696 = vld [vmem:[%s1680 + $0x58] sm:$0xf]
      %v1697 = vld [vmem:[%s1680 + $0x60] sm:$0xf]
      %v1698 = vld [vmem:[%s1680 + $0x64] sm:$0xf]
      %v1699 = vld [vmem:[%s1680 + $0x6c] sm:$0xf]
      %v1700 = vld [vmem:[%s1680 + $0x70] sm:$0xf]
      %v1701 = vld [vmem:[%s1680 + $0x78] sm:$0xf]
      %v1702 = vld [vmem:[%s1680 + $0x7c] sm:$0xf]
      %v1703 = vld [vmem:[%s1680 + $0x84] sm:$0xf]
      %v1704 = vld [vmem:[%s1680 + $0x88] sm:$0xf]
      %v1705 = vld [vmem:[%s1680 + $0x90] sm:$0xf]
      %v1706 = vld [vmem:[%s1680 + $0x94] sm:$0xf]
      %v1707 = vld [vmem:[%s1680 + $0x9c] sm:$0xf]
      %v1708 = vld [vmem:[%s1680 + $0xa0] sm:$0xf]
      %v1709 = vld [vmem:[%s1680 + $0xa8] sm:$0xf]
      %v1710 = vld [vmem:[%s1680 + $0xac] sm:$0xf]
      %v1711 = vld [vmem:[%s1680 + $0xb4] sm:$0xf]
      %v1712 = vld [vmem:[%s1680 + $0xb8] sm:$0xf]
      %s1713 = scalar_lea.vmem %s1, 6
      %v1714 = vld [vmem:[%s1713] sm:$0x3]
      %v1747 = vunpack.c.l.b16 %v1681
      %v1748 = vunpack.c.l.b16 %v1682
      %v1749 = vunpack.c.l.b16 %v1683
      %v1750 = vunpack.c.l.b16 %v1684
      %v1751 = vunpack.c.l.b16 %v1685
      %v1752 = vunpack.c.l.b16 %v1686
      %v1753 = vunpack.c.l.b16 %v1687
      %v1754 = vunpack.c.l.b16 %v1688
      %v1755 = vunpack.c.l.b16 %v1689
      %v1756 = vunpack.c.l.b16 %v1690
      %v1757 = vunpack.c.l.b16 %v1691
      %v1758 = vunpack.c.l.b16 %v1692
      %v1759 = vunpack.c.l.b16 %v1693
      %v1760 = vunpack.c.l.b16 %v1694
      %v1761 = vunpack.c.l.b16 %v1695
      %v1762 = vunpack.c.l.b16 %v1696
      %v1763 = vunpack.c.l.b16 %v1697
      %v1764 = vunpack.c.l.b16 %v1698
      %v1765 = vunpack.c.l.b16 %v1699
      %v1766 = vunpack.c.l.b16 %v1700
      %v1767 = vunpack.c.l.b16 %v1701
      %v1768 = vunpack.c.l.b16 %v1702
      %v1769 = vunpack.c.l.b16 %v1703
      %v1770 = vunpack.c.l.b16 %v1704
      %v1771 = vunpack.c.l.b16 %v1705
      %v1772 = vunpack.c.l.b16 %v1706
      %v1773 = vunpack.c.l.b16 %v1707
      %v1774 = vunpack.c.l.b16 %v1708
      %v1775 = vunpack.c.l.b16 %v1709
      %v1776 = vunpack.c.l.b16 %v1710
      %v1777 = vunpack.c.l.b16 %v1711
      %v1778 = vunpack.c.l.b16 %v1712
      %v1779 = vpack.c.b16 %v1748, %v1747
      %v1780 = vpack.c.b16 %v1750, %v1749
      %v1781 = vpack.c.b16 %v1752, %v1751
      %v1782 = vpack.c.b16 %v1754, %v1753
      %v1783 = vpack.c.b16 %v1756, %v1755
      %v1784 = vpack.c.b16 %v1758, %v1757
      %v1785 = vpack.c.b16 %v1760, %v1759
      %v1786 = vpack.c.b16 %v1762, %v1761
      %v1787 = vpack.c.b16 %v1764, %v1763
      %v1788 = vpack.c.b16 %v1766, %v1765
      %v1789 = vpack.c.b16 %v1768, %v1767
      %v1790 = vpack.c.b16 %v1770, %v1769
      %v1791 = vpack.c.b16 %v1772, %v1771
      %v1792 = vpack.c.b16 %v1774, %v1773
      %v1793 = vpack.c.b16 %v1776, %v1775
      %v1794 = vpack.c.b16 %v1778, %v1777
      %v1796 = vsel %vm714, %v1779, 0
      %v1799 = vsel %vm714, %v1780, 0
      %v1802 = vsel %vm714, %v1781, 0
      %v1805 = vsel %vm714, %v1782, 0
      %v1808 = vsel %vm714, %v1783, 0
      %v1811 = vsel %vm714, %v1784, 0
      %v1814 = vsel %vm714, %v1785, 0
      %v1817 = vsel %vm714, %v1786, 0
      %v1820 = vsel %vm714, %v1787, 0
      %v1823 = vsel %vm714, %v1788, 0
      %v1826 = vsel %vm714, %v1789, 0
      %v1829 = vsel %vm714, %v1790, 0
      %v1832 = vsel %vm714, %v1791, 0
      %v1835 = vsel %vm714, %v1792, 0
      %v1838 = vsel %vm714, %v1793, 0
      %v1841 = vsel %vm714, %v1794, 0
      %v1844 = vsel %vm763, %v1714, 0
      %1846 = vmatprep.subr.bf16.mxu0 0
      %1847 = vmatpush1.bf16.msra.mxu0 %v1844
      %1848 = vmatprep.subr.bf16.mxu0 0
      %1849 = vmatpush1.bf16.msra.mxu0 0
      %1850 = vmatprep.subr.bf16.mxu0 0
      %1851 = vmatpush1.bf16.msra.mxu0 0
      %1852 = vmatprep.subr.bf16.mxu0 0
      %1853 = vmatpush1.bf16.msra.mxu0 0
      %1854 = vmatprep.subr.bf16.mxu0 0
      %1855 = vmatpush1.bf16.msra.mxu0 0
      %1856 = vmatprep.subr.bf16.mxu0 0
      %1857 = vmatpush1.bf16.msra.mxu0 0
      %1858 = vmatprep.subr.bf16.mxu0 0
      %1859 = vmatpush1.bf16.msra.mxu0 0
      %1860 = vmatprep.subr.bf16.mxu0 0
      %1861 = vmatpush1.bf16.msra.mxu0 0
      %1862 = vmatprep.subr.bf16.mxu0 0
      %1863 = vmatpush1.bf16.msra.mxu0 0
      %1864 = vmatprep.subr.bf16.mxu0 0
      %1865 = vmatpush1.bf16.msra.mxu0 0
      %1866 = vmatprep.subr.bf16.mxu0 0
      %1867 = vmatpush1.bf16.msra.mxu0 0
      %1868 = vmatprep.subr.bf16.mxu0 0
      %1869 = vmatpush1.bf16.msra.mxu0 0
      %1870 = vmatprep.subr.bf16.mxu0 0
      %1871 = vmatpush1.bf16.msra.mxu0 0
      %1872 = vmatprep.subr.bf16.mxu0 0
      %1873 = vmatpush1.bf16.msra.mxu0 0
      %1874 = vmatprep.subr.bf16.mxu0 0
      %1875 = vmatpush1.bf16.msra.mxu0 0
      %1876 = vmatprep.subr.bf16.mxu0 0
      %1877 = vmatpush1.bf16.msra.mxu0 0
      %1878 = vmatprep.mubr.bf16.mxu0 0
      %1879 = vmatmul.mubr.bf16.gmra.mrb[0].mxu0 %v1796
      %v1880 = vpop.f32.mrb[0].mxu0
      %v1881 = vadd.f32 0.0, %v1880
      %v1882 = vpop.f32.mrb[0].mxu0
      %v1883 = vpop.f32.mrb[0].mxu0
      %v1884 = vadd.f32 0.0, %v1883
      %v1885 = vpop.f32.mrb[0].mxu0
      %1886 = vmatprep.mubr.bf16.mxu0 0
      %1887 = vmatmul.mubr.bf16.gmra.mrb[0].mxu0 %v1799
      %v1888 = vpop.f32.mrb[0].mxu0
      %v1889 = vadd.f32 0.0, %v1888
      %v1890 = vpop.f32.mrb[0].mxu0
      %v1891 = vpop.f32.mrb[0].mxu0
      %v1892 = vadd.f32 0.0, %v1891
      %v1893 = vpop.f32.mrb[0].mxu0
      %1894 = vmatprep.mubr.bf16.mxu0 0
      %1895 = vmatmul.mubr.bf16.gmra.mrb[0].mxu0 %v1802
      %v1896 = vpop.f32.mrb[0].mxu0
      %v1897 = vadd.f32 0.0, %v1896
      %v1898 = vpop.f32.mrb[0].mxu0
      %v1899 = vpop.f32.mrb[0].mxu0
      %v1900 = vadd.f32 0.0, %v1899
      %v1901 = vpop.f32.mrb[0].mxu0
      %1902 = vmatprep.mubr.bf16.mxu0 0
      %1903 = vmatmul.mubr.bf16.gmra.mrb[0].mxu0 %v1805
      %v1904 = vpop.f32.mrb[0].mxu0
      %v1905 = vadd.f32 0.0, %v1904
      %v1906 = vpop.f32.mrb[0].mxu0
      %v1907 = vpop.f32.mrb[0].mxu0
      %v1908 = vadd.f32 0.0, %v1907
      %v1909 = vpop.f32.mrb[0].mxu0
      %1910 = vmatprep.mubr.bf16.mxu0 0
      %1911 = vmatmul.mubr.bf16.gmra.mrb[0].mxu0 %v1808
      %v1912 = vpop.f32.mrb[0].mxu0
      %v1913 = vadd.f32 0.0, %v1912
      %v1914 = vpop.f32.mrb[0].mxu0
      %v1915 = vpop.f32.mrb[0].mxu0
      %v1916 = vadd.f32 0.0, %v1915
      %v1917 = vpop.f32.mrb[0].mxu0
      %1918 = vmatprep.mubr.bf16.mxu0 0
      %1919 = vmatmul.mubr.bf16.gmra.mrb[0].mxu0 %v1811
      %v1920 = vpop.f32.mrb[0].mxu0
      %v1921 = vadd.f32 0.0, %v1920
      %v1922 = vpop.f32.mrb[0].mxu0
      %v1923 = vpop.f32.mrb[0].mxu0
      %v1924 = vadd.f32 0.0, %v1923
      %v1925 = vpop.f32.mrb[0].mxu0
      %1926 = vmatprep.mubr.bf16.mxu0 0
      %1927 = vmatmul.mubr.bf16.gmra.mrb[0].mxu0 %v1814
      %v1928 = vpop.f32.mrb[0].mxu0
      %v1929 = vadd.f32 0.0, %v1928
      %v1930 = vpop.f32.mrb[0].mxu0
      %v1931 = vpop.f32.mrb[0].mxu0
      %v1932 = vadd.f32 0.0, %v1931
      %v1933 = vpop.f32.mrb[0].mxu0
      %1934 = vmatprep.mubr.bf16.mxu0 0
      %1935 = vmatmul.mubr.bf16.gmra.mrb[0].mxu0 %v1817
      %v1936 = vpop.f32.mrb[0].mxu0
      %v1937 = vadd.f32 0.0, %v1936
      %v1938 = vpop.f32.mrb[0].mxu0
      %v1939 = vpop.f32.mrb[0].mxu0
      %v1940 = vadd.f32 0.0, %v1939
      %v1941 = vpop.f32.mrb[0].mxu0
      %1942 = vmatprep.mubr.bf16.mxu0 0
      %1943 = vmatmul.mubr.bf16.gmra.mrb[0].mxu0 %v1820
      %v1944 = vpop.f32.mrb[0].mxu0
      %v1945 = vadd.f32 0.0, %v1944
      %v1946 = vpop.f32.mrb[0].mxu0
      %v1947 = vpop.f32.mrb[0].mxu0
      %v1948 = vadd.f32 0.0, %v1947
      %v1949 = vpop.f32.mrb[0].mxu0
      %1950 = vmatprep.mubr.bf16.mxu0 0
      %1951 = vmatmul.mubr.bf16.gmra.mrb[0].mxu0 %v1823
      %v1952 = vpop.f32.mrb[0].mxu0
      %v1953 = vadd.f32 0.0, %v1952
      %v1954 = vpop.f32.mrb[0].mxu0
      %v1955 = vpop.f32.mrb[0].mxu0
      %v1956 = vadd.f32 0.0, %v1955
      %v1957 = vpop.f32.mrb[0].mxu0
      %1958 = vmatprep.mubr.bf16.mxu0 0
      %1959 = vmatmul.mubr.bf16.gmra.mrb[0].mxu0 %v1826
      %v1960 = vpop.f32.mrb[0].mxu0
      %v1961 = vadd.f32 0.0, %v1960
      %v1962 = vpop.f32.mrb[0].mxu0
      %v1963 = vpop.f32.mrb[0].mxu0
      %v1964 = vadd.f32 0.0, %v1963
      %v1965 = vpop.f32.mrb[0].mxu0
      %1966 = vmatprep.mubr.bf16.mxu0 0
      %1967 = vmatmul.mubr.bf16.gmra.mrb[0].mxu0 %v1829
      %v1968 = vpop.f32.mrb[0].mxu0
      %v1969 = vadd.f32 0.0, %v1968
      %v1970 = vpop.f32.mrb[0].mxu0
      %v1971 = vpop.f32.mrb[0].mxu0
      %v1972 = vadd.f32 0.0, %v1971
      %v1973 = vpop.f32.mrb[0].mxu0
      %1974 = vmatprep.mubr.bf16.mxu0 0
      %1975 = vmatmul.mubr.bf16.gmra.mrb[0].mxu0 %v1832
      %v1976 = vpop.f32.mrb[0].mxu0
      %v1977 = vadd.f32 0.0, %v1976
      %v1978 = vpop.f32.mrb[0].mxu0
      %v1979 = vpop.f32.mrb[0].mxu0
      %v1980 = vadd.f32 0.0, %v1979
      %v1981 = vpop.f32.mrb[0].mxu0
      %1982 = vmatprep.mubr.bf16.mxu0 0
      %1983 = vmatmul.mubr.bf16.gmra.mrb[0].mxu0 %v1835
      %v1984 = vpop.f32.mrb[0].mxu0
      %v1985 = vadd.f32 0.0, %v1984
      %v1986 = vpop.f32.mrb[0].mxu0
      %v1987 = vpop.f32.mrb[0].mxu0
      %v1988 = vadd.f32 0.0, %v1987
      %v1989 = vpop.f32.mrb[0].mxu0
      %1990 = vmatprep.mubr.bf16.mxu0 0
      %1991 = vmatmul.mubr.bf16.gmra.mrb[0].mxu0 %v1838
      %v1992 = vpop.f32.mrb[0].mxu0
      %v1993 = vadd.f32 0.0, %v1992
      %v1994 = vpop.f32.mrb[0].mxu0
      %v1995 = vpop.f32.mrb[0].mxu0
      %v1996 = vadd.f32 0.0, %v1995
      %v1997 = vpop.f32.mrb[0].mxu0
      %1998 = vmatprep.mubr.bf16.mxu0 0
      %1999 = vmatmul.mubr.bf16.gmra.mrb[0].mxu0 %v1841
      %v2000 = vpop.f32.mrb[0].mxu0
      %v2001 = vadd.f32 0.0, %v2000
      %v2002 = vpop.f32.mrb[0].mxu0
      %v2003 = vpop.f32.mrb[0].mxu0
      %v2004 = vadd.f32 0.0, %v2003
      %v2005 = vpop.f32.mrb[0].mxu0
      %2006 = vdwg.mxu0
      %v2007 = vadd.f32 %v1645, %v1881
      %v2008 = vadd.f32 %v1646, %v1884
      %v2009 = vadd.f32 %v1647, %v1889
      %v2010 = vadd.f32 %v1648, %v1892
      %v2011 = vadd.f32 %v1649, %v1897
      %v2012 = vadd.f32 %v1650, %v1900
      %v2013 = vadd.f32 %v1651, %v1905
      %v2014 = vadd.f32 %v1652, %v1908
      %v2015 = vadd.f32 %v1653, %v1913
      %v2016 = vadd.f32 %v1654, %v1916
      %v2017 = vadd.f32 %v1655, %v1921
      %v2018 = vadd.f32 %v1656, %v1924
      %v2019 = vadd.f32 %v1657, %v1929
      %v2020 = vadd.f32 %v1658, %v1932
      %v2021 = vadd.f32 %v1659, %v1937
      %v2022 = vadd.f32 %v1660, %v1940
      %v2023 = vadd.f32 %v1661, %v1945
      %v2024 = vadd.f32 %v1662, %v1948
      %v2025 = vadd.f32 %v1663, %v1953
      %v2026 = vadd.f32 %v1664, %v1956
      %v2027 = vadd.f32 %v1665, %v1961
      %v2028 = vadd.f32 %v1666, %v1964
      %v2029 = vadd.f32 %v1667, %v1969
      %v2030 = vadd.f32 %v1668, %v1972
      %v2031 = vadd.f32 %v1669, %v1977
      %v2032 = vadd.f32 %v1670, %v1980
      %v2033 = vadd.f32 %v1671, %v1985
      %v2034 = vadd.f32 %v1672, %v1988
      %v2035 = vadd.f32 %v1673, %v1993
      %v2036 = vadd.f32 %v1674, %v1996
      %v2037 = vadd.f32 %v1675, %v2001
      %v2038 = vadd.f32 %v1676, %v2004
      %v2039 = vld [vmem:[%s1680] sm:$0xf]
      %v2040 = vld [vmem:[%s1680 + $0x4] sm:$0xf]
      %v2041 = vld [vmem:[%s1680 + $0x8] sm:$0x1]
      %v2042 = vld [vmem:[%s1680 + $0xc] sm:$0xf]
      %v2043 = vld [vmem:[%s1680 + $0x10] sm:$0xf]
      %v2044 = vld [vmem:[%s1680 + $0x14] sm:$0x1]
      %v2045 = vld [vmem:[%s1680 + $0x18] sm:$0xf]
      %v2046 = vld [vmem:[%s1680 + $0x1c] sm:$0xf]
      %v2047 = vld [vmem:[%s1680 + $0x20] sm:$0x1]
      %v2048 = vld [vmem:[%s1680 + $0x24] sm:$0xf]
      %v2049 = vld [vmem:[%s1680 + $0x28] sm:$0xf]
      %v2050 = vld [vmem:[%s1680 + $0x2c] sm:$0x1]
      %v2051 = vld [vmem:[%s1680 + $0x30] sm:$0xf]
      %v2052 = vld [vmem:[%s1680 + $0x34] sm:$0xf]
      %v2053 = vld [vmem:[%s1680 + $0x38] sm:$0x1]
      %v2054 = vld [vmem:[%s1680 + $0x3c] sm:$0xf]
      %v2055 = vld [vmem:[%s1680 + $0x40] sm:$0xf]
      %v2056 = vld [vmem:[%s1680 + $0x44] sm:$0x1]
      %v2057 = vld [vmem:[%s1680 + $0x48] sm:$0xf]
      %v2058 = vld [vmem:[%s1680 + $0x4c] sm:$0xf]
      %v2059 = vld [vmem:[%s1680 + $0x50] sm:$0x1]
      %v2060 = vld [vmem:[%s1680 + $0x54] sm:$0xf]
      %v2061 = vld [vmem:[%s1680 + $0x58] sm:$0xf]
      %v2062 = vld [vmem:[%s1680 + $0x5c] sm:$0x1]
      %v2063 = vld [vmem:[%s1680 + $0x60] sm:$0xf]
      %v2064 = vld [vmem:[%s1680 + $0x64] sm:$0xf]
      %v2065 = vld [vmem:[%s1680 + $0x68] sm:$0x1]
      %v2066 = vld [vmem:[%s1680 + $0x6c] sm:$0xf]
      %v2067 = vld [vmem:[%s1680 + $0x70] sm:$0xf]
      %v2068 = vld [vmem:[%s1680 + $0x74] sm:$0x1]
      %v2069 = vld [vmem:[%s1680 + $0x78] sm:$0xf]
      %v2070 = vld [vmem:[%s1680 + $0x7c] sm:$0xf]
      %v2071 = vld [vmem:[%s1680 + $0x80] sm:$0x1]
      %v2072 = vld [vmem:[%s1680 + $0x84] sm:$0xf]
      %v2073 = vld [vmem:[%s1680 + $0x88] sm:$0xf]
      %v2074 = vld [vmem:[%s1680 + $0x8c] sm:$0x1]
      %v2075 = vld [vmem:[%s1680 + $0x90] sm:$0xf]
      %v2076 = vld [vmem:[%s1680 + $0x94] sm:$0xf]
      %v2077 = vld [vmem:[%s1680 + $0x98] sm:$0x1]
      %v2078 = vld [vmem:[%s1680 + $0x9c] sm:$0xf]
      %v2079 = vld [vmem:[%s1680 + $0xa0] sm:$0xf]
      %v2080 = vld [vmem:[%s1680 + $0xa4] sm:$0x1]
      %v2081 = vld [vmem:[%s1680 + $0xa8] sm:$0xf]
      %v2082 = vld [vmem:[%s1680 + $0xac] sm:$0xf]
      %v2083 = vld [vmem:[%s1680 + $0xb0] sm:$0x1]
      %v2084 = vld [vmem:[%s1680 + $0xb4] sm:$0xf]
      %v2085 = vld [vmem:[%s1680 + $0xb8] sm:$0xf]
      %v2086 = vld [vmem:[%s1680 + $0xbc] sm:$0x1]
      %v2088 = vshrl.u32 %v2039, 16
      %v2090 = vrot.slane %v2088, 4
      %v2091 = vshll.u32 %v2039, 16
      %v2093 = vrot.slane %v2091, 5
      %v2094 = vor.u32 %v2090, %v2093
      %v2095 = vrot.slane %v2094, 4
      %v2097 = vshll.u32 %v2040, 16
      %v2099 = vrot.slane %v2097, 5
      %v2100 = vsel %vm279, %v2095, %v2099
      %v2101 = vshrl.u32 %v2040, 16
      %v2103 = vrot.slane %v2101, 4
      %v2104 = vor.u32 %v2103, %v2099
      %v2105 = vrot.slane %v2104, 4
      %v2107 = vshll.u32 %v2041, 16
      %v2109 = vrot.slane %v2107, 5
      %v2110 = vsel %vm279, %v2105, %v2109
      %v2112 = vshrl.u32 %v2042, 16
      %v2114 = vrot.slane %v2112, 4
      %v2115 = vshll.u32 %v2042, 16
      %v2117 = vrot.slane %v2115, 5
      %v2118 = vor.u32 %v2114, %v2117
      %v2119 = vrot.slane %v2118, 4
      %v2121 = vshll.u32 %v2043, 16
      %v2123 = vrot.slane %v2121, 5
      %v2124 = vsel %vm279, %v2119, %v2123
      %v2125 = vshrl.u32 %v2043, 16
      %v2127 = vrot.slane %v2125, 4
      %v2128 = vor.u32 %v2127, %v2123
      %v2129 = vrot.slane %v2128, 4
      %v2131 = vshll.u32 %v2044, 16
      %v2133 = vrot.slane %v2131, 5
      %v2134 = vsel %vm279, %v2129, %v2133
      %v2136 = vshrl.u32 %v2045, 16
      %v2138 = vrot.slane %v2136, 4
      %v2139 = vshll.u32 %v2045, 16
      %v2141 = vrot.slane %v2139, 5
      %v2142 = vor.u32 %v2138, %v2141
      %v2143 = vrot.slane %v2142, 4
      %v2145 = vshll.u32 %v2046, 16
      %v2147 = vrot.slane %v2145, 5
      %v2148 = vsel %vm279, %v2143, %v2147
      %v2149 = vshrl.u32 %v2046, 16
      %v2151 = vrot.slane %v2149, 4
      %v2152 = vor.u32 %v2151, %v2147
      %v2153 = vrot.slane %v2152, 4
      %v2155 = vshll.u32 %v2047, 16
      %v2157 = vrot.slane %v2155, 5
      %v2158 = vsel %vm279, %v2153, %v2157
      %v2160 = vshrl.u32 %v2048, 16
      %v2162 = vrot.slane %v2160, 4
      %v2163 = vshll.u32 %v2048, 16
      %v2165 = vrot.slane %v2163, 5
      %v2166 = vor.u32 %v2162, %v2165
      %v2167 = vrot.slane %v2166, 4
      %v2169 = vshll.u32 %v2049, 16
      %v2171 = vrot.slane %v2169, 5
      %v2172 = vsel %vm279, %v2167, %v2171
      %v2173 = vshrl.u32 %v2049, 16
      %v2175 = vrot.slane %v2173, 4
      %v2176 = vor.u32 %v2175, %v2171
      %v2177 = vrot.slane %v2176, 4
      %v2179 = vshll.u32 %v2050, 16
      %v2181 = vrot.slane %v2179, 5
      %v2182 = vsel %vm279, %v2177, %v2181
      %v2184 = vshrl.u32 %v2051, 16
      %v2186 = vrot.slane %v2184, 4
      %v2187 = vshll.u32 %v2051, 16
      %v2189 = vrot.slane %v2187, 5
      %v2190 = vor.u32 %v2186, %v2189
      %v2191 = vrot.slane %v2190, 4
      %v2193 = vshll.u32 %v2052, 16
      %v2195 = vrot.slane %v2193, 5
      %v2196 = vsel %vm279, %v2191, %v2195
      %v2197 = vshrl.u32 %v2052, 16
      %v2199 = vrot.slane %v2197, 4
      %v2200 = vor.u32 %v2199, %v2195
      %v2201 = vrot.slane %v2200, 4
      %v2203 = vshll.u32 %v2053, 16
      %v2205 = vrot.slane %v2203, 5
      %v2206 = vsel %vm279, %v2201, %v2205
      %v2208 = vshrl.u32 %v2054, 16
      %v2210 = vrot.slane %v2208, 4
      %v2211 = vshll.u32 %v2054, 16
      %v2213 = vrot.slane %v2211, 5
      %v2214 = vor.u32 %v2210, %v2213
      %v2215 = vrot.slane %v2214, 4
      %v2217 = vshll.u32 %v2055, 16
      %v2219 = vrot.slane %v2217, 5
      %v2220 = vsel %vm279, %v2215, %v2219
      %v2221 = vshrl.u32 %v2055, 16
      %v2223 = vrot.slane %v2221, 4
      %v2224 = vor.u32 %v2223, %v2219
      %v2225 = vrot.slane %v2224, 4
      %v2227 = vshll.u32 %v2056, 16
      %v2229 = vrot.slane %v2227, 5
      %v2230 = vsel %vm279, %v2225, %v2229
      %v2232 = vshrl.u32 %v2057, 16
      %v2234 = vrot.slane %v2232, 4
      %v2235 = vshll.u32 %v2057, 16
      %v2237 = vrot.slane %v2235, 5
      %v2238 = vor.u32 %v2234, %v2237
      %v2239 = vrot.slane %v2238, 4
      %v2241 = vshll.u32 %v2058, 16
      %v2243 = vrot.slane %v2241, 5
      %v2244 = vsel %vm279, %v2239, %v2243
      %v2245 = vshrl.u32 %v2058, 16
      %v2247 = vrot.slane %v2245, 4
      %v2248 = vor.u32 %v2247, %v2243
      %v2249 = vrot.slane %v2248, 4
      %v2251 = vshll.u32 %v2059, 16
      %v2253 = vrot.slane %v2251, 5
      %v2254 = vsel %vm279, %v2249, %v2253
      %v2256 = vshrl.u32 %v2060, 16
      %v2258 = vrot.slane %v2256, 4
      %v2259 = vshll.u32 %v2060, 16
      %v2261 = vrot.slane %v2259, 5
      %v2262 = vor.u32 %v2258, %v2261
      %v2263 = vrot.slane %v2262, 4
      %v2265 = vshll.u32 %v2061, 16
      %v2267 = vrot.slane %v2265, 5
      %v2268 = vsel %vm279, %v2263, %v2267
      %v2269 = vshrl.u32 %v2061, 16
      %v2271 = vrot.slane %v2269, 4
      %v2272 = vor.u32 %v2271, %v2267
      %v2273 = vrot.slane %v2272, 4
      %v2275 = vshll.u32 %v2062, 16
      %v2277 = vrot.slane %v2275, 5
      %v2278 = vsel %vm279, %v2273, %v2277
      %v2280 = vshrl.u32 %v2063, 16
      %v2282 = vrot.slane %v2280, 4
      %v2283 = vshll.u32 %v2063, 16
      %v2285 = vrot.slane %v2283, 5
      %v2286 = vor.u32 %v2282, %v2285
      %v2287 = vrot.slane %v2286, 4
      %v2289 = vshll.u32 %v2064, 16
      %v2291 = vrot.slane %v2289, 5
      %v2292 = vsel %vm279, %v2287, %v2291
      %v2293 = vshrl.u32 %v2064, 16
      %v2295 = vrot.slane %v2293, 4
      %v2296 = vor.u32 %v2295, %v2291
      %v2297 = vrot.slane %v2296, 4
      %v2299 = vshll.u32 %v2065, 16
      %v2301 = vrot.slane %v2299, 5
      %v2302 = vsel %vm279, %v2297, %v2301
      %v2304 = vshrl.u32 %v2066, 16
      %v2306 = vrot.slane %v2304, 4
      %v2307 = vshll.u32 %v2066, 16
      %v2309 = vrot.slane %v2307, 5
      %v2310 = vor.u32 %v2306, %v2309
      %v2311 = vrot.slane %v2310, 4
      %v2313 = vshll.u32 %v2067, 16
      %v2315 = vrot.slane %v2313, 5
      %v2316 = vsel %vm279, %v2311, %v2315
      %v2317 = vshrl.u32 %v2067, 16
      %v2319 = vrot.slane %v2317, 4
      %v2320 = vor.u32 %v2319, %v2315
      %v2321 = vrot.slane %v2320, 4
      %v2323 = vshll.u32 %v2068, 16
      %v2325 = vrot.slane %v2323, 5
      %v2326 = vsel %vm279, %v2321, %v2325
      %v2328 = vshrl.u32 %v2069, 16
      %v2330 = vrot.slane %v2328, 4
      %v2331 = vshll.u32 %v2069, 16
      %v2333 = vrot.slane %v2331, 5
      %v2334 = vor.u32 %v2330, %v2333
      %v2335 = vrot.slane %v2334, 4
      %v2337 = vshll.u32 %v2070, 16
      %v2339 = vrot.slane %v2337, 5
      %v2340 = vsel %vm279, %v2335, %v2339
      %v2341 = vshrl.u32 %v2070, 16
      %v2343 = vrot.slane %v2341, 4
      %v2344 = vor.u32 %v2343, %v2339
      %v2345 = vrot.slane %v2344, 4
      %v2347 = vshll.u32 %v2071, 16
      %v2349 = vrot.slane %v2347, 5
      %v2350 = vsel %vm279, %v2345, %v2349
      %v2352 = vshrl.u32 %v2072, 16
      %v2354 = vrot.slane %v2352, 4
      %v2355 = vshll.u32 %v2072, 16
      %v2357 = vrot.slane %v2355, 5
      %v2358 = vor.u32 %v2354, %v2357
      %v2359 = vrot.slane %v2358, 4
      %v2361 = vshll.u32 %v2073, 16
      %v2363 = vrot.slane %v2361, 5
      %v2364 = vsel %vm279, %v2359, %v2363
      %v2365 = vshrl.u32 %v2073, 16
      %v2367 = vrot.slane %v2365, 4
      %v2368 = vor.u32 %v2367, %v2363
      %v2369 = vrot.slane %v2368, 4
      %v2371 = vshll.u32 %v2074, 16
      %v2373 = vrot.slane %v2371, 5
      %v2374 = vsel %vm279, %v2369, %v2373
      %v2376 = vshrl.u32 %v2075, 16
      %v2378 = vrot.slane %v2376, 4
      %v2379 = vshll.u32 %v2075, 16
      %v2381 = vrot.slane %v2379, 5
      %v2382 = vor.u32 %v2378, %v2381
      %v2383 = vrot.slane %v2382, 4
      %v2385 = vshll.u32 %v2076, 16
      %v2387 = vrot.slane %v2385, 5
      %v2388 = vsel %vm279, %v2383, %v2387
      %v2389 = vshrl.u32 %v2076, 16
      %v2391 = vrot.slane %v2389, 4
      %v2392 = vor.u32 %v2391, %v2387
      %v2393 = vrot.slane %v2392, 4
      %v2395 = vshll.u32 %v2077, 16
      %v2397 = vrot.slane %v2395, 5
      %v2398 = vsel %vm279, %v2393, %v2397
      %v2400 = vshrl.u32 %v2078, 16
      %v2402 = vrot.slane %v2400, 4
      %v2403 = vshll.u32 %v2078, 16
      %v2405 = vrot.slane %v2403, 5
      %v2406 = vor.u32 %v2402, %v2405
      %v2407 = vrot.slane %v2406, 4
      %v2409 = vshll.u32 %v2079, 16
      %v2411 = vrot.slane %v2409, 5
      %v2412 = vsel %vm279, %v2407, %v2411
      %v2413 = vshrl.u32 %v2079, 16
      %v2415 = vrot.slane %v2413, 4
      %v2416 = vor.u32 %v2415, %v2411
      %v2417 = vrot.slane %v2416, 4
      %v2419 = vshll.u32 %v2080, 16
      %v2421 = vrot.slane %v2419, 5
      %v2422 = vsel %vm279, %v2417, %v2421
      %v2424 = vshrl.u32 %v2081, 16
      %v2426 = vrot.slane %v2424, 4
      %v2427 = vshll.u32 %v2081, 16
      %v2429 = vrot.slane %v2427, 5
      %v2430 = vor.u32 %v2426, %v2429
      %v2431 = vrot.slane %v2430, 4
      %v2433 = vshll.u32 %v2082, 16
      %v2435 = vrot.slane %v2433, 5
      %v2436 = vsel %vm279, %v2431, %v2435
      %v2437 = vshrl.u32 %v2082, 16
      %v2439 = vrot.slane %v2437, 4
      %v2440 = vor.u32 %v2439, %v2435
      %v2441 = vrot.slane %v2440, 4
      %v2443 = vshll.u32 %v2083, 16
      %v2445 = vrot.slane %v2443, 5
      %v2446 = vsel %vm279, %v2441, %v2445
      %v2448 = vshrl.u32 %v2084, 16
      %v2450 = vrot.slane %v2448, 4
      %v2451 = vshll.u32 %v2084, 16
      %v2453 = vrot.slane %v2451, 5
      %v2454 = vor.u32 %v2450, %v2453
      %v2455 = vrot.slane %v2454, 4
      %v2457 = vshll.u32 %v2085, 16
      %v2459 = vrot.slane %v2457, 5
      %v2460 = vsel %vm279, %v2455, %v2459
      %v2461 = vshrl.u32 %v2085, 16
      %v2463 = vrot.slane %v2461, 4
      %v2464 = vor.u32 %v2463, %v2459
      %v2465 = vrot.slane %v2464, 4
      %v2467 = vshll.u32 %v2086, 16
      %v2469 = vrot.slane %v2467, 5
      %v2470 = vsel %vm279, %v2465, %v2469
      %s2471 = scalar_lea.vmem %s1, 8
      %v2472 = vld [vmem:[%s2471] sm:$0x3]
      %v2473 = vunpack.c.l.b16 %v2100
      %v2474 = vunpack.c.l.b16 %v2110
      %v2475 = vunpack.c.l.b16 %v2124
      %v2476 = vunpack.c.l.b16 %v2134
      %v2477 = vunpack.c.l.b16 %v2148
      %v2478 = vunpack.c.l.b16 %v2158
      %v2479 = vunpack.c.l.b16 %v2172
      %v2480 = vunpack.c.l.b16 %v2182
      %v2481 = vunpack.c.l.b16 %v2196
      %v2482 = vunpack.c.l.b16 %v2206
      %v2483 = vunpack.c.l.b16 %v2220
      %v2484 = vunpack.c.l.b16 %v2230
      %v2485 = vunpack.c.l.b16 %v2244
      %v2486 = vunpack.c.l.b16 %v2254
      %v2487 = vunpack.c.l.b16 %v2268
      %v2488 = vunpack.c.l.b16 %v2278
      %v2489 = vunpack.c.l.b16 %v2292
      %v2490 = vunpack.c.l.b16 %v2302
      %v2491 = vunpack.c.l.b16 %v2316
      %v2492 = vunpack.c.l.b16 %v2326
      %v2493 = vunpack.c.l.b16 %v2340
      %v2494 = vunpack.c.l.b16 %v2350
      %v2495 = vunpack.c.l.b16 %v2364
      %v2496 = vunpack.c.l.b16 %v2374
      %v2497 = vunpack.c.l.b16 %v2388
      %v2498 = vunpack.c.l.b16 %v2398
      %v2499 = vunpack.c.l.b16 %v2412
      %v2500 = vunpack.c.l.b16 %v2422
      %v2501 = vunpack.c.l.b16 %v2436
      %v2502 = vunpack.c.l.b16 %v2446
      %v2503 = vunpack.c.l.b16 %v2460
      %v2504 = vunpack.c.l.b16 %v2470
      %v2505 = vpack.c.b16 %v2474, %v2473
      %v2506 = vpack.c.b16 %v2476, %v2475
      %v2507 = vpack.c.b16 %v2478, %v2477
      %v2508 = vpack.c.b16 %v2480, %v2479
      %v2509 = vpack.c.b16 %v2482, %v2481
      %v2510 = vpack.c.b16 %v2484, %v2483
      %v2511 = vpack.c.b16 %v2486, %v2485
      %v2512 = vpack.c.b16 %v2488, %v2487
      %v2513 = vpack.c.b16 %v2490, %v2489
      %v2514 = vpack.c.b16 %v2492, %v2491
      %v2515 = vpack.c.b16 %v2494, %v2493
      %v2516 = vpack.c.b16 %v2496, %v2495
      %v2517 = vpack.c.b16 %v2498, %v2497
      %v2518 = vpack.c.b16 %v2500, %v2499
      %v2519 = vpack.c.b16 %v2502, %v2501
      %v2520 = vpack.c.b16 %v2504, %v2503
      %v2522 = vsel %vm714, %v2505, 0
      %v2525 = vsel %vm714, %v2506, 0
      %v2528 = vsel %vm714, %v2507, 0
      %v2531 = vsel %vm714, %v2508, 0
      %v2534 = vsel %vm714, %v2509, 0
      %v2537 = vsel %vm714, %v2510, 0
      %v2540 = vsel %vm714, %v2511, 0
      %v2543 = vsel %vm714, %v2512, 0
      %v2546 = vsel %vm714, %v2513, 0
      %v2549 = vsel %vm714, %v2514, 0
      %v2552 = vsel %vm714, %v2515, 0
      %v2555 = vsel %vm714, %v2516, 0
      %v2558 = vsel %vm714, %v2517, 0
      %v2561 = vsel %vm714, %v2518, 0
      %v2564 = vsel %vm714, %v2519, 0
      %v2567 = vsel %vm714, %v2520, 0
      %v2570 = vsel %vm763, %v2472, 0
      %2572 = vmatprep.subr.bf16.mxu0 0
      %2573 = vmatpush1.bf16.msra.mxu0 %v2570
      %2574 = vmatprep.subr.bf16.mxu0 0
      %2575 = vmatpush1.bf16.msra.mxu0 0
      %2576 = vmatprep.subr.bf16.mxu0 0
      %2577 = vmatpush1.bf16.msra.mxu0 0
      %2578 = vmatprep.subr.bf16.mxu0 0
      %2579 = vmatpush1.bf16.msra.mxu0 0
      %2580 = vmatprep.subr.bf16.mxu0 0
      %2581 = vmatpush1.bf16.msra.mxu0 0
      %2582 = vmatprep.subr.bf16.mxu0 0
      %2583 = vmatpush1.bf16.msra.mxu0 0
      %2584 = vmatprep.subr.bf16.mxu0 0
      %2585 = vmatpush1.bf16.msra.mxu0 0
      %2586 = vmatprep.subr.bf16.mxu0 0
      %2587 = vmatpush1.bf16.msra.mxu0 0
      %2588 = vmatprep.subr.bf16.mxu0 0
      %2589 = vmatpush1.bf16.msra.mxu0 0
      %2590 = vmatprep.subr.bf16.mxu0 0
      %2591 = vmatpush1.bf16.msra.mxu0 0
      %2592 = vmatprep.subr.bf16.mxu0 0
      %2593 = vmatpush1.bf16.msra.mxu0 0
      %2594 = vmatprep.subr.bf16.mxu0 0
      %2595 = vmatpush1.bf16.msra.mxu0 0
      %2596 = vmatprep.subr.bf16.mxu0 0
      %2597 = vmatpush1.bf16.msra.mxu0 0
      %2598 = vmatprep.subr.bf16.mxu0 0
      %2599 = vmatpush1.bf16.msra.mxu0 0
      %2600 = vmatprep.subr.bf16.mxu0 0
      %2601 = vmatpush1.bf16.msra.mxu0 0
      %2602 = vmatprep.subr.bf16.mxu0 0
      %2603 = vmatpush1.bf16.msra.mxu0 0
      %2604 = vmatprep.mubr.bf16.mxu0 0
      %2605 = vmatmul.mubr.bf16.gmra.mrb[0].mxu0 %v2522
      %v2606 = vpop.f32.mrb[0].mxu0
      %v2607 = vadd.f32 0.0, %v2606
      %v2608 = vpop.f32.mrb[0].mxu0
      %v2609 = vpop.f32.mrb[0].mxu0
      %v2610 = vadd.f32 0.0, %v2609
      %v2611 = vpop.f32.mrb[0].mxu0
      %2612 = vmatprep.mubr.bf16.mxu0 0
      %2613 = vmatmul.mubr.bf16.gmra.mrb[0].mxu0 %v2525
      %v2614 = vpop.f32.mrb[0].mxu0
      %v2615 = vadd.f32 0.0, %v2614
      %v2616 = vpop.f32.mrb[0].mxu0
      %v2617 = vpop.f32.mrb[0].mxu0
      %v2618 = vadd.f32 0.0, %v2617
      %v2619 = vpop.f32.mrb[0].mxu0
      %2620 = vmatprep.mubr.bf16.mxu0 0
      %2621 = vmatmul.mubr.bf16.gmra.mrb[0].mxu0 %v2528
      %v2622 = vpop.f32.mrb[0].mxu0
      %v2623 = vadd.f32 0.0, %v2622
      %v2624 = vpop.f32.mrb[0].mxu0
      %v2625 = vpop.f32.mrb[0].mxu0
      %v2626 = vadd.f32 0.0, %v2625
      %v2627 = vpop.f32.mrb[0].mxu0
      %2628 = vmatprep.mubr.bf16.mxu0 0
      %2629 = vmatmul.mubr.bf16.gmra.mrb[0].mxu0 %v2531
      %v2630 = vpop.f32.mrb[0].mxu0
      %v2631 = vadd.f32 0.0, %v2630
      %v2632 = vpop.f32.mrb[0].mxu0
      %v2633 = vpop.f32.mrb[0].mxu0
      %v2634 = vadd.f32 0.0, %v2633
      %v2635 = vpop.f32.mrb[0].mxu0
      %2636 = vmatprep.mubr.bf16.mxu0 0
      %2637 = vmatmul.mubr.bf16.gmra.mrb[0].mxu0 %v2534
      %v2638 = vpop.f32.mrb[0].mxu0
      %v2639 = vadd.f32 0.0, %v2638
      %v2640 = vpop.f32.mrb[0].mxu0
      %v2641 = vpop.f32.mrb[0].mxu0
      %v2642 = vadd.f32 0.0, %v2641
      %v2643 = vpop.f32.mrb[0].mxu0
      %2644 = vmatprep.mubr.bf16.mxu0 0
      %2645 = vmatmul.mubr.bf16.gmra.mrb[0].mxu0 %v2537
      %v2646 = vpop.f32.mrb[0].mxu0
      %v2647 = vadd.f32 0.0, %v2646
      %v2648 = vpop.f32.mrb[0].mxu0
      %v2649 = vpop.f32.mrb[0].mxu0
      %v2650 = vadd.f32 0.0, %v2649
      %v2651 = vpop.f32.mrb[0].mxu0
      %2652 = vmatprep.mubr.bf16.mxu0 0
      %2653 = vmatmul.mubr.bf16.gmra.mrb[0].mxu0 %v2540
      %v2654 = vpop.f32.mrb[0].mxu0
      %v2655 = vadd.f32 0.0, %v2654
      %v2656 = vpop.f32.mrb[0].mxu0
      %v2657 = vpop.f32.mrb[0].mxu0
      %v2658 = vadd.f32 0.0, %v2657
      %v2659 = vpop.f32.mrb[0].mxu0
      %2660 = vmatprep.mubr.bf16.mxu0 0
      %2661 = vmatmul.mubr.bf16.gmra.mrb[0].mxu0 %v2543
      %v2662 = vpop.f32.mrb[0].mxu0
      %v2663 = vadd.f32 0.0, %v2662
      %v2664 = vpop.f32.mrb[0].mxu0
      %v2665 = vpop.f32.mrb[0].mxu0
      %v2666 = vadd.f32 0.0, %v2665
      %v2667 = vpop.f32.mrb[0].mxu0
      %2668 = vmatprep.mubr.bf16.mxu0 0
      %2669 = vmatmul.mubr.bf16.gmra.mrb[0].mxu0 %v2546
      %v2670 = vpop.f32.mrb[0].mxu0
      %v2671 = vadd.f32 0.0, %v2670
      %v2672 = vpop.f32.mrb[0].mxu0
      %v2673 = vpop.f32.mrb[0].mxu0
      %v2674 = vadd.f32 0.0, %v2673
      %v2675 = vpop.f32.mrb[0].mxu0
      %2676 = vmatprep.mubr.bf16.mxu0 0
      %2677 = vmatmul.mubr.bf16.gmra.mrb[0].mxu0 %v2549
      %v2678 = vpop.f32.mrb[0].mxu0
      %v2679 = vadd.f32 0.0, %v2678
      %v2680 = vpop.f32.mrb[0].mxu0
      %v2681 = vpop.f32.mrb[0].mxu0
      %v2682 = vadd.f32 0.0, %v2681
      %v2683 = vpop.f32.mrb[0].mxu0
      %2684 = vmatprep.mubr.bf16.mxu0 0
      %2685 = vmatmul.mubr.bf16.gmra.mrb[0].mxu0 %v2552
      %v2686 = vpop.f32.mrb[0].mxu0
      %v2687 = vadd.f32 0.0, %v2686
      %v2688 = vpop.f32.mrb[0].mxu0
      %v2689 = vpop.f32.mrb[0].mxu0
      %v2690 = vadd.f32 0.0, %v2689
      %v2691 = vpop.f32.mrb[0].mxu0
      %2692 = vmatprep.mubr.bf16.mxu0 0
      %2693 = vmatmul.mubr.bf16.gmra.mrb[0].mxu0 %v2555
      %v2694 = vpop.f32.mrb[0].mxu0
      %v2695 = vadd.f32 0.0, %v2694
      %v2696 = vpop.f32.mrb[0].mxu0
      %v2697 = vpop.f32.mrb[0].mxu0
      %v2698 = vadd.f32 0.0, %v2697
      %v2699 = vpop.f32.mrb[0].mxu0
      %2700 = vmatprep.mubr.bf16.mxu0 0
      %2701 = vmatmul.mubr.bf16.gmra.mrb[0].mxu0 %v2558
      %v2702 = vpop.f32.mrb[0].mxu0
      %v2703 = vadd.f32 0.0, %v2702
      %v2704 = vpop.f32.mrb[0].mxu0
      %v2705 = vpop.f32.mrb[0].mxu0
      %v2706 = vadd.f32 0.0, %v2705
      %v2707 = vpop.f32.mrb[0].mxu0
      %2708 = vmatprep.mubr.bf16.mxu0 0
      %2709 = vmatmul.mubr.bf16.gmra.mrb[0].mxu0 %v2561
      %v2710 = vpop.f32.mrb[0].mxu0
      %v2711 = vadd.f32 0.0, %v2710
      %v2712 = vpop.f32.mrb[0].mxu0
      %v2713 = vpop.f32.mrb[0].mxu0
      %v2714 = vadd.f32 0.0, %v2713
      %v2715 = vpop.f32.mrb[0].mxu0
      %2716 = vmatprep.mubr.bf16.mxu0 0
      %2717 = vmatmul.mubr.bf16.gmra.mrb[0].mxu0 %v2564
      %v2718 = vpop.f32.mrb[0].mxu0
      %v2719 = vadd.f32 0.0, %v2718
      %v2720 = vpop.f32.mrb[0].mxu0
      %v2721 = vpop.f32.mrb[0].mxu0
      %v2722 = vadd.f32 0.0, %v2721
      %v2723 = vpop.f32.mrb[0].mxu0
      %2724 = vmatprep.mubr.bf16.mxu0 0
      %2725 = vmatmul.mubr.bf16.gmra.mrb[0].mxu0 %v2567
      %v2726 = vpop.f32.mrb[0].mxu0
      %v2727 = vadd.f32 0.0, %v2726
      %v2728 = vpop.f32.mrb[0].mxu0
      %v2729 = vpop.f32.mrb[0].mxu0
      %v2730 = vadd.f32 0.0, %v2729
      %v2731 = vpop.f32.mrb[0].mxu0
      %2732 = vdwg.mxu0
      %v2733 = vadd.f32 %v2007, %v2607
      %v2734 = vadd.f32 %v2008, %v2610
      %v2735 = vadd.f32 %v2009, %v2615
      %v2736 = vadd.f32 %v2010, %v2618
      %v2737 = vadd.f32 %v2011, %v2623
      %v2738 = vadd.f32 %v2012, %v2626
      %v2739 = vadd.f32 %v2013, %v2631
      %v2740 = vadd.f32 %v2014, %v2634
      %v2741 = vadd.f32 %v2015, %v2639
      %v2742 = vadd.f32 %v2016, %v2642
      %v2743 = vadd.f32 %v2017, %v2647
      %v2744 = vadd.f32 %v2018, %v2650
      %v2745 = vadd.f32 %v2019, %v2655
      %v2746 = vadd.f32 %v2020, %v2658
      %v2747 = vadd.f32 %v2021, %v2663
      %v2748 = vadd.f32 %v2022, %v2666
      %v2749 = vadd.f32 %v2023, %v2671
      %v2750 = vadd.f32 %v2024, %v2674
      %v2751 = vadd.f32 %v2025, %v2679
      %v2752 = vadd.f32 %v2026, %v2682
      %v2753 = vadd.f32 %v2027, %v2687
      %v2754 = vadd.f32 %v2028, %v2690
      %v2755 = vadd.f32 %v2029, %v2695
      %v2756 = vadd.f32 %v2030, %v2698
      %v2757 = vadd.f32 %v2031, %v2703
      %v2758 = vadd.f32 %v2032, %v2706
      %v2759 = vadd.f32 %v2033, %v2711
      %v2760 = vadd.f32 %v2034, %v2714
      %v2761 = vadd.f32 %v2035, %v2719
      %v2762 = vadd.f32 %v2036, %v2722
      %v2763 = vadd.f32 %v2037, %v2727
      %v2764 = vadd.f32 %v2038, %v2730
      %v2765 = vld [vmem:[%s1680] sm:$0xe]
      %v2766 = vld [vmem:[%s1680 + $0xc] sm:$0xe]
      %v2767 = vld [vmem:[%s1680 + $0x18] sm:$0xe]
      %v2768 = vld [vmem:[%s1680 + $0x24] sm:$0xe]
      %v2769 = vld [vmem:[%s1680 + $0x30] sm:$0xe]
      %v2770 = vld [vmem:[%s1680 + $0x3c] sm:$0xe]
      %v2771 = vld [vmem:[%s1680 + $0x48] sm:$0xe]
      %v2772 = vld [vmem:[%s1680 + $0x54] sm:$0xe]
      %v2773 = vld [vmem:[%s1680 + $0x60] sm:$0xe]
      %v2774 = vld [vmem:[%s1680 + $0x6c] sm:$0xe]
      %v2775 = vld [vmem:[%s1680 + $0x78] sm:$0xe]
      %v2776 = vld [vmem:[%s1680 + $0x84] sm:$0xe]
      %v2777 = vld [vmem:[%s1680 + $0x90] sm:$0xe]
      %v2778 = vld [vmem:[%s1680 + $0x9c] sm:$0xe]
      %v2779 = vld [vmem:[%s1680 + $0xa8] sm:$0xe]
      %v2780 = vld [vmem:[%s1680 + $0xb4] sm:$0xe]
      %v2829 = vrot.slane %v2765, 5
      %v2830 = vrot.slane %v2829, 4
      %v2831 = vrot.slane %v2040, 5
      %v2832 = vsel %vm1270, %v2830, %v2831
      %v2833 = vrot.slane %v2831, 4
      %v2834 = vrot.slane %v2041, 5
      %v2835 = vsel %vm1270, %v2833, %v2834
      %v2836 = vrot.slane %v2766, 5
      %v2837 = vrot.slane %v2836, 4
      %v2838 = vrot.slane %v2043, 5
      %v2839 = vsel %vm1270, %v2837, %v2838
      %v2840 = vrot.slane %v2838, 4
      %v2841 = vrot.slane %v2044, 5
      %v2842 = vsel %vm1270, %v2840, %v2841
      %v2843 = vrot.slane %v2767, 5
      %v2844 = vrot.slane %v2843, 4
      %v2845 = vrot.slane %v2046, 5
      %v2846 = vsel %vm1270, %v2844, %v2845
      %v2847 = vrot.slane %v2845, 4
      %v2848 = vrot.slane %v2047, 5
      %v2849 = vsel %vm1270, %v2847, %v2848
      %v2850 = vrot.slane %v2768, 5
      %v2851 = vrot.slane %v2850, 4
      %v2852 = vrot.slane %v2049, 5
      %v2853 = vsel %vm1270, %v2851, %v2852
      %v2854 = vrot.slane %v2852, 4
      %v2855 = vrot.slane %v2050, 5
      %v2856 = vsel %vm1270, %v2854, %v2855
      %v2857 = vrot.slane %v2769, 5
      %v2858 = vrot.slane %v2857, 4
      %v2859 = vrot.slane %v2052, 5
      %v2860 = vsel %vm1270, %v2858, %v2859
      %v2861 = vrot.slane %v2859, 4
      %v2862 = vrot.slane %v2053, 5
      %v2863 = vsel %vm1270, %v2861, %v2862
      %v2864 = vrot.slane %v2770, 5
      %v2865 = vrot.slane %v2864, 4
      %v2866 = vrot.slane %v2055, 5
      %v2867 = vsel %vm1270, %v2865, %v2866
      %v2868 = vrot.slane %v2866, 4
      %v2869 = vrot.slane %v2056, 5
      %v2870 = vsel %vm1270, %v2868, %v2869
      %v2871 = vrot.slane %v2771, 5
      %v2872 = vrot.slane %v2871, 4
      %v2873 = vrot.slane %v2058, 5
      %v2874 = vsel %vm1270, %v2872, %v2873
      %v2875 = vrot.slane %v2873, 4
      %v2876 = vrot.slane %v2059, 5
      %v2877 = vsel %vm1270, %v2875, %v2876
      %v2878 = vrot.slane %v2772, 5
      %v2879 = vrot.slane %v2878, 4
      %v2880 = vrot.slane %v2061, 5
      %v2881 = vsel %vm1270, %v2879, %v2880
      %v2882 = vrot.slane %v2880, 4
      %v2883 = vrot.slane %v2062, 5
      %v2884 = vsel %vm1270, %v2882, %v2883
      %v2885 = vrot.slane %v2773, 5
      %v2886 = vrot.slane %v2885, 4
      %v2887 = vrot.slane %v2064, 5
      %v2888 = vsel %vm1270, %v2886, %v2887
      %v2889 = vrot.slane %v2887, 4
      %v2890 = vrot.slane %v2065, 5
      %v2891 = vsel %vm1270, %v2889, %v2890
      %v2892 = vrot.slane %v2774, 5
      %v2893 = vrot.slane %v2892, 4
      %v2894 = vrot.slane %v2067, 5
      %v2895 = vsel %vm1270, %v2893, %v2894
      %v2896 = vrot.slane %v2894, 4
      %v2897 = vrot.slane %v2068, 5
      %v2898 = vsel %vm1270, %v2896, %v2897
      %v2899 = vrot.slane %v2775, 5
      %v2900 = vrot.slane %v2899, 4
      %v2901 = vrot.slane %v2070, 5
      %v2902 = vsel %vm1270, %v2900, %v2901
      %v2903 = vrot.slane %v2901, 4
      %v2904 = vrot.slane %v2071, 5
      %v2905 = vsel %vm1270, %v2903, %v2904
      %v2906 = vrot.slane %v2776, 5
      %v2907 = vrot.slane %v2906, 4
      %v2908 = vrot.slane %v2073, 5
      %v2909 = vsel %vm1270, %v2907, %v2908
      %v2910 = vrot.slane %v2908, 4
      %v2911 = vrot.slane %v2074, 5
      %v2912 = vsel %vm1270, %v2910, %v2911
      %v2913 = vrot.slane %v2777, 5
      %v2914 = vrot.slane %v2913, 4
      %v2915 = vrot.slane %v2076, 5
      %v2916 = vsel %vm1270, %v2914, %v2915
      %v2917 = vrot.slane %v2915, 4
      %v2918 = vrot.slane %v2077, 5
      %v2919 = vsel %vm1270, %v2917, %v2918
      %v2920 = vrot.slane %v2778, 5
      %v2921 = vrot.slane %v2920, 4
      %v2922 = vrot.slane %v2079, 5
      %v2923 = vsel %vm1270, %v2921, %v2922
      %v2924 = vrot.slane %v2922, 4
      %v2925 = vrot.slane %v2080, 5
      %v2926 = vsel %vm1270, %v2924, %v2925
      %v2927 = vrot.slane %v2779, 5
      %v2928 = vrot.slane %v2927, 4
      %v2929 = vrot.slane %v2082, 5
      %v2930 = vsel %vm1270, %v2928, %v2929
      %v2931 = vrot.slane %v2929, 4
      %v2932 = vrot.slane %v2083, 5
      %v2933 = vsel %vm1270, %v2931, %v2932
      %v2934 = vrot.slane %v2780, 5
      %v2935 = vrot.slane %v2934, 4
      %v2936 = vrot.slane %v2085, 5
      %v2937 = vsel %vm1270, %v2935, %v2936
      %v2938 = vrot.slane %v2936, 4
      %v2939 = vrot.slane %v2086, 5
      %v2940 = vsel %vm1270, %v2938, %v2939
      %s2941 = scalar_lea.vmem %s1, 10
      %v2942 = vld [vmem:[%s2941] sm:$0x3]
      %v2943 = vunpack.c.l.b16 %v2832
      %v2944 = vunpack.c.l.b16 %v2835
      %v2945 = vunpack.c.l.b16 %v2839
      %v2946 = vunpack.c.l.b16 %v2842
      %v2947 = vunpack.c.l.b16 %v2846
      %v2948 = vunpack.c.l.b16 %v2849
      %v2949 = vunpack.c.l.b16 %v2853
      %v2950 = vunpack.c.l.b16 %v2856
      %v2951 = vunpack.c.l.b16 %v2860
      %v2952 = vunpack.c.l.b16 %v2863
      %v2953 = vunpack.c.l.b16 %v2867
      %v2954 = vunpack.c.l.b16 %v2870
      %v2955 = vunpack.c.l.b16 %v2874
      %v2956 = vunpack.c.l.b16 %v2877
      %v2957 = vunpack.c.l.b16 %v2881
      %v2958 = vunpack.c.l.b16 %v2884
      %v2959 = vunpack.c.l.b16 %v2888
      %v2960 = vunpack.c.l.b16 %v2891
      %v2961 = vunpack.c.l.b16 %v2895
      %v2962 = vunpack.c.l.b16 %v2898
      %v2963 = vunpack.c.l.b16 %v2902
      %v2964 = vunpack.c.l.b16 %v2905
      %v2965 = vunpack.c.l.b16 %v2909
      %v2966 = vunpack.c.l.b16 %v2912
      %v2967 = vunpack.c.l.b16 %v2916
      %v2968 = vunpack.c.l.b16 %v2919
      %v2969 = vunpack.c.l.b16 %v2923
      %v2970 = vunpack.c.l.b16 %v2926
      %v2971 = vunpack.c.l.b16 %v2930
      %v2972 = vunpack.c.l.b16 %v2933
      %v2973 = vunpack.c.l.b16 %v2937
      %v2974 = vunpack.c.l.b16 %v2940
      %v2975 = vpack.c.b16 %v2944, %v2943
      %v2976 = vpack.c.b16 %v2946, %v2945
      %v2977 = vpack.c.b16 %v2948, %v2947
      %v2978 = vpack.c.b16 %v2950, %v2949
      %v2979 = vpack.c.b16 %v2952, %v2951
      %v2980 = vpack.c.b16 %v2954, %v2953
      %v2981 = vpack.c.b16 %v2956, %v2955
      %v2982 = vpack.c.b16 %v2958, %v2957
      %v2983 = vpack.c.b16 %v2960, %v2959
      %v2984 = vpack.c.b16 %v2962, %v2961
      %v2985 = vpack.c.b16 %v2964, %v2963
      %v2986 = vpack.c.b16 %v2966, %v2965
      %v2987 = vpack.c.b16 %v2968, %v2967
      %v2988 = vpack.c.b16 %v2970, %v2969
      %v2989 = vpack.c.b16 %v2972, %v2971
      %v2990 = vpack.c.b16 %v2974, %v2973
      %v2992 = vsel %vm714, %v2975, 0
      %v2995 = vsel %vm714, %v2976, 0
      %v2998 = vsel %vm714, %v2977, 0
      %v3001 = vsel %vm714, %v2978, 0
      %v3004 = vsel %vm714, %v2979, 0
      %v3007 = vsel %vm714, %v2980, 0
      %v3010 = vsel %vm714, %v2981, 0
      %v3013 = vsel %vm714, %v2982, 0
      %v3016 = vsel %vm714, %v2983, 0
      %v3019 = vsel %vm714, %v2984, 0
      %v3022 = vsel %vm714, %v2985, 0
      %v3025 = vsel %vm714, %v2986, 0
      %v3028 = vsel %vm714, %v2987, 0
      %v3031 = vsel %vm714, %v2988, 0
      %v3034 = vsel %vm714, %v2989, 0
      %v3037 = vsel %vm714, %v2990, 0
      %v3040 = vsel %vm763, %v2942, 0
      %3042 = vmatprep.subr.bf16.mxu0 0
      %3043 = vmatpush1.bf16.msra.mxu0 %v3040
      %3044 = vmatprep.subr.bf16.mxu0 0
      %3045 = vmatpush1.bf16.msra.mxu0 0
      %3046 = vmatprep.subr.bf16.mxu0 0
      %3047 = vmatpush1.bf16.msra.mxu0 0
      %3048 = vmatprep.subr.bf16.mxu0 0
      %3049 = vmatpush1.bf16.msra.mxu0 0
      %3050 = vmatprep.subr.bf16.mxu0 0
      %3051 = vmatpush1.bf16.msra.mxu0 0
      %3052 = vmatprep.subr.bf16.mxu0 0
      %3053 = vmatpush1.bf16.msra.mxu0 0
      %3054 = vmatprep.subr.bf16.mxu0 0
      %3055 = vmatpush1.bf16.msra.mxu0 0
      %3056 = vmatprep.subr.bf16.mxu0 0
      %3057 = vmatpush1.bf16.msra.mxu0 0
      %3058 = vmatprep.subr.bf16.mxu0 0
      %3059 = vmatpush1.bf16.msra.mxu0 0
      %3060 = vmatprep.subr.bf16.mxu0 0
      %3061 = vmatpush1.bf16.msra.mxu0 0
      %3062 = vmatprep.subr.bf16.mxu0 0
      %3063 = vmatpush1.bf16.msra.mxu0 0
      %3064 = vmatprep.subr.bf16.mxu0 0
      %3065 = vmatpush1.bf16.msra.mxu0 0
      %3066 = vmatprep.subr.bf16.mxu0 0
      %3067 = vmatpush1.bf16.msra.mxu0 0
      %3068 = vmatprep.subr.bf16.mxu0 0
      %3069 = vmatpush1.bf16.msra.mxu0 0
      %3070 = vmatprep.subr.bf16.mxu0 0
      %3071 = vmatpush1.bf16.msra.mxu0 0
      %3072 = vmatprep.subr.bf16.mxu0 0
      %3073 = vmatpush1.bf16.msra.mxu0 0
      %3074 = vmatprep.mubr.bf16.mxu0 0
      %3075 = vmatmul.mubr.bf16.gmra.mrb[0].mxu0 %v2992
      %v3076 = vpop.f32.mrb[0].mxu0
      %v3077 = vadd.f32 0.0, %v3076
      %v3078 = vpop.f32.mrb[0].mxu0
      %v3079 = vpop.f32.mrb[0].mxu0
      %v3080 = vadd.f32 0.0, %v3079
      %v3081 = vpop.f32.mrb[0].mxu0
      %3082 = vmatprep.mubr.bf16.mxu0 0
      %3083 = vmatmul.mubr.bf16.gmra.mrb[0].mxu0 %v2995
      %v3084 = vpop.f32.mrb[0].mxu0
      %v3085 = vadd.f32 0.0, %v3084
      %v3086 = vpop.f32.mrb[0].mxu0
      %v3087 = vpop.f32.mrb[0].mxu0
      %v3088 = vadd.f32 0.0, %v3087
      %v3089 = vpop.f32.mrb[0].mxu0
      %3090 = vmatprep.mubr.bf16.mxu0 0
      %3091 = vmatmul.mubr.bf16.gmra.mrb[0].mxu0 %v2998
      %v3092 = vpop.f32.mrb[0].mxu0
      %v3093 = vadd.f32 0.0, %v3092
      %v3094 = vpop.f32.mrb[0].mxu0
      %v3095 = vpop.f32.mrb[0].mxu0
      %v3096 = vadd.f32 0.0, %v3095
      %v3097 = vpop.f32.mrb[0].mxu0
      %3098 = vmatprep.mubr.bf16.mxu0 0
      %3099 = vmatmul.mubr.bf16.gmra.mrb[0].mxu0 %v3001
      %v3100 = vpop.f32.mrb[0].mxu0
      %v3101 = vadd.f32 0.0, %v3100
      %v3102 = vpop.f32.mrb[0].mxu0
      %v3103 = vpop.f32.mrb[0].mxu0
      %v3104 = vadd.f32 0.0, %v3103
      %v3105 = vpop.f32.mrb[0].mxu0
      %3106 = vmatprep.mubr.bf16.mxu0 0
      %3107 = vmatmul.mubr.bf16.gmra.mrb[0].mxu0 %v3004
      %v3108 = vpop.f32.mrb[0].mxu0
      %v3109 = vadd.f32 0.0, %v3108
      %v3110 = vpop.f32.mrb[0].mxu0
      %v3111 = vpop.f32.mrb[0].mxu0
      %v3112 = vadd.f32 0.0, %v3111
      %v3113 = vpop.f32.mrb[0].mxu0
      %3114 = vmatprep.mubr.bf16.mxu0 0
      %3115 = vmatmul.mubr.bf16.gmra.mrb[0].mxu0 %v3007
      %v3116 = vpop.f32.mrb[0].mxu0
      %v3117 = vadd.f32 0.0, %v3116
      %v3118 = vpop.f32.mrb[0].mxu0
      %v3119 = vpop.f32.mrb[0].mxu0
      %v3120 = vadd.f32 0.0, %v3119
      %v3121 = vpop.f32.mrb[0].mxu0
      %3122 = vmatprep.mubr.bf16.mxu0 0
      %3123 = vmatmul.mubr.bf16.gmra.mrb[0].mxu0 %v3010
      %v3124 = vpop.f32.mrb[0].mxu0
      %v3125 = vadd.f32 0.0, %v3124
      %v3126 = vpop.f32.mrb[0].mxu0
      %v3127 = vpop.f32.mrb[0].mxu0
      %v3128 = vadd.f32 0.0, %v3127
      %v3129 = vpop.f32.mrb[0].mxu0
      %3130 = vmatprep.mubr.bf16.mxu0 0
      %3131 = vmatmul.mubr.bf16.gmra.mrb[0].mxu0 %v3013
      %v3132 = vpop.f32.mrb[0].mxu0
      %v3133 = vadd.f32 0.0, %v3132
      %v3134 = vpop.f32.mrb[0].mxu0
      %v3135 = vpop.f32.mrb[0].mxu0
      %v3136 = vadd.f32 0.0, %v3135
      %v3137 = vpop.f32.mrb[0].mxu0
      %3138 = vmatprep.mubr.bf16.mxu0 0
      %3139 = vmatmul.mubr.bf16.gmra.mrb[0].mxu0 %v3016
      %v3140 = vpop.f32.mrb[0].mxu0
      %v3141 = vadd.f32 0.0, %v3140
      %v3142 = vpop.f32.mrb[0].mxu0
      %v3143 = vpop.f32.mrb[0].mxu0
      %v3144 = vadd.f32 0.0, %v3143
      %v3145 = vpop.f32.mrb[0].mxu0
      %3146 = vmatprep.mubr.bf16.mxu0 0
      %3147 = vmatmul.mubr.bf16.gmra.mrb[0].mxu0 %v3019
      %v3148 = vpop.f32.mrb[0].mxu0
      %v3149 = vadd.f32 0.0, %v3148
      %v3150 = vpop.f32.mrb[0].mxu0
      %v3151 = vpop.f32.mrb[0].mxu0
      %v3152 = vadd.f32 0.0, %v3151
      %v3153 = vpop.f32.mrb[0].mxu0
      %3154 = vmatprep.mubr.bf16.mxu0 0
      %3155 = vmatmul.mubr.bf16.gmra.mrb[0].mxu0 %v3022
      %v3156 = vpop.f32.mrb[0].mxu0
      %v3157 = vadd.f32 0.0, %v3156
      %v3158 = vpop.f32.mrb[0].mxu0
      %v3159 = vpop.f32.mrb[0].mxu0
      %v3160 = vadd.f32 0.0, %v3159
      %v3161 = vpop.f32.mrb[0].mxu0
      %3162 = vmatprep.mubr.bf16.mxu0 0
      %3163 = vmatmul.mubr.bf16.gmra.mrb[0].mxu0 %v3025
      %v3164 = vpop.f32.mrb[0].mxu0
      %v3165 = vadd.f32 0.0, %v3164
      %v3166 = vpop.f32.mrb[0].mxu0
      %v3167 = vpop.f32.mrb[0].mxu0
      %v3168 = vadd.f32 0.0, %v3167
      %v3169 = vpop.f32.mrb[0].mxu0
      %3170 = vmatprep.mubr.bf16.mxu0 0
      %3171 = vmatmul.mubr.bf16.gmra.mrb[0].mxu0 %v3028
      %v3172 = vpop.f32.mrb[0].mxu0
      %v3173 = vadd.f32 0.0, %v3172
      %v3174 = vpop.f32.mrb[0].mxu0
      %v3175 = vpop.f32.mrb[0].mxu0
      %v3176 = vadd.f32 0.0, %v3175
      %v3177 = vpop.f32.mrb[0].mxu0
      %3178 = vmatprep.mubr.bf16.mxu0 0
      %3179 = vmatmul.mubr.bf16.gmra.mrb[0].mxu0 %v3031
      %v3180 = vpop.f32.mrb[0].mxu0
      %v3181 = vadd.f32 0.0, %v3180
      %v3182 = vpop.f32.mrb[0].mxu0
      %v3183 = vpop.f32.mrb[0].mxu0
      %v3184 = vadd.f32 0.0, %v3183
      %v3185 = vpop.f32.mrb[0].mxu0
      %3186 = vmatprep.mubr.bf16.mxu0 0
      %3187 = vmatmul.mubr.bf16.gmra.mrb[0].mxu0 %v3034
      %v3188 = vpop.f32.mrb[0].mxu0
      %v3189 = vadd.f32 0.0, %v3188
      %v3190 = vpop.f32.mrb[0].mxu0
      %v3191 = vpop.f32.mrb[0].mxu0
      %v3192 = vadd.f32 0.0, %v3191
      %v3193 = vpop.f32.mrb[0].mxu0
      %3194 = vmatprep.mubr.bf16.mxu0 0
      %3195 = vmatmul.mubr.bf16.gmra.mrb[0].mxu0 %v3037
      %v3196 = vpop.f32.mrb[0].mxu0
      %v3197 = vadd.f32 0.0, %v3196
      %v3198 = vpop.f32.mrb[0].mxu0
      %v3199 = vpop.f32.mrb[0].mxu0
      %v3200 = vadd.f32 0.0, %v3199
      %v3201 = vpop.f32.mrb[0].mxu0
      %3202 = vdwg.mxu0
      %v3203 = vadd.f32 %v2733, %v3077
      %v3204 = vadd.f32 %v2734, %v3080
      %v3205 = vadd.f32 %v2735, %v3085
      %v3206 = vadd.f32 %v2736, %v3088
      %v3207 = vadd.f32 %v2737, %v3093
      %v3208 = vadd.f32 %v2738, %v3096
      %v3209 = vadd.f32 %v2739, %v3101
      %v3210 = vadd.f32 %v2740, %v3104
      %v3211 = vadd.f32 %v2741, %v3109
      %v3212 = vadd.f32 %v2742, %v3112
      %v3213 = vadd.f32 %v2743, %v3117
      %v3214 = vadd.f32 %v2744, %v3120
      %v3215 = vadd.f32 %v2745, %v3125
      %v3216 = vadd.f32 %v2746, %v3128
      %v3217 = vadd.f32 %v2747, %v3133
      %v3218 = vadd.f32 %v2748, %v3136
      %v3219 = vadd.f32 %v2749, %v3141
      %v3220 = vadd.f32 %v2750, %v3144
      %v3221 = vadd.f32 %v2751, %v3149
      %v3222 = vadd.f32 %v2752, %v3152
      %v3223 = vadd.f32 %v2753, %v3157
      %v3224 = vadd.f32 %v2754, %v3160
      %v3225 = vadd.f32 %v2755, %v3165
      %v3226 = vadd.f32 %v2756, %v3168
      %v3227 = vadd.f32 %v2757, %v3173
      %v3228 = vadd.f32 %v2758, %v3176
      %v3229 = vadd.f32 %v2759, %v3181
      %v3230 = vadd.f32 %v2760, %v3184
      %v3231 = vadd.f32 %v2761, %v3189
      %v3232 = vadd.f32 %v2762, %v3192
      %v3233 = vadd.f32 %v2763, %v3197
      %v3234 = vadd.f32 %v2764, %v3200
      %s3235 = sadd.s32 %s224, 2
      %s3236 = smul.u32 %s3235, 3
      %s3237 = smul.addr %s3236, 4
      %s3238 = scalar_lea.vmem %s211, %s3237
      %v3239 = vld [vmem:[%s3238] sm:$0xf]
      %v3240 = vld [vmem:[%s3238 + $0x4] sm:$0xf]
      %v3241 = vld [vmem:[%s3238 + $0xc] sm:$0xf]
      %v3242 = vld [vmem:[%s3238 + $0x10] sm:$0xf]
      %v3243 = vld [vmem:[%s3238 + $0x18] sm:$0xf]
      %v3244 = vld [vmem:[%s3238 + $0x1c] sm:$0xf]
      %v3245 = vld [vmem:[%s3238 + $0x24] sm:$0xf]
      %v3246 = vld [vmem:[%s3238 + $0x28] sm:$0xf]
      %v3247 = vld [vmem:[%s3238 + $0x30] sm:$0xf]
      %v3248 = vld [vmem:[%s3238 + $0x34] sm:$0xf]
      %v3249 = vld [vmem:[%s3238 + $0x3c] sm:$0xf]
      %v3250 = vld [vmem:[%s3238 + $0x40] sm:$0xf]
      %v3251 = vld [vmem:[%s3238 + $0x48] sm:$0xf]
      %v3252 = vld [vmem:[%s3238 + $0x4c] sm:$0xf]
      %v3253 = vld [vmem:[%s3238 + $0x54] sm:$0xf]
      %v3254 = vld [vmem:[%s3238 + $0x58] sm:$0xf]
      %v3255 = vld [vmem:[%s3238 + $0x60] sm:$0xf]
      %v3256 = vld [vmem:[%s3238 + $0x64] sm:$0xf]
      %v3257 = vld [vmem:[%s3238 + $0x6c] sm:$0xf]
      %v3258 = vld [vmem:[%s3238 + $0x70] sm:$0xf]
      %v3259 = vld [vmem:[%s3238 + $0x78] sm:$0xf]
      %v3260 = vld [vmem:[%s3238 + $0x7c] sm:$0xf]
      %v3261 = vld [vmem:[%s3238 + $0x84] sm:$0xf]
      %v3262 = vld [vmem:[%s3238 + $0x88] sm:$0xf]
      %v3263 = vld [vmem:[%s3238 + $0x90] sm:$0xf]
      %v3264 = vld [vmem:[%s3238 + $0x94] sm:$0xf]
      %v3265 = vld [vmem:[%s3238 + $0x9c] sm:$0xf]
      %v3266 = vld [vmem:[%s3238 + $0xa0] sm:$0xf]
      %v3267 = vld [vmem:[%s3238 + $0xa8] sm:$0xf]
      %v3268 = vld [vmem:[%s3238 + $0xac] sm:$0xf]
      %v3269 = vld [vmem:[%s3238 + $0xb4] sm:$0xf]
      %v3270 = vld [vmem:[%s3238 + $0xb8] sm:$0xf]
      %s3271 = scalar_lea.vmem %s1, 12
      %v3272 = vld [vmem:[%s3271] sm:$0x3]
      %v3305 = vunpack.c.l.b16 %v3239
      %v3306 = vunpack.c.l.b16 %v3240
      %v3307 = vunpack.c.l.b16 %v3241
      %v3308 = vunpack.c.l.b16 %v3242
      %v3309 = vunpack.c.l.b16 %v3243
      %v3310 = vunpack.c.l.b16 %v3244
      %v3311 = vunpack.c.l.b16 %v3245
      %v3312 = vunpack.c.l.b16 %v3246
      %v3313 = vunpack.c.l.b16 %v3247
      %v3314 = vunpack.c.l.b16 %v3248
      %v3315 = vunpack.c.l.b16 %v3249
      %v3316 = vunpack.c.l.b16 %v3250
      %v3317 = vunpack.c.l.b16 %v3251
      %v3318 = vunpack.c.l.b16 %v3252
      %v3319 = vunpack.c.l.b16 %v3253
      %v3320 = vunpack.c.l.b16 %v3254
      %v3321 = vunpack.c.l.b16 %v3255
      %v3322 = vunpack.c.l.b16 %v3256
      %v3323 = vunpack.c.l.b16 %v3257
      %v3324 = vunpack.c.l.b16 %v3258
      %v3325 = vunpack.c.l.b16 %v3259
      %v3326 = vunpack.c.l.b16 %v3260
      %v3327 = vunpack.c.l.b16 %v3261
      %v3328 = vunpack.c.l.b16 %v3262
      %v3329 = vunpack.c.l.b16 %v3263
      %v3330 = vunpack.c.l.b16 %v3264
      %v3331 = vunpack.c.l.b16 %v3265
      %v3332 = vunpack.c.l.b16 %v3266
      %v3333 = vunpack.c.l.b16 %v3267
      %v3334 = vunpack.c.l.b16 %v3268
      %v3335 = vunpack.c.l.b16 %v3269
      %v3336 = vunpack.c.l.b16 %v3270
      %v3337 = vpack.c.b16 %v3306, %v3305
      %v3338 = vpack.c.b16 %v3308, %v3307
      %v3339 = vpack.c.b16 %v3310, %v3309
      %v3340 = vpack.c.b16 %v3312, %v3311
      %v3341 = vpack.c.b16 %v3314, %v3313
      %v3342 = vpack.c.b16 %v3316, %v3315
      %v3343 = vpack.c.b16 %v3318, %v3317
      %v3344 = vpack.c.b16 %v3320, %v3319
      %v3345 = vpack.c.b16 %v3322, %v3321
      %v3346 = vpack.c.b16 %v3324, %v3323
      %v3347 = vpack.c.b16 %v3326, %v3325
      %v3348 = vpack.c.b16 %v3328, %v3327
      %v3349 = vpack.c.b16 %v3330, %v3329
      %v3350 = vpack.c.b16 %v3332, %v3331
      %v3351 = vpack.c.b16 %v3334, %v3333
      %v3352 = vpack.c.b16 %v3336, %v3335
      %v3354 = vsel %vm714, %v3337, 0
      %v3357 = vsel %vm714, %v3338, 0
      %v3360 = vsel %vm714, %v3339, 0
      %v3363 = vsel %vm714, %v3340, 0
      %v3366 = vsel %vm714, %v3341, 0
      %v3369 = vsel %vm714, %v3342, 0
      %v3372 = vsel %vm714, %v3343, 0
      %v3375 = vsel %vm714, %v3344, 0
      %v3378 = vsel %vm714, %v3345, 0
      %v3381 = vsel %vm714, %v3346, 0
      %v3384 = vsel %vm714, %v3347, 0
      %v3387 = vsel %vm714, %v3348, 0
      %v3390 = vsel %vm714, %v3349, 0
      %v3393 = vsel %vm714, %v3350, 0
      %v3396 = vsel %vm714, %v3351, 0
      %v3399 = vsel %vm714, %v3352, 0
      %v3402 = vsel %vm763, %v3272, 0
      %3404 = vmatprep.subr.bf16.mxu0 0
      %3405 = vmatpush1.bf16.msra.mxu0 %v3402
      %3406 = vmatprep.subr.bf16.mxu0 0
      %3407 = vmatpush1.bf16.msra.mxu0 0
      %3408 = vmatprep.subr.bf16.mxu0 0
      %3409 = vmatpush1.bf16.msra.mxu0 0
      %3410 = vmatprep.subr.bf16.mxu0 0
      %3411 = vmatpush1.bf16.msra.mxu0 0
      %3412 = vmatprep.subr.bf16.mxu0 0
      %3413 = vmatpush1.bf16.msra.mxu0 0
      %3414 = vmatprep.subr.bf16.mxu0 0
      %3415 = vmatpush1.bf16.msra.mxu0 0
      %3416 = vmatprep.subr.bf16.mxu0 0
      %3417 = vmatpush1.bf16.msra.mxu0 0
      %3418 = vmatprep.subr.bf16.mxu0 0
      %3419 = vmatpush1.bf16.msra.mxu0 0
      %3420 = vmatprep.subr.bf16.mxu0 0
      %3421 = vmatpush1.bf16.msra.mxu0 0
      %3422 = vmatprep.subr.bf16.mxu0 0
      %3423 = vmatpush1.bf16.msra.mxu0 0
      %3424 = vmatprep.subr.bf16.mxu0 0
      %3425 = vmatpush1.bf16.msra.mxu0 0
      %3426 = vmatprep.subr.bf16.mxu0 0
      %3427 = vmatpush1.bf16.msra.mxu0 0
      %3428 = vmatprep.subr.bf16.mxu0 0
      %3429 = vmatpush1.bf16.msra.mxu0 0
      %3430 = vmatprep.subr.bf16.mxu0 0
      %3431 = vmatpush1.bf16.msra.mxu0 0
      %3432 = vmatprep.subr.bf16.mxu0 0
      %3433 = vmatpush1.bf16.msra.mxu0 0
      %3434 = vmatprep.subr.bf16.mxu0 0
      %3435 = vmatpush1.bf16.msra.mxu0 0
      %3436 = vmatprep.mubr.bf16.mxu0 0
      %3437 = vmatmul.mubr.bf16.gmra.mrb[0].mxu0 %v3354
      %v3438 = vpop.f32.mrb[0].mxu0
      %v3439 = vadd.f32 0.0, %v3438
      %v3440 = vpop.f32.mrb[0].mxu0
      %v3441 = vpop.f32.mrb[0].mxu0
      %v3442 = vadd.f32 0.0, %v3441
      %v3443 = vpop.f32.mrb[0].mxu0
      %3444 = vmatprep.mubr.bf16.mxu0 0
      %3445 = vmatmul.mubr.bf16.gmra.mrb[0].mxu0 %v3357
      %v3446 = vpop.f32.mrb[0].mxu0
      %v3447 = vadd.f32 0.0, %v3446
      %v3448 = vpop.f32.mrb[0].mxu0
      %v3449 = vpop.f32.mrb[0].mxu0
      %v3450 = vadd.f32 0.0, %v3449
      %v3451 = vpop.f32.mrb[0].mxu0
      %3452 = vmatprep.mubr.bf16.mxu0 0
      %3453 = vmatmul.mubr.bf16.gmra.mrb[0].mxu0 %v3360
      %v3454 = vpop.f32.mrb[0].mxu0
      %v3455 = vadd.f32 0.0, %v3454
      %v3456 = vpop.f32.mrb[0].mxu0
      %v3457 = vpop.f32.mrb[0].mxu0
      %v3458 = vadd.f32 0.0, %v3457
      %v3459 = vpop.f32.mrb[0].mxu0
      %3460 = vmatprep.mubr.bf16.mxu0 0
      %3461 = vmatmul.mubr.bf16.gmra.mrb[0].mxu0 %v3363
      %v3462 = vpop.f32.mrb[0].mxu0
      %v3463 = vadd.f32 0.0, %v3462
      %v3464 = vpop.f32.mrb[0].mxu0
      %v3465 = vpop.f32.mrb[0].mxu0
      %v3466 = vadd.f32 0.0, %v3465
      %v3467 = vpop.f32.mrb[0].mxu0
      %3468 = vmatprep.mubr.bf16.mxu0 0
      %3469 = vmatmul.mubr.bf16.gmra.mrb[0].mxu0 %v3366
      %v3470 = vpop.f32.mrb[0].mxu0
      %v3471 = vadd.f32 0.0, %v3470
      %v3472 = vpop.f32.mrb[0].mxu0
      %v3473 = vpop.f32.mrb[0].mxu0
      %v3474 = vadd.f32 0.0, %v3473
      %v3475 = vpop.f32.mrb[0].mxu0
      %3476 = vmatprep.mubr.bf16.mxu0 0
      %3477 = vmatmul.mubr.bf16.gmra.mrb[0].mxu0 %v3369
      %v3478 = vpop.f32.mrb[0].mxu0
      %v3479 = vadd.f32 0.0, %v3478
      %v3480 = vpop.f32.mrb[0].mxu0
      %v3481 = vpop.f32.mrb[0].mxu0
      %v3482 = vadd.f32 0.0, %v3481
      %v3483 = vpop.f32.mrb[0].mxu0
      %3484 = vmatprep.mubr.bf16.mxu0 0
      %3485 = vmatmul.mubr.bf16.gmra.mrb[0].mxu0 %v3372
      %v3486 = vpop.f32.mrb[0].mxu0
      %v3487 = vadd.f32 0.0, %v3486
      %v3488 = vpop.f32.mrb[0].mxu0
      %v3489 = vpop.f32.mrb[0].mxu0
      %v3490 = vadd.f32 0.0, %v3489
      %v3491 = vpop.f32.mrb[0].mxu0
      %3492 = vmatprep.mubr.bf16.mxu0 0
      %3493 = vmatmul.mubr.bf16.gmra.mrb[0].mxu0 %v3375
      %v3494 = vpop.f32.mrb[0].mxu0
      %v3495 = vadd.f32 0.0, %v3494
      %v3496 = vpop.f32.mrb[0].mxu0
      %v3497 = vpop.f32.mrb[0].mxu0
      %v3498 = vadd.f32 0.0, %v3497
      %v3499 = vpop.f32.mrb[0].mxu0
      %3500 = vmatprep.mubr.bf16.mxu0 0
      %3501 = vmatmul.mubr.bf16.gmra.mrb[0].mxu0 %v3378
      %v3502 = vpop.f32.mrb[0].mxu0
      %v3503 = vadd.f32 0.0, %v3502
      %v3504 = vpop.f32.mrb[0].mxu0
      %v3505 = vpop.f32.mrb[0].mxu0
      %v3506 = vadd.f32 0.0, %v3505
      %v3507 = vpop.f32.mrb[0].mxu0
      %3508 = vmatprep.mubr.bf16.mxu0 0
      %3509 = vmatmul.mubr.bf16.gmra.mrb[0].mxu0 %v3381
      %v3510 = vpop.f32.mrb[0].mxu0
      %v3511 = vadd.f32 0.0, %v3510
      %v3512 = vpop.f32.mrb[0].mxu0
      %v3513 = vpop.f32.mrb[0].mxu0
      %v3514 = vadd.f32 0.0, %v3513
      %v3515 = vpop.f32.mrb[0].mxu0
      %3516 = vmatprep.mubr.bf16.mxu0 0
      %3517 = vmatmul.mubr.bf16.gmra.mrb[0].mxu0 %v3384
      %v3518 = vpop.f32.mrb[0].mxu0
      %v3519 = vadd.f32 0.0, %v3518
      %v3520 = vpop.f32.mrb[0].mxu0
      %v3521 = vpop.f32.mrb[0].mxu0
      %v3522 = vadd.f32 0.0, %v3521
      %v3523 = vpop.f32.mrb[0].mxu0
      %3524 = vmatprep.mubr.bf16.mxu0 0
      %3525 = vmatmul.mubr.bf16.gmra.mrb[0].mxu0 %v3387
      %v3526 = vpop.f32.mrb[0].mxu0
      %v3527 = vadd.f32 0.0, %v3526
      %v3528 = vpop.f32.mrb[0].mxu0
      %v3529 = vpop.f32.mrb[0].mxu0
      %v3530 = vadd.f32 0.0, %v3529
      %v3531 = vpop.f32.mrb[0].mxu0
      %3532 = vmatprep.mubr.bf16.mxu0 0
      %3533 = vmatmul.mubr.bf16.gmra.mrb[0].mxu0 %v3390
      %v3534 = vpop.f32.mrb[0].mxu0
      %v3535 = vadd.f32 0.0, %v3534
      %v3536 = vpop.f32.mrb[0].mxu0
      %v3537 = vpop.f32.mrb[0].mxu0
      %v3538 = vadd.f32 0.0, %v3537
      %v3539 = vpop.f32.mrb[0].mxu0
      %3540 = vmatprep.mubr.bf16.mxu0 0
      %3541 = vmatmul.mubr.bf16.gmra.mrb[0].mxu0 %v3393
      %v3542 = vpop.f32.mrb[0].mxu0
      %v3543 = vadd.f32 0.0, %v3542
      %v3544 = vpop.f32.mrb[0].mxu0
      %v3545 = vpop.f32.mrb[0].mxu0
      %v3546 = vadd.f32 0.0, %v3545
      %v3547 = vpop.f32.mrb[0].mxu0
      %3548 = vmatprep.mubr.bf16.mxu0 0
      %3549 = vmatmul.mubr.bf16.gmra.mrb[0].mxu0 %v3396
      %v3550 = vpop.f32.mrb[0].mxu0
      %v3551 = vadd.f32 0.0, %v3550
      %v3552 = vpop.f32.mrb[0].mxu0
      %v3553 = vpop.f32.mrb[0].mxu0
      %v3554 = vadd.f32 0.0, %v3553
      %v3555 = vpop.f32.mrb[0].mxu0
      %3556 = vmatprep.mubr.bf16.mxu0 0
      %3557 = vmatmul.mubr.bf16.gmra.mrb[0].mxu0 %v3399
      %v3558 = vpop.f32.mrb[0].mxu0
      %v3559 = vadd.f32 0.0, %v3558
      %v3560 = vpop.f32.mrb[0].mxu0
      %v3561 = vpop.f32.mrb[0].mxu0
      %v3562 = vadd.f32 0.0, %v3561
      %v3563 = vpop.f32.mrb[0].mxu0
      %3564 = vdwg.mxu0
      %v3565 = vadd.f32 %v3203, %v3439
      %v3566 = vadd.f32 %v3204, %v3442
      %v3567 = vadd.f32 %v3205, %v3447
      %v3568 = vadd.f32 %v3206, %v3450
      %v3569 = vadd.f32 %v3207, %v3455
      %v3570 = vadd.f32 %v3208, %v3458
      %v3571 = vadd.f32 %v3209, %v3463
      %v3572 = vadd.f32 %v3210, %v3466
      %v3573 = vadd.f32 %v3211, %v3471
      %v3574 = vadd.f32 %v3212, %v3474
      %v3575 = vadd.f32 %v3213, %v3479
      %v3576 = vadd.f32 %v3214, %v3482
      %v3577 = vadd.f32 %v3215, %v3487
      %v3578 = vadd.f32 %v3216, %v3490
      %v3579 = vadd.f32 %v3217, %v3495
      %v3580 = vadd.f32 %v3218, %v3498
      %v3581 = vadd.f32 %v3219, %v3503
      %v3582 = vadd.f32 %v3220, %v3506
      %v3583 = vadd.f32 %v3221, %v3511
      %v3584 = vadd.f32 %v3222, %v3514
      %v3585 = vadd.f32 %v3223, %v3519
      %v3586 = vadd.f32 %v3224, %v3522
      %v3587 = vadd.f32 %v3225, %v3527
      %v3588 = vadd.f32 %v3226, %v3530
      %v3589 = vadd.f32 %v3227, %v3535
      %v3590 = vadd.f32 %v3228, %v3538
      %v3591 = vadd.f32 %v3229, %v3543
      %v3592 = vadd.f32 %v3230, %v3546
      %v3593 = vadd.f32 %v3231, %v3551
      %v3594 = vadd.f32 %v3232, %v3554
      %v3595 = vadd.f32 %v3233, %v3559
      %v3596 = vadd.f32 %v3234, %v3562
      %v3597 = vld [vmem:[%s3238] sm:$0xf]
      %v3598 = vld [vmem:[%s3238 + $0x4] sm:$0xf]
      %v3599 = vld [vmem:[%s3238 + $0x8] sm:$0x1]
      %v3600 = vld [vmem:[%s3238 + $0xc] sm:$0xf]
      %v3601 = vld [vmem:[%s3238 + $0x10] sm:$0xf]
      %v3602 = vld [vmem:[%s3238 + $0x14] sm:$0x1]
      %v3603 = vld [vmem:[%s3238 + $0x18] sm:$0xf]
      %v3604 = vld [vmem:[%s3238 + $0x1c] sm:$0xf]
      %v3605 = vld [vmem:[%s3238 + $0x20] sm:$0x1]
      %v3606 = vld [vmem:[%s3238 + $0x24] sm:$0xf]
      %v3607 = vld [vmem:[%s3238 + $0x28] sm:$0xf]
      %v3608 = vld [vmem:[%s3238 + $0x2c] sm:$0x1]
      %v3609 = vld [vmem:[%s3238 + $0x30] sm:$0xf]
      %v3610 = vld [vmem:[%s3238 + $0x34] sm:$0xf]
      %v3611 = vld [vmem:[%s3238 + $0x38] sm:$0x1]
      %v3612 = vld [vmem:[%s3238 + $0x3c] sm:$0xf]
      %v3613 = vld [vmem:[%s3238 + $0x40] sm:$0xf]
      %v3614 = vld [vmem:[%s3238 + $0x44] sm:$0x1]
      %v3615 = vld [vmem:[%s3238 + $0x48] sm:$0xf]
      %v3616 = vld [vmem:[%s3238 + $0x4c] sm:$0xf]
      %v3617 = vld [vmem:[%s3238 + $0x50] sm:$0x1]
      %v3618 = vld [vmem:[%s3238 + $0x54] sm:$0xf]
      %v3619 = vld [vmem:[%s3238 + $0x58] sm:$0xf]
      %v3620 = vld [vmem:[%s3238 + $0x5c] sm:$0x1]
      %v3621 = vld [vmem:[%s3238 + $0x60] sm:$0xf]
      %v3622 = vld [vmem:[%s3238 + $0x64] sm:$0xf]
      %v3623 = vld [vmem:[%s3238 + $0x68] sm:$0x1]
      %v3624 = vld [vmem:[%s3238 + $0x6c] sm:$0xf]
      %v3625 = vld [vmem:[%s3238 + $0x70] sm:$0xf]
      %v3626 = vld [vmem:[%s3238 + $0x74] sm:$0x1]
      %v3627 = vld [vmem:[%s3238 + $0x78] sm:$0xf]
      %v3628 = vld [vmem:[%s3238 + $0x7c] sm:$0xf]
      %v3629 = vld [vmem:[%s3238 + $0x80] sm:$0x1]
      %v3630 = vld [vmem:[%s3238 + $0x84] sm:$0xf]
      %v3631 = vld [vmem:[%s3238 + $0x88] sm:$0xf]
      %v3632 = vld [vmem:[%s3238 + $0x8c] sm:$0x1]
      %v3633 = vld [vmem:[%s3238 + $0x90] sm:$0xf]
      %v3634 = vld [vmem:[%s3238 + $0x94] sm:$0xf]
      %v3635 = vld [vmem:[%s3238 + $0x98] sm:$0x1]
      %v3636 = vld [vmem:[%s3238 + $0x9c] sm:$0xf]
      %v3637 = vld [vmem:[%s3238 + $0xa0] sm:$0xf]
      %v3638 = vld [vmem:[%s3238 + $0xa4] sm:$0x1]
      %v3639 = vld [vmem:[%s3238 + $0xa8] sm:$0xf]
      %v3640 = vld [vmem:[%s3238 + $0xac] sm:$0xf]
      %v3641 = vld [vmem:[%s3238 + $0xb0] sm:$0x1]
      %v3642 = vld [vmem:[%s3238 + $0xb4] sm:$0xf]
      %v3643 = vld [vmem:[%s3238 + $0xb8] sm:$0xf]
      %v3644 = vld [vmem:[%s3238 + $0xbc] sm:$0x1]
      %v3646 = vshrl.u32 %v3597, 16
      %v3648 = vrot.slane %v3646, 4
      %v3649 = vshll.u32 %v3597, 16
      %v3651 = vrot.slane %v3649, 5
      %v3652 = vor.u32 %v3648, %v3651
      %v3653 = vrot.slane %v3652, 4
      %v3655 = vshll.u32 %v3598, 16
      %v3657 = vrot.slane %v3655, 5
      %v3658 = vsel %vm279, %v3653, %v3657
      %v3659 = vshrl.u32 %v3598, 16
      %v3661 = vrot.slane %v3659, 4
      %v3662 = vor.u32 %v3661, %v3657
      %v3663 = vrot.slane %v3662, 4
      %v3665 = vshll.u32 %v3599, 16
      %v3667 = vrot.slane %v3665, 5
      %v3668 = vsel %vm279, %v3663, %v3667
      %v3670 = vshrl.u32 %v3600, 16
      %v3672 = vrot.slane %v3670, 4
      %v3673 = vshll.u32 %v3600, 16
      %v3675 = vrot.slane %v3673, 5
      %v3676 = vor.u32 %v3672, %v3675
      %v3677 = vrot.slane %v3676, 4
      %v3679 = vshll.u32 %v3601, 16
      %v3681 = vrot.slane %v3679, 5
      %v3682 = vsel %vm279, %v3677, %v3681
      %v3683 = vshrl.u32 %v3601, 16
      %v3685 = vrot.slane %v3683, 4
      %v3686 = vor.u32 %v3685, %v3681
      %v3687 = vrot.slane %v3686, 4
      %v3689 = vshll.u32 %v3602, 16
      %v3691 = vrot.slane %v3689, 5
      %v3692 = vsel %vm279, %v3687, %v3691
      %v3694 = vshrl.u32 %v3603, 16
      %v3696 = vrot.slane %v3694, 4
      %v3697 = vshll.u32 %v3603, 16
      %v3699 = vrot.slane %v3697, 5
      %v3700 = vor.u32 %v3696, %v3699
      %v3701 = vrot.slane %v3700, 4
      %v3703 = vshll.u32 %v3604, 16
      %v3705 = vrot.slane %v3703, 5
      %v3706 = vsel %vm279, %v3701, %v3705
      %v3707 = vshrl.u32 %v3604, 16
      %v3709 = vrot.slane %v3707, 4
      %v3710 = vor.u32 %v3709, %v3705
      %v3711 = vrot.slane %v3710, 4
      %v3713 = vshll.u32 %v3605, 16
      %v3715 = vrot.slane %v3713, 5
      %v3716 = vsel %vm279, %v3711, %v3715
      %v3718 = vshrl.u32 %v3606, 16
      %v3720 = vrot.slane %v3718, 4
      %v3721 = vshll.u32 %v3606, 16
      %v3723 = vrot.slane %v3721, 5
      %v3724 = vor.u32 %v3720, %v3723
      %v3725 = vrot.slane %v3724, 4
      %v3727 = vshll.u32 %v3607, 16
      %v3729 = vrot.slane %v3727, 5
      %v3730 = vsel %vm279, %v3725, %v3729
      %v3731 = vshrl.u32 %v3607, 16
      %v3733 = vrot.slane %v3731, 4
      %v3734 = vor.u32 %v3733, %v3729
      %v3735 = vrot.slane %v3734, 4
      %v3737 = vshll.u32 %v3608, 16
      %v3739 = vrot.slane %v3737, 5
      %v3740 = vsel %vm279, %v3735, %v3739
      %v3742 = vshrl.u32 %v3609, 16
      %v3744 = vrot.slane %v3742, 4
      %v3745 = vshll.u32 %v3609, 16
      %v3747 = vrot.slane %v3745, 5
      %v3748 = vor.u32 %v3744, %v3747
      %v3749 = vrot.slane %v3748, 4
      %v3751 = vshll.u32 %v3610, 16
      %v3753 = vrot.slane %v3751, 5
      %v3754 = vsel %vm279, %v3749, %v3753
      %v3755 = vshrl.u32 %v3610, 16
      %v3757 = vrot.slane %v3755, 4
      %v3758 = vor.u32 %v3757, %v3753
      %v3759 = vrot.slane %v3758, 4
      %v3761 = vshll.u32 %v3611, 16
      %v3763 = vrot.slane %v3761, 5
      %v3764 = vsel %vm279, %v3759, %v3763
      %v3766 = vshrl.u32 %v3612, 16
      %v3768 = vrot.slane %v3766, 4
      %v3769 = vshll.u32 %v3612, 16
      %v3771 = vrot.slane %v3769, 5
      %v3772 = vor.u32 %v3768, %v3771
      %v3773 = vrot.slane %v3772, 4
      %v3775 = vshll.u32 %v3613, 16
      %v3777 = vrot.slane %v3775, 5
      %v3778 = vsel %vm279, %v3773, %v3777
      %v3779 = vshrl.u32 %v3613, 16
      %v3781 = vrot.slane %v3779, 4
      %v3782 = vor.u32 %v3781, %v3777
      %v3783 = vrot.slane %v3782, 4
      %v3785 = vshll.u32 %v3614, 16
      %v3787 = vrot.slane %v3785, 5
      %v3788 = vsel %vm279, %v3783, %v3787
      %v3790 = vshrl.u32 %v3615, 16
      %v3792 = vrot.slane %v3790, 4
      %v3793 = vshll.u32 %v3615, 16
      %v3795 = vrot.slane %v3793, 5
      %v3796 = vor.u32 %v3792, %v3795
      %v3797 = vrot.slane %v3796, 4
      %v3799 = vshll.u32 %v3616, 16
      %v3801 = vrot.slane %v3799, 5
      %v3802 = vsel %vm279, %v3797, %v3801
      %v3803 = vshrl.u32 %v3616, 16
      %v3805 = vrot.slane %v3803, 4
      %v3806 = vor.u32 %v3805, %v3801
      %v3807 = vrot.slane %v3806, 4
      %v3809 = vshll.u32 %v3617, 16
      %v3811 = vrot.slane %v3809, 5
      %v3812 = vsel %vm279, %v3807, %v3811
      %v3814 = vshrl.u32 %v3618, 16
      %v3816 = vrot.slane %v3814, 4
      %v3817 = vshll.u32 %v3618, 16
      %v3819 = vrot.slane %v3817, 5
      %v3820 = vor.u32 %v3816, %v3819
      %v3821 = vrot.slane %v3820, 4
      %v3823 = vshll.u32 %v3619, 16
      %v3825 = vrot.slane %v3823, 5
      %v3826 = vsel %vm279, %v3821, %v3825
      %v3827 = vshrl.u32 %v3619, 16
      %v3829 = vrot.slane %v3827, 4
      %v3830 = vor.u32 %v3829, %v3825
      %v3831 = vrot.slane %v3830, 4
      %v3833 = vshll.u32 %v3620, 16
      %v3835 = vrot.slane %v3833, 5
      %v3836 = vsel %vm279, %v3831, %v3835
      %v3838 = vshrl.u32 %v3621, 16
      %v3840 = vrot.slane %v3838, 4
      %v3841 = vshll.u32 %v3621, 16
      %v3843 = vrot.slane %v3841, 5
      %v3844 = vor.u32 %v3840, %v3843
      %v3845 = vrot.slane %v3844, 4
      %v3847 = vshll.u32 %v3622, 16
      %v3849 = vrot.slane %v3847, 5
      %v3850 = vsel %vm279, %v3845, %v3849
      %v3851 = vshrl.u32 %v3622, 16
      %v3853 = vrot.slane %v3851, 4
      %v3854 = vor.u32 %v3853, %v3849
      %v3855 = vrot.slane %v3854, 4
      %v3857 = vshll.u32 %v3623, 16
      %v3859 = vrot.slane %v3857, 5
      %v3860 = vsel %vm279, %v3855, %v3859
      %v3862 = vshrl.u32 %v3624, 16
      %v3864 = vrot.slane %v3862, 4
      %v3865 = vshll.u32 %v3624, 16
      %v3867 = vrot.slane %v3865, 5
      %v3868 = vor.u32 %v3864, %v3867
      %v3869 = vrot.slane %v3868, 4
      %v3871 = vshll.u32 %v3625, 16
      %v3873 = vrot.slane %v3871, 5
      %v3874 = vsel %vm279, %v3869, %v3873
      %v3875 = vshrl.u32 %v3625, 16
      %v3877 = vrot.slane %v3875, 4
      %v3878 = vor.u32 %v3877, %v3873
      %v3879 = vrot.slane %v3878, 4
      %v3881 = vshll.u32 %v3626, 16
      %v3883 = vrot.slane %v3881, 5
      %v3884 = vsel %vm279, %v3879, %v3883
      %v3886 = vshrl.u32 %v3627, 16
      %v3888 = vrot.slane %v3886, 4
      %v3889 = vshll.u32 %v3627, 16
      %v3891 = vrot.slane %v3889, 5
      %v3892 = vor.u32 %v3888, %v3891
      %v3893 = vrot.slane %v3892, 4
      %v3895 = vshll.u32 %v3628, 16
      %v3897 = vrot.slane %v3895, 5
      %v3898 = vsel %vm279, %v3893, %v3897
      %v3899 = vshrl.u32 %v3628, 16
      %v3901 = vrot.slane %v3899, 4
      %v3902 = vor.u32 %v3901, %v3897
      %v3903 = vrot.slane %v3902, 4
      %v3905 = vshll.u32 %v3629, 16
      %v3907 = vrot.slane %v3905, 5
      %v3908 = vsel %vm279, %v3903, %v3907
      %v3910 = vshrl.u32 %v3630, 16
      %v3912 = vrot.slane %v3910, 4
      %v3913 = vshll.u32 %v3630, 16
      %v3915 = vrot.slane %v3913, 5
      %v3916 = vor.u32 %v3912, %v3915
      %v3917 = vrot.slane %v3916, 4
      %v3919 = vshll.u32 %v3631, 16
      %v3921 = vrot.slane %v3919, 5
      %v3922 = vsel %vm279, %v3917, %v3921
      %v3923 = vshrl.u32 %v3631, 16
      %v3925 = vrot.slane %v3923, 4
      %v3926 = vor.u32 %v3925, %v3921
      %v3927 = vrot.slane %v3926, 4
      %v3929 = vshll.u32 %v3632, 16
      %v3931 = vrot.slane %v3929, 5
      %v3932 = vsel %vm279, %v3927, %v3931
      %v3934 = vshrl.u32 %v3633, 16
      %v3936 = vrot.slane %v3934, 4
      %v3937 = vshll.u32 %v3633, 16
      %v3939 = vrot.slane %v3937, 5
      %v3940 = vor.u32 %v3936, %v3939
      %v3941 = vrot.slane %v3940, 4
      %v3943 = vshll.u32 %v3634, 16
      %v3945 = vrot.slane %v3943, 5
      %v3946 = vsel %vm279, %v3941, %v3945
      %v3947 = vshrl.u32 %v3634, 16
      %v3949 = vrot.slane %v3947, 4
      %v3950 = vor.u32 %v3949, %v3945
      %v3951 = vrot.slane %v3950, 4
      %v3953 = vshll.u32 %v3635, 16
      %v3955 = vrot.slane %v3953, 5
      %v3956 = vsel %vm279, %v3951, %v3955
      %v3958 = vshrl.u32 %v3636, 16
      %v3960 = vrot.slane %v3958, 4
      %v3961 = vshll.u32 %v3636, 16
      %v3963 = vrot.slane %v3961, 5
      %v3964 = vor.u32 %v3960, %v3963
      %v3965 = vrot.slane %v3964, 4
      %v3967 = vshll.u32 %v3637, 16
      %v3969 = vrot.slane %v3967, 5
      %v3970 = vsel %vm279, %v3965, %v3969
      %v3971 = vshrl.u32 %v3637, 16
      %v3973 = vrot.slane %v3971, 4
      %v3974 = vor.u32 %v3973, %v3969
      %v3975 = vrot.slane %v3974, 4
      %v3977 = vshll.u32 %v3638, 16
      %v3979 = vrot.slane %v3977, 5
      %v3980 = vsel %vm279, %v3975, %v3979
      %v3982 = vshrl.u32 %v3639, 16
      %v3984 = vrot.slane %v3982, 4
      %v3985 = vshll.u32 %v3639, 16
      %v3987 = vrot.slane %v3985, 5
      %v3988 = vor.u32 %v3984, %v3987
      %v3989 = vrot.slane %v3988, 4
      %v3991 = vshll.u32 %v3640, 16
      %v3993 = vrot.slane %v3991, 5
      %v3994 = vsel %vm279, %v3989, %v3993
      %v3995 = vshrl.u32 %v3640, 16
      %v3997 = vrot.slane %v3995, 4
      %v3998 = vor.u32 %v3997, %v3993
      %v3999 = vrot.slane %v3998, 4
      %v4001 = vshll.u32 %v3641, 16
      %v4003 = vrot.slane %v4001, 5
      %v4004 = vsel %vm279, %v3999, %v4003
      %v4006 = vshrl.u32 %v3642, 16
      %v4008 = vrot.slane %v4006, 4
      %v4009 = vshll.u32 %v3642, 16
      %v4011 = vrot.slane %v4009, 5
      %v4012 = vor.u32 %v4008, %v4011
      %v4013 = vrot.slane %v4012, 4
      %v4015 = vshll.u32 %v3643, 16
      %v4017 = vrot.slane %v4015, 5
      %v4018 = vsel %vm279, %v4013, %v4017
      %v4019 = vshrl.u32 %v3643, 16
      %v4021 = vrot.slane %v4019, 4
      %v4022 = vor.u32 %v4021, %v4017
      %v4023 = vrot.slane %v4022, 4
      %v4025 = vshll.u32 %v3644, 16
      %v4027 = vrot.slane %v4025, 5
      %v4028 = vsel %vm279, %v4023, %v4027
      %s4029 = scalar_lea.vmem %s1, 14
      %v4030 = vld [vmem:[%s4029] sm:$0x3]
      %v4031 = vunpack.c.l.b16 %v3658
      %v4032 = vunpack.c.l.b16 %v3668
      %v4033 = vunpack.c.l.b16 %v3682
      %v4034 = vunpack.c.l.b16 %v3692
      %v4035 = vunpack.c.l.b16 %v3706
      %v4036 = vunpack.c.l.b16 %v3716
      %v4037 = vunpack.c.l.b16 %v3730
      %v4038 = vunpack.c.l.b16 %v3740
      %v4039 = vunpack.c.l.b16 %v3754
      %v4040 = vunpack.c.l.b16 %v3764
      %v4041 = vunpack.c.l.b16 %v3778
      %v4042 = vunpack.c.l.b16 %v3788
      %v4043 = vunpack.c.l.b16 %v3802
      %v4044 = vunpack.c.l.b16 %v3812
      %v4045 = vunpack.c.l.b16 %v3826
      %v4046 = vunpack.c.l.b16 %v3836
      %v4047 = vunpack.c.l.b16 %v3850
      %v4048 = vunpack.c.l.b16 %v3860
      %v4049 = vunpack.c.l.b16 %v3874
      %v4050 = vunpack.c.l.b16 %v3884
      %v4051 = vunpack.c.l.b16 %v3898
      %v4052 = vunpack.c.l.b16 %v3908
      %v4053 = vunpack.c.l.b16 %v3922
      %v4054 = vunpack.c.l.b16 %v3932
      %v4055 = vunpack.c.l.b16 %v3946
      %v4056 = vunpack.c.l.b16 %v3956
      %v4057 = vunpack.c.l.b16 %v3970
      %v4058 = vunpack.c.l.b16 %v3980
      %v4059 = vunpack.c.l.b16 %v3994
      %v4060 = vunpack.c.l.b16 %v4004
      %v4061 = vunpack.c.l.b16 %v4018
      %v4062 = vunpack.c.l.b16 %v4028
      %v4063 = vpack.c.b16 %v4032, %v4031
      %v4064 = vpack.c.b16 %v4034, %v4033
      %v4065 = vpack.c.b16 %v4036, %v4035
      %v4066 = vpack.c.b16 %v4038, %v4037
      %v4067 = vpack.c.b16 %v4040, %v4039
      %v4068 = vpack.c.b16 %v4042, %v4041
      %v4069 = vpack.c.b16 %v4044, %v4043
      %v4070 = vpack.c.b16 %v4046, %v4045
      %v4071 = vpack.c.b16 %v4048, %v4047
      %v4072 = vpack.c.b16 %v4050, %v4049
      %v4073 = vpack.c.b16 %v4052, %v4051
      %v4074 = vpack.c.b16 %v4054, %v4053
      %v4075 = vpack.c.b16 %v4056, %v4055
      %v4076 = vpack.c.b16 %v4058, %v4057
      %v4077 = vpack.c.b16 %v4060, %v4059
      %v4078 = vpack.c.b16 %v4062, %v4061
      %v4080 = vsel %vm714, %v4063, 0
      %v4083 = vsel %vm714, %v4064, 0
      %v4086 = vsel %vm714, %v4065, 0
      %v4089 = vsel %vm714, %v4066, 0
      %v4092 = vsel %vm714, %v4067, 0
      %v4095 = vsel %vm714, %v4068, 0
      %v4098 = vsel %vm714, %v4069, 0
      %v4101 = vsel %vm714, %v4070, 0
      %v4104 = vsel %vm714, %v4071, 0
      %v4107 = vsel %vm714, %v4072, 0
      %v4110 = vsel %vm714, %v4073, 0
      %v4113 = vsel %vm714, %v4074, 0
      %v4116 = vsel %vm714, %v4075, 0
      %v4119 = vsel %vm714, %v4076, 0
      %v4122 = vsel %vm714, %v4077, 0
      %v4125 = vsel %vm714, %v4078, 0
      %v4128 = vsel %vm763, %v4030, 0
      %4130 = vmatprep.subr.bf16.mxu0 0
      %4131 = vmatpush1.bf16.msra.mxu0 %v4128
      %4132 = vmatprep.subr.bf16.mxu0 0
      %4133 = vmatpush1.bf16.msra.mxu0 0
      %4134 = vmatprep.subr.bf16.mxu0 0
      %4135 = vmatpush1.bf16.msra.mxu0 0
      %4136 = vmatprep.subr.bf16.mxu0 0
      %4137 = vmatpush1.bf16.msra.mxu0 0
      %4138 = vmatprep.subr.bf16.mxu0 0
      %4139 = vmatpush1.bf16.msra.mxu0 0
      %4140 = vmatprep.subr.bf16.mxu0 0
      %4141 = vmatpush1.bf16.msra.mxu0 0
      %4142 = vmatprep.subr.bf16.mxu0 0
      %4143 = vmatpush1.bf16.msra.mxu0 0
      %4144 = vmatprep.subr.bf16.mxu0 0
      %4145 = vmatpush1.bf16.msra.mxu0 0
      %4146 = vmatprep.subr.bf16.mxu0 0
      %4147 = vmatpush1.bf16.msra.mxu0 0
      %4148 = vmatprep.subr.bf16.mxu0 0
      %4149 = vmatpush1.bf16.msra.mxu0 0
      %4150 = vmatprep.subr.bf16.mxu0 0
      %4151 = vmatpush1.bf16.msra.mxu0 0
      %4152 = vmatprep.subr.bf16.mxu0 0
      %4153 = vmatpush1.bf16.msra.mxu0 0
      %4154 = vmatprep.subr.bf16.mxu0 0
      %4155 = vmatpush1.bf16.msra.mxu0 0
      %4156 = vmatprep.subr.bf16.mxu0 0
      %4157 = vmatpush1.bf16.msra.mxu0 0
      %4158 = vmatprep.subr.bf16.mxu0 0
      %4159 = vmatpush1.bf16.msra.mxu0 0
      %4160 = vmatprep.subr.bf16.mxu0 0
      %4161 = vmatpush1.bf16.msra.mxu0 0
      %4162 = vmatprep.mubr.bf16.mxu0 0
      %4163 = vmatmul.mubr.bf16.gmra.mrb[0].mxu0 %v4080
      %v4164 = vpop.f32.mrb[0].mxu0
      %v4165 = vadd.f32 0.0, %v4164
      %v4166 = vpop.f32.mrb[0].mxu0
      %v4167 = vpop.f32.mrb[0].mxu0
      %v4168 = vadd.f32 0.0, %v4167
      %v4169 = vpop.f32.mrb[0].mxu0
      %4170 = vmatprep.mubr.bf16.mxu0 0
      %4171 = vmatmul.mubr.bf16.gmra.mrb[0].mxu0 %v4083
      %v4172 = vpop.f32.mrb[0].mxu0
      %v4173 = vadd.f32 0.0, %v4172
      %v4174 = vpop.f32.mrb[0].mxu0
      %v4175 = vpop.f32.mrb[0].mxu0
      %v4176 = vadd.f32 0.0, %v4175
      %v4177 = vpop.f32.mrb[0].mxu0
      %4178 = vmatprep.mubr.bf16.mxu0 0
      %4179 = vmatmul.mubr.bf16.gmra.mrb[0].mxu0 %v4086
      %v4180 = vpop.f32.mrb[0].mxu0
      %v4181 = vadd.f32 0.0, %v4180
      %v4182 = vpop.f32.mrb[0].mxu0
      %v4183 = vpop.f32.mrb[0].mxu0
      %v4184 = vadd.f32 0.0, %v4183
      %v4185 = vpop.f32.mrb[0].mxu0
      %4186 = vmatprep.mubr.bf16.mxu0 0
      %4187 = vmatmul.mubr.bf16.gmra.mrb[0].mxu0 %v4089
      %v4188 = vpop.f32.mrb[0].mxu0
      %v4189 = vadd.f32 0.0, %v4188
      %v4190 = vpop.f32.mrb[0].mxu0
      %v4191 = vpop.f32.mrb[0].mxu0
      %v4192 = vadd.f32 0.0, %v4191
      %v4193 = vpop.f32.mrb[0].mxu0
      %4194 = vmatprep.mubr.bf16.mxu0 0
      %4195 = vmatmul.mubr.bf16.gmra.mrb[0].mxu0 %v4092
      %v4196 = vpop.f32.mrb[0].mxu0
      %v4197 = vadd.f32 0.0, %v4196
      %v4198 = vpop.f32.mrb[0].mxu0
      %v4199 = vpop.f32.mrb[0].mxu0
      %v4200 = vadd.f32 0.0, %v4199
      %v4201 = vpop.f32.mrb[0].mxu0
      %4202 = vmatprep.mubr.bf16.mxu0 0
      %4203 = vmatmul.mubr.bf16.gmra.mrb[0].mxu0 %v4095
      %v4204 = vpop.f32.mrb[0].mxu0
      %v4205 = vadd.f32 0.0, %v4204
      %v4206 = vpop.f32.mrb[0].mxu0
      %v4207 = vpop.f32.mrb[0].mxu0
      %v4208 = vadd.f32 0.0, %v4207
      %v4209 = vpop.f32.mrb[0].mxu0
      %4210 = vmatprep.mubr.bf16.mxu0 0
      %4211 = vmatmul.mubr.bf16.gmra.mrb[0].mxu0 %v4098
      %v4212 = vpop.f32.mrb[0].mxu0
      %v4213 = vadd.f32 0.0, %v4212
      %v4214 = vpop.f32.mrb[0].mxu0
      %v4215 = vpop.f32.mrb[0].mxu0
      %v4216 = vadd.f32 0.0, %v4215
      %v4217 = vpop.f32.mrb[0].mxu0
      %4218 = vmatprep.mubr.bf16.mxu0 0
      %4219 = vmatmul.mubr.bf16.gmra.mrb[0].mxu0 %v4101
      %v4220 = vpop.f32.mrb[0].mxu0
      %v4221 = vadd.f32 0.0, %v4220
      %v4222 = vpop.f32.mrb[0].mxu0
      %v4223 = vpop.f32.mrb[0].mxu0
      %v4224 = vadd.f32 0.0, %v4223
      %v4225 = vpop.f32.mrb[0].mxu0
      %4226 = vmatprep.mubr.bf16.mxu0 0
      %4227 = vmatmul.mubr.bf16.gmra.mrb[0].mxu0 %v4104
      %v4228 = vpop.f32.mrb[0].mxu0
      %v4229 = vadd.f32 0.0, %v4228
      %v4230 = vpop.f32.mrb[0].mxu0
      %v4231 = vpop.f32.mrb[0].mxu0
      %v4232 = vadd.f32 0.0, %v4231
      %v4233 = vpop.f32.mrb[0].mxu0
      %4234 = vmatprep.mubr.bf16.mxu0 0
      %4235 = vmatmul.mubr.bf16.gmra.mrb[0].mxu0 %v4107
      %v4236 = vpop.f32.mrb[0].mxu0
      %v4237 = vadd.f32 0.0, %v4236
      %v4238 = vpop.f32.mrb[0].mxu0
      %v4239 = vpop.f32.mrb[0].mxu0
      %v4240 = vadd.f32 0.0, %v4239
      %v4241 = vpop.f32.mrb[0].mxu0
      %4242 = vmatprep.mubr.bf16.mxu0 0
      %4243 = vmatmul.mubr.bf16.gmra.mrb[0].mxu0 %v4110
      %v4244 = vpop.f32.mrb[0].mxu0
      %v4245 = vadd.f32 0.0, %v4244
      %v4246 = vpop.f32.mrb[0].mxu0
      %v4247 = vpop.f32.mrb[0].mxu0
      %v4248 = vadd.f32 0.0, %v4247
      %v4249 = vpop.f32.mrb[0].mxu0
      %4250 = vmatprep.mubr.bf16.mxu0 0
      %4251 = vmatmul.mubr.bf16.gmra.mrb[0].mxu0 %v4113
      %v4252 = vpop.f32.mrb[0].mxu0
      %v4253 = vadd.f32 0.0, %v4252
      %v4254 = vpop.f32.mrb[0].mxu0
      %v4255 = vpop.f32.mrb[0].mxu0
      %v4256 = vadd.f32 0.0, %v4255
      %v4257 = vpop.f32.mrb[0].mxu0
      %4258 = vmatprep.mubr.bf16.mxu0 0
      %4259 = vmatmul.mubr.bf16.gmra.mrb[0].mxu0 %v4116
      %v4260 = vpop.f32.mrb[0].mxu0
      %v4261 = vadd.f32 0.0, %v4260
      %v4262 = vpop.f32.mrb[0].mxu0
      %v4263 = vpop.f32.mrb[0].mxu0
      %v4264 = vadd.f32 0.0, %v4263
      %v4265 = vpop.f32.mrb[0].mxu0
      %4266 = vmatprep.mubr.bf16.mxu0 0
      %4267 = vmatmul.mubr.bf16.gmra.mrb[0].mxu0 %v4119
      %v4268 = vpop.f32.mrb[0].mxu0
      %v4269 = vadd.f32 0.0, %v4268
      %v4270 = vpop.f32.mrb[0].mxu0
      %v4271 = vpop.f32.mrb[0].mxu0
      %v4272 = vadd.f32 0.0, %v4271
      %v4273 = vpop.f32.mrb[0].mxu0
      %4274 = vmatprep.mubr.bf16.mxu0 0
      %4275 = vmatmul.mubr.bf16.gmra.mrb[0].mxu0 %v4122
      %v4276 = vpop.f32.mrb[0].mxu0
      %v4277 = vadd.f32 0.0, %v4276
      %v4278 = vpop.f32.mrb[0].mxu0
      %v4279 = vpop.f32.mrb[0].mxu0
      %v4280 = vadd.f32 0.0, %v4279
      %v4281 = vpop.f32.mrb[0].mxu0
      %4282 = vmatprep.mubr.bf16.mxu0 0
      %4283 = vmatmul.mubr.bf16.gmra.mrb[0].mxu0 %v4125
      %v4284 = vpop.f32.mrb[0].mxu0
      %v4285 = vadd.f32 0.0, %v4284
      %v4286 = vpop.f32.mrb[0].mxu0
      %v4287 = vpop.f32.mrb[0].mxu0
      %v4288 = vadd.f32 0.0, %v4287
      %v4289 = vpop.f32.mrb[0].mxu0
      %4290 = vdwg.mxu0
      %v4291 = vadd.f32 %v3565, %v4165
      %v4292 = vadd.f32 %v3566, %v4168
      %v4293 = vadd.f32 %v3567, %v4173
      %v4294 = vadd.f32 %v3568, %v4176
      %v4295 = vadd.f32 %v3569, %v4181
      %v4296 = vadd.f32 %v3570, %v4184
      %v4297 = vadd.f32 %v3571, %v4189
      %v4298 = vadd.f32 %v3572, %v4192
      %v4299 = vadd.f32 %v3573, %v4197
      %v4300 = vadd.f32 %v3574, %v4200
      %v4301 = vadd.f32 %v3575, %v4205
      %v4302 = vadd.f32 %v3576, %v4208
      %v4303 = vadd.f32 %v3577, %v4213
      %v4304 = vadd.f32 %v3578, %v4216
      %v4305 = vadd.f32 %v3579, %v4221
      %v4306 = vadd.f32 %v3580, %v4224
      %v4307 = vadd.f32 %v3581, %v4229
      %v4308 = vadd.f32 %v3582, %v4232
      %v4309 = vadd.f32 %v3583, %v4237
      %v4310 = vadd.f32 %v3584, %v4240
      %v4311 = vadd.f32 %v3585, %v4245
      %v4312 = vadd.f32 %v3586, %v4248
      %v4313 = vadd.f32 %v3587, %v4253
      %v4314 = vadd.f32 %v3588, %v4256
      %v4315 = vadd.f32 %v3589, %v4261
      %v4316 = vadd.f32 %v3590, %v4264
      %v4317 = vadd.f32 %v3591, %v4269
      %v4318 = vadd.f32 %v3592, %v4272
      %v4319 = vadd.f32 %v3593, %v4277
      %v4320 = vadd.f32 %v3594, %v4280
      %v4321 = vadd.f32 %v3595, %v4285
      %v4322 = vadd.f32 %v3596, %v4288
      %v4323 = vld [vmem:[%s3238] sm:$0xe]
      %v4324 = vld [vmem:[%s3238 + $0xc] sm:$0xe]
      %v4325 = vld [vmem:[%s3238 + $0x18] sm:$0xe]
      %v4326 = vld [vmem:[%s3238 + $0x24] sm:$0xe]
      %v4327 = vld [vmem:[%s3238 + $0x30] sm:$0xe]
      %v4328 = vld [vmem:[%s3238 + $0x3c] sm:$0xe]
      %v4329 = vld [vmem:[%s3238 + $0x48] sm:$0xe]
      %v4330 = vld [vmem:[%s3238 + $0x54] sm:$0xe]
      %v4331 = vld [vmem:[%s3238 + $0x60] sm:$0xe]
      %v4332 = vld [vmem:[%s3238 + $0x6c] sm:$0xe]
      %v4333 = vld [vmem:[%s3238 + $0x78] sm:$0xe]
      %v4334 = vld [vmem:[%s3238 + $0x84] sm:$0xe]
      %v4335 = vld [vmem:[%s3238 + $0x90] sm:$0xe]
      %v4336 = vld [vmem:[%s3238 + $0x9c] sm:$0xe]
      %v4337 = vld [vmem:[%s3238 + $0xa8] sm:$0xe]
      %v4338 = vld [vmem:[%s3238 + $0xb4] sm:$0xe]
      %v4387 = vrot.slane %v4323, 5
      %v4388 = vrot.slane %v4387, 4
      %v4389 = vrot.slane %v3598, 5
      %v4390 = vsel %vm1270, %v4388, %v4389
      %v4391 = vrot.slane %v4389, 4
      %v4392 = vrot.slane %v3599, 5
      %v4393 = vsel %vm1270, %v4391, %v4392
      %v4394 = vrot.slane %v4324, 5
      %v4395 = vrot.slane %v4394, 4
      %v4396 = vrot.slane %v3601, 5
      %v4397 = vsel %vm1270, %v4395, %v4396
      %v4398 = vrot.slane %v4396, 4
      %v4399 = vrot.slane %v3602, 5
      %v4400 = vsel %vm1270, %v4398, %v4399
      %v4401 = vrot.slane %v4325, 5
      %v4402 = vrot.slane %v4401, 4
      %v4403 = vrot.slane %v3604, 5
      %v4404 = vsel %vm1270, %v4402, %v4403
      %v4405 = vrot.slane %v4403, 4
      %v4406 = vrot.slane %v3605, 5
      %v4407 = vsel %vm1270, %v4405, %v4406
      %v4408 = vrot.slane %v4326, 5
      %v4409 = vrot.slane %v4408, 4
      %v4410 = vrot.slane %v3607, 5
      %v4411 = vsel %vm1270, %v4409, %v4410
      %v4412 = vrot.slane %v4410, 4
      %v4413 = vrot.slane %v3608, 5
      %v4414 = vsel %vm1270, %v4412, %v4413
      %v4415 = vrot.slane %v4327, 5
      %v4416 = vrot.slane %v4415, 4
      %v4417 = vrot.slane %v3610, 5
      %v4418 = vsel %vm1270, %v4416, %v4417
      %v4419 = vrot.slane %v4417, 4
      %v4420 = vrot.slane %v3611, 5
      %v4421 = vsel %vm1270, %v4419, %v4420
      %v4422 = vrot.slane %v4328, 5
      %v4423 = vrot.slane %v4422, 4
      %v4424 = vrot.slane %v3613, 5
      %v4425 = vsel %vm1270, %v4423, %v4424
      %v4426 = vrot.slane %v4424, 4
      %v4427 = vrot.slane %v3614, 5
      %v4428 = vsel %vm1270, %v4426, %v4427
      %v4429 = vrot.slane %v4329, 5
      %v4430 = vrot.slane %v4429, 4
      %v4431 = vrot.slane %v3616, 5
      %v4432 = vsel %vm1270, %v4430, %v4431
      %v4433 = vrot.slane %v4431, 4
      %v4434 = vrot.slane %v3617, 5
      %v4435 = vsel %vm1270, %v4433, %v4434
      %v4436 = vrot.slane %v4330, 5
      %v4437 = vrot.slane %v4436, 4
      %v4438 = vrot.slane %v3619, 5
      %v4439 = vsel %vm1270, %v4437, %v4438
      %v4440 = vrot.slane %v4438, 4
      %v4441 = vrot.slane %v3620, 5
      %v4442 = vsel %vm1270, %v4440, %v4441
      %v4443 = vrot.slane %v4331, 5
      %v4444 = vrot.slane %v4443, 4
      %v4445 = vrot.slane %v3622, 5
      %v4446 = vsel %vm1270, %v4444, %v4445
      %v4447 = vrot.slane %v4445, 4
      %v4448 = vrot.slane %v3623, 5
      %v4449 = vsel %vm1270, %v4447, %v4448
      %v4450 = vrot.slane %v4332, 5
      %v4451 = vrot.slane %v4450, 4
      %v4452 = vrot.slane %v3625, 5
      %v4453 = vsel %vm1270, %v4451, %v4452
      %v4454 = vrot.slane %v4452, 4
      %v4455 = vrot.slane %v3626, 5
      %v4456 = vsel %vm1270, %v4454, %v4455
      %v4457 = vrot.slane %v4333, 5
      %v4458 = vrot.slane %v4457, 4
      %v4459 = vrot.slane %v3628, 5
      %v4460 = vsel %vm1270, %v4458, %v4459
      %v4461 = vrot.slane %v4459, 4
      %v4462 = vrot.slane %v3629, 5
      %v4463 = vsel %vm1270, %v4461, %v4462
      %v4464 = vrot.slane %v4334, 5
      %v4465 = vrot.slane %v4464, 4
      %v4466 = vrot.slane %v3631, 5
      %v4467 = vsel %vm1270, %v4465, %v4466
      %v4468 = vrot.slane %v4466, 4
      %v4469 = vrot.slane %v3632, 5
      %v4470 = vsel %vm1270, %v4468, %v4469
      %v4471 = vrot.slane %v4335, 5
      %v4472 = vrot.slane %v4471, 4
      %v4473 = vrot.slane %v3634, 5
      %v4474 = vsel %vm1270, %v4472, %v4473
      %v4475 = vrot.slane %v4473, 4
      %v4476 = vrot.slane %v3635, 5
      %v4477 = vsel %vm1270, %v4475, %v4476
      %v4478 = vrot.slane %v4336, 5
      %v4479 = vrot.slane %v4478, 4
      %v4480 = vrot.slane %v3637, 5
      %v4481 = vsel %vm1270, %v4479, %v4480
      %v4482 = vrot.slane %v4480, 4
      %v4483 = vrot.slane %v3638, 5
      %v4484 = vsel %vm1270, %v4482, %v4483
      %v4485 = vrot.slane %v4337, 5
      %v4486 = vrot.slane %v4485, 4
      %v4487 = vrot.slane %v3640, 5
      %v4488 = vsel %vm1270, %v4486, %v4487
      %v4489 = vrot.slane %v4487, 4
      %v4490 = vrot.slane %v3641, 5
      %v4491 = vsel %vm1270, %v4489, %v4490
      %v4492 = vrot.slane %v4338, 5
      %v4493 = vrot.slane %v4492, 4
      %v4494 = vrot.slane %v3643, 5
      %v4495 = vsel %vm1270, %v4493, %v4494
      %v4496 = vrot.slane %v4494, 4
      %v4497 = vrot.slane %v3644, 5
      %v4498 = vsel %vm1270, %v4496, %v4497
      %s4499 = scalar_lea.vmem %s1, 16
      %v4500 = vld [vmem:[%s4499] sm:$0x3]
      %v4501 = vunpack.c.l.b16 %v4390
      %v4502 = vunpack.c.l.b16 %v4393
      %v4503 = vunpack.c.l.b16 %v4397
      %v4504 = vunpack.c.l.b16 %v4400
      %v4505 = vunpack.c.l.b16 %v4404
      %v4506 = vunpack.c.l.b16 %v4407
      %v4507 = vunpack.c.l.b16 %v4411
      %v4508 = vunpack.c.l.b16 %v4414
      %v4509 = vunpack.c.l.b16 %v4418
      %v4510 = vunpack.c.l.b16 %v4421
      %v4511 = vunpack.c.l.b16 %v4425
      %v4512 = vunpack.c.l.b16 %v4428
      %v4513 = vunpack.c.l.b16 %v4432
      %v4514 = vunpack.c.l.b16 %v4435
      %v4515 = vunpack.c.l.b16 %v4439
      %v4516 = vunpack.c.l.b16 %v4442
      %v4517 = vunpack.c.l.b16 %v4446
      %v4518 = vunpack.c.l.b16 %v4449
      %v4519 = vunpack.c.l.b16 %v4453
      %v4520 = vunpack.c.l.b16 %v4456
      %v4521 = vunpack.c.l.b16 %v4460
      %v4522 = vunpack.c.l.b16 %v4463
      %v4523 = vunpack.c.l.b16 %v4467
      %v4524 = vunpack.c.l.b16 %v4470
      %v4525 = vunpack.c.l.b16 %v4474
      %v4526 = vunpack.c.l.b16 %v4477
      %v4527 = vunpack.c.l.b16 %v4481
      %v4528 = vunpack.c.l.b16 %v4484
      %v4529 = vunpack.c.l.b16 %v4488
      %v4530 = vunpack.c.l.b16 %v4491
      %v4531 = vunpack.c.l.b16 %v4495
      %v4532 = vunpack.c.l.b16 %v4498
      %v4533 = vpack.c.b16 %v4502, %v4501
      %v4534 = vpack.c.b16 %v4504, %v4503
      %v4535 = vpack.c.b16 %v4506, %v4505
      %v4536 = vpack.c.b16 %v4508, %v4507
      %v4537 = vpack.c.b16 %v4510, %v4509
      %v4538 = vpack.c.b16 %v4512, %v4511
      %v4539 = vpack.c.b16 %v4514, %v4513
      %v4540 = vpack.c.b16 %v4516, %v4515
      %v4541 = vpack.c.b16 %v4518, %v4517
      %v4542 = vpack.c.b16 %v4520, %v4519
      %v4543 = vpack.c.b16 %v4522, %v4521
      %v4544 = vpack.c.b16 %v4524, %v4523
      %v4545 = vpack.c.b16 %v4526, %v4525
      %v4546 = vpack.c.b16 %v4528, %v4527
      %v4547 = vpack.c.b16 %v4530, %v4529
      %v4548 = vpack.c.b16 %v4532, %v4531
      %v4550 = vsel %vm714, %v4533, 0
      %v4553 = vsel %vm714, %v4534, 0
      %v4556 = vsel %vm714, %v4535, 0
      %v4559 = vsel %vm714, %v4536, 0
      %v4562 = vsel %vm714, %v4537, 0
      %v4565 = vsel %vm714, %v4538, 0
      %v4568 = vsel %vm714, %v4539, 0
      %v4571 = vsel %vm714, %v4540, 0
      %v4574 = vsel %vm714, %v4541, 0
      %v4577 = vsel %vm714, %v4542, 0
      %v4580 = vsel %vm714, %v4543, 0
      %v4583 = vsel %vm714, %v4544, 0
      %v4586 = vsel %vm714, %v4545, 0
      %v4589 = vsel %vm714, %v4546, 0
      %v4592 = vsel %vm714, %v4547, 0
      %v4595 = vsel %vm714, %v4548, 0
      %v4598 = vsel %vm763, %v4500, 0
      %4600 = vmatprep.subr.bf16.mxu0 0
      %4601 = vmatpush1.bf16.msra.mxu0 %v4598
      %4602 = vmatprep.subr.bf16.mxu0 0
      %4603 = vmatpush1.bf16.msra.mxu0 0
      %4604 = vmatprep.subr.bf16.mxu0 0
      %4605 = vmatpush1.bf16.msra.mxu0 0
      %4606 = vmatprep.subr.bf16.mxu0 0
      %4607 = vmatpush1.bf16.msra.mxu0 0
      %4608 = vmatprep.subr.bf16.mxu0 0
      %4609 = vmatpush1.bf16.msra.mxu0 0
      %4610 = vmatprep.subr.bf16.mxu0 0
      %4611 = vmatpush1.bf16.msra.mxu0 0
      %4612 = vmatprep.subr.bf16.mxu0 0
      %4613 = vmatpush1.bf16.msra.mxu0 0
      %4614 = vmatprep.subr.bf16.mxu0 0
      %4615 = vmatpush1.bf16.msra.mxu0 0
      %4616 = vmatprep.subr.bf16.mxu0 0
      %4617 = vmatpush1.bf16.msra.mxu0 0
      %4618 = vmatprep.subr.bf16.mxu0 0
      %4619 = vmatpush1.bf16.msra.mxu0 0
      %4620 = vmatprep.subr.bf16.mxu0 0
      %4621 = vmatpush1.bf16.msra.mxu0 0
      %4622 = vmatprep.subr.bf16.mxu0 0
      %4623 = vmatpush1.bf16.msra.mxu0 0
      %4624 = vmatprep.subr.bf16.mxu0 0
      %4625 = vmatpush1.bf16.msra.mxu0 0
      %4626 = vmatprep.subr.bf16.mxu0 0
      %4627 = vmatpush1.bf16.msra.mxu0 0
      %4628 = vmatprep.subr.bf16.mxu0 0
      %4629 = vmatpush1.bf16.msra.mxu0 0
      %4630 = vmatprep.subr.bf16.mxu0 0
      %4631 = vmatpush1.bf16.msra.mxu0 0
      %4632 = vmatprep.mubr.bf16.mxu0 0
      %4633 = vmatmul.mubr.bf16.gmra.mrb[0].mxu0 %v4550
      %v4634 = vpop.f32.mrb[0].mxu0
      %v4635 = vadd.f32 0.0, %v4634
      %v4636 = vpop.f32.mrb[0].mxu0
      %v4637 = vpop.f32.mrb[0].mxu0
      %v4638 = vadd.f32 0.0, %v4637
      %v4639 = vpop.f32.mrb[0].mxu0
      %4640 = vmatprep.mubr.bf16.mxu0 0
      %4641 = vmatmul.mubr.bf16.gmra.mrb[0].mxu0 %v4553
      %v4642 = vpop.f32.mrb[0].mxu0
      %v4643 = vadd.f32 0.0, %v4642
      %v4644 = vpop.f32.mrb[0].mxu0
      %v4645 = vpop.f32.mrb[0].mxu0
      %v4646 = vadd.f32 0.0, %v4645
      %v4647 = vpop.f32.mrb[0].mxu0
      %4648 = vmatprep.mubr.bf16.mxu0 0
      %4649 = vmatmul.mubr.bf16.gmra.mrb[0].mxu0 %v4556
      %v4650 = vpop.f32.mrb[0].mxu0
      %v4651 = vadd.f32 0.0, %v4650
      %v4652 = vpop.f32.mrb[0].mxu0
      %v4653 = vpop.f32.mrb[0].mxu0
      %v4654 = vadd.f32 0.0, %v4653
      %v4655 = vpop.f32.mrb[0].mxu0
      %4656 = vmatprep.mubr.bf16.mxu0 0
      %4657 = vmatmul.mubr.bf16.gmra.mrb[0].mxu0 %v4559
      %v4658 = vpop.f32.mrb[0].mxu0
      %v4659 = vadd.f32 0.0, %v4658
      %v4660 = vpop.f32.mrb[0].mxu0
      %v4661 = vpop.f32.mrb[0].mxu0
      %v4662 = vadd.f32 0.0, %v4661
      %v4663 = vpop.f32.mrb[0].mxu0
      %4664 = vmatprep.mubr.bf16.mxu0 0
      %4665 = vmatmul.mubr.bf16.gmra.mrb[0].mxu0 %v4562
      %v4666 = vpop.f32.mrb[0].mxu0
      %v4667 = vadd.f32 0.0, %v4666
      %v4668 = vpop.f32.mrb[0].mxu0
      %v4669 = vpop.f32.mrb[0].mxu0
      %v4670 = vadd.f32 0.0, %v4669
      %v4671 = vpop.f32.mrb[0].mxu0
      %4672 = vmatprep.mubr.bf16.mxu0 0
      %4673 = vmatmul.mubr.bf16.gmra.mrb[0].mxu0 %v4565
      %v4674 = vpop.f32.mrb[0].mxu0
      %v4675 = vadd.f32 0.0, %v4674
      %v4676 = vpop.f32.mrb[0].mxu0
      %v4677 = vpop.f32.mrb[0].mxu0
      %v4678 = vadd.f32 0.0, %v4677
      %v4679 = vpop.f32.mrb[0].mxu0
      %4680 = vmatprep.mubr.bf16.mxu0 0
      %4681 = vmatmul.mubr.bf16.gmra.mrb[0].mxu0 %v4568
      %v4682 = vpop.f32.mrb[0].mxu0
      %v4683 = vadd.f32 0.0, %v4682
      %v4684 = vpop.f32.mrb[0].mxu0
      %v4685 = vpop.f32.mrb[0].mxu0
      %v4686 = vadd.f32 0.0, %v4685
      %v4687 = vpop.f32.mrb[0].mxu0
      %4688 = vmatprep.mubr.bf16.mxu0 0
      %4689 = vmatmul.mubr.bf16.gmra.mrb[0].mxu0 %v4571
      %v4690 = vpop.f32.mrb[0].mxu0
      %v4691 = vadd.f32 0.0, %v4690
      %v4692 = vpop.f32.mrb[0].mxu0
      %v4693 = vpop.f32.mrb[0].mxu0
      %v4694 = vadd.f32 0.0, %v4693
      %v4695 = vpop.f32.mrb[0].mxu0
      %4696 = vmatprep.mubr.bf16.mxu0 0
      %4697 = vmatmul.mubr.bf16.gmra.mrb[0].mxu0 %v4574
      %v4698 = vpop.f32.mrb[0].mxu0
      %v4699 = vadd.f32 0.0, %v4698
      %v4700 = vpop.f32.mrb[0].mxu0
      %v4701 = vpop.f32.mrb[0].mxu0
      %v4702 = vadd.f32 0.0, %v4701
      %v4703 = vpop.f32.mrb[0].mxu0
      %4704 = vmatprep.mubr.bf16.mxu0 0
      %4705 = vmatmul.mubr.bf16.gmra.mrb[0].mxu0 %v4577
      %v4706 = vpop.f32.mrb[0].mxu0
      %v4707 = vadd.f32 0.0, %v4706
      %v4708 = vpop.f32.mrb[0].mxu0
      %v4709 = vpop.f32.mrb[0].mxu0
      %v4710 = vadd.f32 0.0, %v4709
      %v4711 = vpop.f32.mrb[0].mxu0
      %4712 = vmatprep.mubr.bf16.mxu0 0
      %4713 = vmatmul.mubr.bf16.gmra.mrb[0].mxu0 %v4580
      %v4714 = vpop.f32.mrb[0].mxu0
      %v4715 = vadd.f32 0.0, %v4714
      %v4716 = vpop.f32.mrb[0].mxu0
      %v4717 = vpop.f32.mrb[0].mxu0
      %v4718 = vadd.f32 0.0, %v4717
      %v4719 = vpop.f32.mrb[0].mxu0
      %4720 = vmatprep.mubr.bf16.mxu0 0
      %4721 = vmatmul.mubr.bf16.gmra.mrb[0].mxu0 %v4583
      %v4722 = vpop.f32.mrb[0].mxu0
      %v4723 = vadd.f32 0.0, %v4722
      %v4724 = vpop.f32.mrb[0].mxu0
      %v4725 = vpop.f32.mrb[0].mxu0
      %v4726 = vadd.f32 0.0, %v4725
      %v4727 = vpop.f32.mrb[0].mxu0
      %4728 = vmatprep.mubr.bf16.mxu0 0
      %4729 = vmatmul.mubr.bf16.gmra.mrb[0].mxu0 %v4586
      %v4730 = vpop.f32.mrb[0].mxu0
      %v4731 = vadd.f32 0.0, %v4730
      %v4732 = vpop.f32.mrb[0].mxu0
      %v4733 = vpop.f32.mrb[0].mxu0
      %v4734 = vadd.f32 0.0, %v4733
      %v4735 = vpop.f32.mrb[0].mxu0
      %4736 = vmatprep.mubr.bf16.mxu0 0
      %4737 = vmatmul.mubr.bf16.gmra.mrb[0].mxu0 %v4589
      %v4738 = vpop.f32.mrb[0].mxu0
      %v4739 = vadd.f32 0.0, %v4738
      %v4740 = vpop.f32.mrb[0].mxu0
      %v4741 = vpop.f32.mrb[0].mxu0
      %v4742 = vadd.f32 0.0, %v4741
      %v4743 = vpop.f32.mrb[0].mxu0
      %4744 = vmatprep.mubr.bf16.mxu0 0
      %4745 = vmatmul.mubr.bf16.gmra.mrb[0].mxu0 %v4592
      %v4746 = vpop.f32.mrb[0].mxu0
      %v4747 = vadd.f32 0.0, %v4746
      %v4748 = vpop.f32.mrb[0].mxu0
      %v4749 = vpop.f32.mrb[0].mxu0
      %v4750 = vadd.f32 0.0, %v4749
      %v4751 = vpop.f32.mrb[0].mxu0
      %4752 = vmatprep.mubr.bf16.mxu0 0
      %4753 = vmatmul.mubr.bf16.gmra.mrb[0].mxu0 %v4595
      %v4754 = vpop.f32.mrb[0].mxu0
      %v4755 = vadd.f32 0.0, %v4754
      %v4756 = vpop.f32.mrb[0].mxu0
      %v4757 = vpop.f32.mrb[0].mxu0
      %v4758 = vadd.f32 0.0, %v4757
      %v4759 = vpop.f32.mrb[0].mxu0
      %4760 = vdwg.mxu0
      %v4761 = vadd.f32 %v4291, %v4635
      %v4762 = vadd.f32 %v4292, %v4638
      %v4763 = vadd.f32 %v4293, %v4643
      %v4764 = vadd.f32 %v4294, %v4646
      %v4765 = vadd.f32 %v4295, %v4651
      %v4766 = vadd.f32 %v4296, %v4654
      %v4767 = vadd.f32 %v4297, %v4659
      %v4768 = vadd.f32 %v4298, %v4662
      %v4769 = vadd.f32 %v4299, %v4667
      %v4770 = vadd.f32 %v4300, %v4670
      %v4771 = vadd.f32 %v4301, %v4675
      %v4772 = vadd.f32 %v4302, %v4678
      %v4773 = vadd.f32 %v4303, %v4683
      %v4774 = vadd.f32 %v4304, %v4686
      %v4775 = vadd.f32 %v4305, %v4691
      %v4776 = vadd.f32 %v4306, %v4694
      %v4777 = vadd.f32 %v4307, %v4699
      %v4778 = vadd.f32 %v4308, %v4702
      %v4779 = vadd.f32 %v4309, %v4707
      %v4780 = vadd.f32 %v4310, %v4710
      %v4781 = vadd.f32 %v4311, %v4715
      %v4782 = vadd.f32 %v4312, %v4718
      %v4783 = vadd.f32 %v4313, %v4723
      %v4784 = vadd.f32 %v4314, %v4726
      %v4785 = vadd.f32 %v4315, %v4731
      %v4786 = vadd.f32 %v4316, %v4734
      %v4787 = vadd.f32 %v4317, %v4739
      %v4788 = vadd.f32 %v4318, %v4742
      %v4789 = vadd.f32 %v4319, %v4747
      %v4790 = vadd.f32 %v4320, %v4750
      %v4791 = vadd.f32 %v4321, %v4755
      %v4792 = vadd.f32 %v4322, %v4758
      %v4793 = vld [vmem:[%s2] sm:$0x1]
      %v4795 = vlaneseq
      %v4796 = vshrl.u32 %v4795, 7
      %v4797 = vsub.s32 0, %v4796
      %v4798 = vrot.slane %v4793, %v4797
      %v4800 = vmul.f32 %v4761, %v4798
      %v4801 = vmul.f32 %v4762, %v4798
      %v4802 = vmul.f32 %v4763, %v4798
      %v4803 = vmul.f32 %v4764, %v4798
      %v4804 = vmul.f32 %v4765, %v4798
      %v4805 = vmul.f32 %v4766, %v4798
      %v4806 = vmul.f32 %v4767, %v4798
      %v4807 = vmul.f32 %v4768, %v4798
      %v4808 = vmul.f32 %v4769, %v4798
      %v4809 = vmul.f32 %v4770, %v4798
      %v4810 = vmul.f32 %v4771, %v4798
      %v4811 = vmul.f32 %v4772, %v4798
      %v4812 = vmul.f32 %v4773, %v4798
      %v4813 = vmul.f32 %v4774, %v4798
      %v4814 = vmul.f32 %v4775, %v4798
      %v4815 = vmul.f32 %v4776, %v4798
      %v4816 = vmul.f32 %v4777, %v4798
      %v4817 = vmul.f32 %v4778, %v4798
      %v4818 = vmul.f32 %v4779, %v4798
      %v4819 = vmul.f32 %v4780, %v4798
      %v4820 = vmul.f32 %v4781, %v4798
      %v4821 = vmul.f32 %v4782, %v4798
      %v4822 = vmul.f32 %v4783, %v4798
      %v4823 = vmul.f32 %v4784, %v4798
      %v4824 = vmul.f32 %v4785, %v4798
      %v4825 = vmul.f32 %v4786, %v4798
      %v4826 = vmul.f32 %v4787, %v4798
      %v4827 = vmul.f32 %v4788, %v4798
      %v4828 = vmul.f32 %v4789, %v4798
      %v4829 = vmul.f32 %v4790, %v4798
      %v4830 = vmul.f32 %v4791, %v4798
      %v4831 = vmul.f32 %v4792, %v4798
      %v4832 = vld [vmem:[%s3] sm:$0x1]
      %v4834 = vlaneseq
      %v4835 = vshrl.u32 %v4834, 7
      %v4836 = vsub.s32 0, %v4835
      %v4837 = vrot.slane %v4832, %v4836
      %v4839 = vadd.f32 %v4800, %v4837
      %v4840 = vadd.f32 %v4801, %v4837
      %v4841 = vadd.f32 %v4802, %v4837
      %v4842 = vadd.f32 %v4803, %v4837
      %v4843 = vadd.f32 %v4804, %v4837
      %v4844 = vadd.f32 %v4805, %v4837
      %v4845 = vadd.f32 %v4806, %v4837
      %v4846 = vadd.f32 %v4807, %v4837
      %v4847 = vadd.f32 %v4808, %v4837
      %v4848 = vadd.f32 %v4809, %v4837
      %v4849 = vadd.f32 %v4810, %v4837
      %v4850 = vadd.f32 %v4811, %v4837
      %v4851 = vadd.f32 %v4812, %v4837
      %v4852 = vadd.f32 %v4813, %v4837
      %v4853 = vadd.f32 %v4814, %v4837
      %v4854 = vadd.f32 %v4815, %v4837
      %v4855 = vadd.f32 %v4816, %v4837
      %v4856 = vadd.f32 %v4817, %v4837
      %v4857 = vadd.f32 %v4818, %v4837
      %v4858 = vadd.f32 %v4819, %v4837
      %v4859 = vadd.f32 %v4820, %v4837
      %v4860 = vadd.f32 %v4821, %v4837
      %v4861 = vadd.f32 %v4822, %v4837
      %v4862 = vadd.f32 %v4823, %v4837
      %v4863 = vadd.f32 %v4824, %v4837
      %v4864 = vadd.f32 %v4825, %v4837
      %v4865 = vadd.f32 %v4826, %v4837
      %v4866 = vadd.f32 %v4827, %v4837
      %v4867 = vadd.f32 %v4828, %v4837
      %v4868 = vadd.f32 %v4829, %v4837
      %v4869 = vadd.f32 %v4830, %v4837
      %v4870 = vadd.f32 %v4831, %v4837
      %v4871 = vmax.f32 %v4839, 0.0
      %v4872 = vmax.f32 %v4840, 0.0
      %v4873 = vmax.f32 %v4841, 0.0
      %v4874 = vmax.f32 %v4842, 0.0
      %v4875 = vmax.f32 %v4843, 0.0
      %v4876 = vmax.f32 %v4844, 0.0
      %v4877 = vmax.f32 %v4845, 0.0
      %v4878 = vmax.f32 %v4846, 0.0
      %v4879 = vmax.f32 %v4847, 0.0
      %v4880 = vmax.f32 %v4848, 0.0
      %v4881 = vmax.f32 %v4849, 0.0
      %v4882 = vmax.f32 %v4850, 0.0
      %v4883 = vmax.f32 %v4851, 0.0
      %v4884 = vmax.f32 %v4852, 0.0
      %v4885 = vmax.f32 %v4853, 0.0
      %v4886 = vmax.f32 %v4854, 0.0
      %v4887 = vmax.f32 %v4855, 0.0
      %v4888 = vmax.f32 %v4856, 0.0
      %v4889 = vmax.f32 %v4857, 0.0
      %v4890 = vmax.f32 %v4858, 0.0
      %v4891 = vmax.f32 %v4859, 0.0
      %v4892 = vmax.f32 %v4860, 0.0
      %v4893 = vmax.f32 %v4861, 0.0
      %v4894 = vmax.f32 %v4862, 0.0
      %v4895 = vmax.f32 %v4863, 0.0
      %v4896 = vmax.f32 %v4864, 0.0
      %v4897 = vmax.f32 %v4865, 0.0
      %v4898 = vmax.f32 %v4866, 0.0
      %v4899 = vmax.f32 %v4867, 0.0
      %v4900 = vmax.f32 %v4868, 0.0
      %v4901 = vmax.f32 %v4869, 0.0
      %v4902 = vmax.f32 %v4870, 0.0
      %4903 = vst [vmem:[%s221] sm:$0xff] %v4871
      %4904 = vst [vmem:[%s221 + $0x8] sm:$0xff] %v4872
      %4905 = vst [vmem:[%s221 + $0x10] sm:$0xff] %v4873
      %4906 = vst [vmem:[%s221 + $0x18] sm:$0xff] %v4874
      %4907 = vst [vmem:[%s221 + $0x20] sm:$0xff] %v4875
      %4908 = vst [vmem:[%s221 + $0x28] sm:$0xff] %v4876
      %4909 = vst [vmem:[%s221 + $0x30] sm:$0xff] %v4877
      %4910 = vst [vmem:[%s221 + $0x38] sm:$0xff] %v4878
      %4911 = vst [vmem:[%s221 + $0x40] sm:$0xff] %v4879
      %4912 = vst [vmem:[%s221 + $0x48] sm:$0xff] %v4880
      %4913 = vst [vmem:[%s221 + $0x50] sm:$0xff] %v4881
      %4914 = vst [vmem:[%s221 + $0x58] sm:$0xff] %v4882
      %4915 = vst [vmem:[%s221 + $0x60] sm:$0xff] %v4883
      %4916 = vst [vmem:[%s221 + $0x68] sm:$0xff] %v4884
      %4917 = vst [vmem:[%s221 + $0x70] sm:$0xff] %v4885
      %4918 = vst [vmem:[%s221 + $0x78] sm:$0xff] %v4886
      %4919 = vst [vmem:[%s221 + $0x80] sm:$0xff] %v4887
      %4920 = vst [vmem:[%s221 + $0x88] sm:$0xff] %v4888
      %4921 = vst [vmem:[%s221 + $0x90] sm:$0xff] %v4889
      %4922 = vst [vmem:[%s221 + $0x98] sm:$0xff] %v4890
      %4923 = vst [vmem:[%s221 + $0xa0] sm:$0xff] %v4891
      %4924 = vst [vmem:[%s221 + $0xa8] sm:$0xff] %v4892
      %4925 = vst [vmem:[%s221 + $0xb0] sm:$0xff] %v4893
      %4926 = vst [vmem:[%s221 + $0xb8] sm:$0xff] %v4894
      %4927 = vst [vmem:[%s221 + $0xc0] sm:$0xff] %v4895
      %4928 = vst [vmem:[%s221 + $0xc8] sm:$0xff] %v4896
      %4929 = vst [vmem:[%s221 + $0xd0] sm:$0xff] %v4897
      %4930 = vst [vmem:[%s221 + $0xd8] sm:$0xff] %v4898
      %4931 = vst [vmem:[%s221 + $0xe0] sm:$0xff] %v4899
      %4932 = vst [vmem:[%s221 + $0xe8] sm:$0xff] %v4900
      %4933 = vst [vmem:[%s221 + $0xf0] sm:$0xff] %v4901
      %4934 = vst [vmem:[%s221 + $0xf8] sm:$0xff] %v4902
      %s4935 = smul.u32 16, %s20
      %p4936 = scmp.lt.s32.totalorder %s19, 1
      %s4937 = scalar_select %p4936, %s19, 1
      %p4938 = scmp.lt.s32.totalorder %s4935, 15
      %s4939 = scalar_select %p4938, %s4935, 15
      %s4940 = smul.addr %s4939, 2
      %s4941 = smul.addr %s4937, 32
      %s4942 = sadd.s32 %s4940, %s4941
      %s4943 = smul.addr %s4942, 8
      %s4944 = scalar_lea.vmem %s4, %s4943
      // Predicated region
      $region37: #{basic_conv2d.1} parent=35 // pred_check
        %p4945 = pneg %p136
      $region38: #{basic_conv2d.1} parent=35 // pred_check_branch
        %4947 = sbr.rel (%p4945) target = $region40
      $region39: #{basic_conv2d.1} parent=35 // pred_region
        %s4948 = smul.u32 16, %s20
      $region40: #{basic_conv2d.1} parent=35 // pred_fallthru
        _
    $region36: #{basic_conv2d.1} parent=5 // pred_fallthru
      _
    %p4949 = scmp.le.s32.totalorder 2, %s10
    // Predicated region
    $region41: #{basic_conv2d.1} parent=5 // pred_check
      %p4950 = pneg %p4949
    $region42: #{basic_conv2d.1} parent=5 // pred_check_branch
      %4952 = sbr.rel (%p4950) target = $region44
    $region43: #{basic_conv2d.1} parent=5 // pred_region
      %s4953 = ssub.s32 %s10, 2
      // Predicated region
      $region45: #{basic_conv2d.1} parent=43 // pred_check
        %p4954 = pneg %p142
      $region46: #{basic_conv2d.1} parent=43 // pred_check_branch
        %4956 = sbr.rel (%p4954) target = $region48
      $region47: #{basic_conv2d.1} parent=43 // pred_region
        %s4957 = smul.u32 16, %s22
        %p4958 = scmp.lt.s32.totalorder %s21, 1
        %s4959 = scalar_select %p4958, %s21, 1
        %p4960 = scmp.lt.s32.totalorder %s4957, 15
        %s4961 = scalar_select %p4960, %s4957, 15
        %s4962 = smul.addr %s4961, 2
        %s4963 = smul.addr %s4959, 32
        %s4964 = sadd.s32 %s4962, %s4963
        %s4965 = smul.addr %s4964, 8
        %s4966 = scalar_lea.vmem %s4, %s4965
      $region48: #{basic_conv2d.1} parent=43 // pred_fallthru
        _
    $region44: #{basic_conv2d.1} parent=5 // pred_fallthru
      _
  $region6: #{basic_conv2d.1} parent=0 // loop_footer
    %s14 = sadd.s32 1, %s10
  $region7: #{basic_conv2d.1} parent=0 // loop_footer_branch
    %9 = sbr.rel target = $region3
  $region8: #{basic_conv2d.1} parent=0 // loop_exit
    _

</llo_original>
